<compile_context>
chip_gen: v5e
topology: v5e:2x2
jax: 0.10.0
libtpu: 0.0.40
codegen_flags: <defaults>
</compile_context>

<pallas_src>
import functools

import jax
import jax.numpy as jnp
from jax.experimental import pallas as pl
from jax.experimental.pallas import tpu as pltpu


# ----------------------------------------------------------------------------
# Packed bias/scale vector layout (shared by wrapper and kernel, all static).
# ----------------------------------------------------------------------------
_VEC_SEGMENTS = [
    ("bt", 128), ("bconv", 192), ("s1", 128), ("o1", 128), ("s2", 128),
    ("o2", 128), ("bf1", 256), ("bf2", 128), ("bcl1", 256), ("bcl2", 128),
]
_VEC_SIZE = dict(_VEC_SEGMENTS)
_VEC_OFF = {}
_off = 0
for _name, _n in _VEC_SEGMENTS:
    _VEC_OFF[_name] = _off
    _off += -(-_n // 128) * 128          # pad each segment to a lane multiple
_VEC_LEN = _off                           # 1664

_LP = 128                                 # num_labels padded to full lane width


# ----------------------------------------------------------------------------
# Pallas kernel: forward pass for one batch tile.
# ----------------------------------------------------------------------------
def _mm_classifier_kernel(
    pooled_ref, num_ref,        # activations (f32): (TB, Hp), (TB, F)
    w128_ref, w256_ref,         # packed bf16 weight slabs (last dim 128 / 256)
    wconv_ref,                  # (8, 192) f32   multi-scale conv tap weights
    ca1_ref, ca2_ref,           # (192, 16), (16, 192) f32  channel attention
    pvec_ref,                   # (1, 1664) f32  packed biases / BN scale-off
    ws_ref,                     # (14,) f32 SMEM  spatial-attn taps (avg | max)
    out_ref,                    # (TB, 128) f32
):
    f32 = jnp.float32
    bf16 = jnp.bfloat16
    pooled = pooled_ref[...]                     # (TB, Hp)
    x = num_ref[...]                             # (TB, F)
    TB, Hp = pooled.shape
    F = x.shape[1]

    def vec(name):                               # (1, n) broadcast row
        o = _VEC_OFF[name]
        return pvec_ref[:, o:o + _VEC_SIZE[name]]

    # bf16 weight slab row offsets (static, derived from static shapes,
    # all multiples of 16 so bf16 sublane-packed slices stay aligned)
    r0, r1, r2, r3, r4 = Hp, Hp + 576, Hp + 960, Hp + 1216, Hp + 1472

    # ---- text branch: dropout(eval)=identity -> Linear(H, 128) -------------
    text_out = jnp.dot(pooled.astype(bf16), w128_ref[0:Hp, :],
                       preferred_element_type=f32) + vec("bt")     # (TB, 128)

    # ---- multi-scale Conv1d (k=3/5/7, 64ch each) as 7 VPU tap MACs ----------
    z3 = jnp.zeros((TB, 3), f32)
    xpad = jnp.concatenate([z3, x, z3], axis=1)                    # (TB, F+6)
    xcol = xpad[:, :, None]                                        # (TB, F+6, 1)
    combined = jnp.zeros((TB, F, 192), f32)
    for j in range(7):                                             # static taps
        wrow = wconv_ref[j:j + 1, :].reshape(1, 1, 192)
        combined = combined + xcol[:, j:j + F, :] * wrow
    combined = jnp.maximum(combined + vec("bconv")[:, None, :], 0.0)

    # ---- ChannelAttention (avg-pool over length -> 2 Linears -> sigmoid) ----
    y = jnp.mean(combined, axis=1)                                 # (TB, 192)
    h = jnp.maximum(jnp.dot(y, ca1_ref[...], preferred_element_type=f32), 0.0)
    s = jax.nn.sigmoid(jnp.dot(h, ca2_ref[...], preferred_element_type=f32))
    xa = combined * s[:, None, :]                                  # (TB, F, 192)

    # ---- SpatialAttention: Conv1d(2,1,k=7,pad=3), taps as SMEM scalars ------
    avg = jnp.mean(xa, axis=-1, keepdims=True)                     # (TB, F, 1)
    mx = jnp.max(xa, axis=-1, keepdims=True)                       # (TB, F, 1)
    zc1 = jnp.zeros((TB, 3, 1), f32)
    avgp = jnp.concatenate([zc1, avg, zc1], axis=1)                # (TB, F+6, 1)
    mxp = jnp.concatenate([zc1, mx, zc1], axis=1)
    conv_s = jnp.zeros((TB, F, 1), f32)
    for j in range(7):                                             # static taps
        conv_s = conv_s + avgp[:, j:j + F, :] * ws_ref[j]
        conv_s = conv_s + mxp[:, j:j + F, :] * ws_ref[7 + j]
    att = jax.nn.sigmoid(conv_s)
    xs = xa * att                                                  # (TB, F, 192)

    # ---- num_conv: [Conv1d(k=3) -> BN(eval) -> ReLU] x2 ---------------------
    #      three per-tap accumulated matmuls (bf16 weights, f32 accumulation)
    def conv_bn_relu(xin, row_off, cin, scale, offset):
        zc = jnp.zeros((TB, 1, cin), f32)
        xp = jnp.concatenate([zc, xin, zc], axis=1)                # (TB, F+2, cin)
        acc = jnp.zeros((TB * F, 128), f32)
        for j in range(3):
            col = xp[:, j:j + F, :].reshape(TB * F, cin).astype(bf16)
            wj = w128_ref[row_off + j * cin: row_off + (j + 1) * cin, :]
            acc = acc + jnp.dot(col, wj, preferred_element_type=f32)
        acc = acc * scale + offset          # folded conv-bias + BatchNorm(eval)
        return jnp.maximum(acc, 0.0).reshape(TB, F, 128)

    y1 = conv_bn_relu(xs, r0, 192, vec("s1"), vec("o1"))           # (TB, F, 128)
    y2 = conv_bn_relu(y1, r1, 128, vec("s2"), vec("o2"))           # (TB, F, 128)
    pooled_num = jnp.max(y2, axis=1)              # AdaptiveMaxPool1d(1) -> (TB,128)

    # ---- num_fc --------------------------------------------------------------
    h1 = jnp.maximum(
        jnp.dot(pooled_num.astype(bf16), w256_ref[0:128, :],
                preferred_element_type=f32) + vec("bf1"), 0.0)     # (TB, 256)
    num_out = jnp.maximum(
        jnp.dot(h1.astype(bf16), w128_ref[r2:r3, :],
                preferred_element_type=f32) + vec("bf2"), 0.0)     # (TB, 128)

    # ---- fusion + classifier (no concat: split wcl1 into two 128-row halves) -
    hc = jnp.dot(text_out.astype(bf16), w256_ref[128:256, :],
                 preferred_element_type=f32)
    hc = hc + jnp.dot(num_out.astype(bf16), w256_ref[256:384, :],
                      preferred_element_type=f32)
    hc = jnp.maximum(hc + vec("bcl1"), 0.0)                        # (TB, 256)
    out_ref[...] = jnp.dot(hc.astype(bf16), w128_ref[r3:r4, :],
                           preferred_element_type=f32) + vec("bcl2")  # (TB, 128)


# ----------------------------------------------------------------------------
# Parameter initialization (deterministic, PyTorch-convention shapes).
# ----------------------------------------------------------------------------
def init_params(key, num_features, hidden_size, num_labels):
    def nrm(k, shape, scale=0.05):
        return scale * jax.random.normal(k, shape, dtype=jnp.float32)

    ks = jax.random.split(key, 24)
    p = {}
    p["text_w"], p["text_b"] = nrm(ks[0], (128, hidden_size)), nrm(ks[1], (128,))
    p["c1_w"], p["c1_b"] = nrm(ks[2], (64, 1, 3)), nrm(ks[3], (64,))
    p["c2_w"], p["c2_b"] = nrm(ks[4], (64, 1, 5)), nrm(ks[5], (64,))
    p["c3_w"], p["c3_b"] = nrm(ks[6], (64, 1, 7)), nrm(ks[7], (64,))
    p["ca1_w"] = nrm(ks[8], (192 // 16, 192))           # Linear(192 -> 12), no bias
    p["ca2_w"] = nrm(ks[9], (192, 192 // 16))           # Linear(12 -> 192), no bias
    p["sa_w"] = nrm(ks[10], (1, 2, 7))                  # Conv1d(2 -> 1, k=7), no bias
    p["nc1_w"], p["nc1_b"] = nrm(ks[11], (128, 192, 3)), nrm(ks[12], (128,))
    p["nc2_w"], p["nc2_b"] = nrm(ks[13], (128, 128, 3)), nrm(ks[14], (128,))
    for i in (1, 2):                                    # BatchNorm1d eval stats
        p[f"bn{i}_g"] = jnp.ones((128,), jnp.float32)
        p[f"bn{i}_b"] = jnp.zeros((128,), jnp.float32)
        p[f"bn{i}_rm"] = jnp.zeros((128,), jnp.float32)
        p[f"bn{i}_rv"] = jnp.ones((128,), jnp.float32)
    p["nf1_w"], p["nf1_b"] = nrm(ks[15], (256, 128)), nrm(ks[16], (256,))
    p["nf2_w"], p["nf2_b"] = nrm(ks[17], (128, 256)), nrm(ks[18], (128,))
    p["cl1_w"], p["cl1_b"] = nrm(ks[19], (256, 256)), nrm(ks[20], (256,))
    p["cl2_w"], p["cl2_b"] = nrm(ks[21], (num_labels, 256)), nrm(ks[22], (num_labels,))
    return p


# ----------------------------------------------------------------------------
# Wrapper: re-layout / pack params and invoke pallas_call (batch-tiled grid).
# ----------------------------------------------------------------------------
@functools.partial(jax.jit, static_argnames=("num_labels",))
def multimodal_classifier(pooled_output, numerical, params, *, num_labels):
    B, H = pooled_output.shape
    F = numerical.shape[1]
    eps = 1e-5
    p = params
    f32, bf16 = jnp.float32, jnp.bfloat16

    # --- batch tiling: pad to a sublane multiple, tile big batches by 128 ----
    if B <= 128:
        TB = -(-B // 8) * 8
    else:
        TB = 128
    Bp = -(-B // TB) * TB
    nb = Bp // TB

    # Pad hidden dim to a multiple of 16 (bf16 sublane packing) — zero padding
    # of the contraction dim is numerically exact.
    Hp = -(-H // 16) * 16
    pooled_p = jnp.pad(pooled_output.astype(f32), ((0, Bp - B), (0, Hp - H)))
    num_p = jnp.pad(numerical.astype(f32), ((0, Bp - B), (0, 0)))

    # Fold conv bias + BatchNorm(eval) into per-channel scale/offset.
    def bn_fold(conv_b, g, b, rm, rv):
        scale = g / jnp.sqrt(rv + eps)
        off = scale * (conv_b - rm) + b
        return scale, off

    s1, o1 = bn_fold(p["nc1_b"], p["bn1_g"], p["bn1_b"], p["bn1_rm"], p["bn1_rv"])
    s2, o2 = bn_fold(p["nc2_b"], p["bn2_g"], p["bn2_b"], p["bn2_rm"], p["bn2_rv"])

    # --- packed (1, 1664) bias/scale/offset vector ---------------------------
    segs = {
        "bt": p["text_b"],
        "bconv": jnp.concatenate([p["c1_b"], p["c2_b"], p["c3_b"]]),
        "s1": s1, "o1": o1, "s2": s2, "o2": o2,
        "bf1": p["nf1_b"], "bf2": p["nf2_b"],
        "bcl1": p["cl1_b"],
        "bcl2": jnp.pad(p["cl2_b"], (0, _LP - num_labels)),
    }
    pvec = jnp.zeros((_VEC_LEN,), f32)
    for name, v in segs.items():
        pvec = pvec.at[_VEC_OFF[name]:_VEC_OFF[name] + _VEC_SIZE[name]].set(
            v.reshape(-1).astype(f32))
    pvec = pvec.reshape(1, _VEC_LEN)

    # --- multi-scale conv weight: zero-pad k=3/5/7 taps into one (8,192) -----
    wconv = jnp.zeros((8, 192), f32)
    wconv = wconv.at[2:5, 0:64].set(p["c1_w"][:, 0, :].T)     # k=3, pad=1
    wconv = wconv.at[1:6, 64:128].set(p["c2_w"][:, 0, :].T)   # k=5, pad=2
    wconv = wconv.at[0:7, 128:192].set(p["c3_w"][:, 0, :].T)  # k=7, pad=3

    # --- channel attention weights, reduction dim padded 12 -> 16 ------------
    ca1 = jnp.pad(p["ca1_w"].T, ((0, 0), (0, 4)))             # (192, 16)
    ca2 = jnp.pad(p["ca2_w"].T, ((0, 4), (0, 0)))             # (16, 192)

    # --- packed bf16 weight slabs (fed to the MXU in bf16, no up-cast) -------
    text_w = jnp.pad(p["text_w"].T, ((0, Hp - H), (0, 0)))                 # (Hp,128)
    wn1 = jnp.transpose(p["nc1_w"], (2, 1, 0)).reshape(576, 128)           # tap-major
    wn2 = jnp.transpose(p["nc2_w"], (2, 1, 0)).reshape(384, 128)
    wf2 = p["nf2_w"].T                                                     # (256,128)
    wcl2 = jnp.pad(p["cl2_w"].T, ((0, 0), (0, _LP - num_labels)))          # (256,128)
    w128 = jnp.concatenate([text_w, wn1, wn2, wf2, wcl2], axis=0).astype(bf16)

    wf1 = p["nf1_w"].T                                                     # (128,256)
    wcl1 = p["cl1_w"].T                                                    # (256,256)
    w256 = jnp.concatenate([wf1, wcl1], axis=0).astype(bf16)               # (384,256)

    ws = p["sa_w"][0].reshape(-1).astype(f32)                              # (14,) SMEM

    kernel_inputs = [
        pooled_p,                              # (Bp, Hp)  f32
        num_p,                                 # (Bp, F)   f32
        w128, w256,                            # bf16 weight slabs
        wconv, ca1, ca2,                       # small f32 weights
        pvec,                                  # (1, 1664) f32
        ws,                                    # (14,) f32  -> SMEM
    ]

    in_specs = [
        pl.BlockSpec((TB, Hp), lambda i: (i, 0)),          # activation tiles stream
        pl.BlockSpec((TB, F), lambda i: (i, 0)),
        pl.BlockSpec(w128.shape, lambda i: (0, 0)),        # weights stay resident
        pl.BlockSpec(w256.shape, lambda i: (0, 0)),
        pl.BlockSpec(wconv.shape, lambda i: (0, 0)),
        pl.BlockSpec(ca1.shape, lambda i: (0, 0)),
        pl.BlockSpec(ca2.shape, lambda i: (0, 0)),
        pl.BlockSpec(pvec.shape, lambda i: (0, 0)),
        pl.BlockSpec(memory_space=pltpu.MemorySpace.SMEM),
    ]

    flops = 2 * Bp * (Hp * 128 + F * 7 * 192 + 192 * 16 + 16 * 192 + F * 14
                      + F * 576 * 128 + F * 384 * 128
                      + 128 * 256 + 256 * 128 + 256 * 256 + 256 * _LP)
    bytes_accessed = sum(int(a.size) * a.dtype.itemsize for a in kernel_inputs) \
        + Bp * _LP * 4
    cost = pl.CostEstimate(flops=int(flops), transcendentals=int(Bp * (192 + F)),
                           bytes_accessed=int(bytes_accessed))

    out = pl.pallas_call(
        _mm_classifier_kernel,
        grid=(nb,),
        in_specs=in_specs,
        out_specs=pl.BlockSpec((TB, _LP), lambda i: (i, 0)),
        out_shape=jax.ShapeDtypeStruct((Bp, _LP), jnp.float32),
        compiler_params=pltpu.CompilerParams(
            dimension_semantics=("parallel",)),
        cost_estimate=cost,
    )(*kernel_inputs)
    return out[:B, :num_labels]


# ----------------------------------------------------------------------------
if __name__ == "__main__":
    B = 2                     # batch
    F = 16                    # num_numerical_features
    H = 32                    # roberta hidden_size (synthetic stand-in)
    L = 4                     # num_labels

    key = jax.random.PRNGKey(0)
    k_pooled, k_num, k_params = jax.random.split(key, 3)

    # TODO(synk): pooled_output stands in for RobertaModel(...).pooler_output.
    pooled_output = jax.random.normal(k_pooled, (B, H), dtype=jnp.float32)
    numerical = jax.random.normal(k_num, (B, F), dtype=jnp.float32)
    params = init_params(k_params, F, H, L)

    logits = multimodal_classifier(pooled_output, numerical, params, num_labels=L)
    logits = jax.block_until_ready(logits)

    assert logits.shape == (B, L)
    assert bool(jnp.all(jnp.isfinite(logits)))
    print("KERNEL_OK")
</pallas_src>

<mosaic_0001>
module attributes {stable_mosaic.version = 11 : i64} {
  func.func @_mm_classifier_kernel(%arg0: i32, %arg1: memref<8x32xf32, #tpu.memory_space<vmem>>, %arg2: memref<8x16xf32, #tpu.memory_space<vmem>>, %arg3: memref<1504x128xbf16, #tpu.memory_space<vmem>>, %arg4: memref<384x256xbf16, #tpu.memory_space<vmem>>, %arg5: memref<8x192xf32, #tpu.memory_space<vmem>>, %arg6: memref<192x16xf32, #tpu.memory_space<vmem>>, %arg7: memref<16x192xf32, #tpu.memory_space<vmem>>, %arg8: memref<1x1664xf32, #tpu.memory_space<vmem>>, %arg9: memref<14xf32, #tpu.memory_space<smem>>, %arg10: memref<8x128xf32, #tpu.memory_space<vmem>>) attributes {dimension_semantics = [#tpu.dimension_semantics<parallel>], iteration_bounds = array<i64: 1>, scalar_prefetch = 0 : i64, scratch_operands = 0 : i64, tpu.core_type = #tpu.core_type<tc>, window_params = [{transform_indices = @transform_0, window_bounds = array<i64: 8, 32>}, {transform_indices = @transform_1, window_bounds = array<i64: 8, 16>}, {pipeline_mode = #tpu.pipeline_mode<synchronous>, transform_indices = @transform_2, window_bounds = array<i64: 1504, 128>}, {pipeline_mode = #tpu.pipeline_mode<synchronous>, transform_indices = @transform_3, window_bounds = array<i64: 384, 256>}, {pipeline_mode = #tpu.pipeline_mode<synchronous>, transform_indices = @transform_4, window_bounds = array<i64: 8, 192>}, {pipeline_mode = #tpu.pipeline_mode<synchronous>, transform_indices = @transform_5, window_bounds = array<i64: 192, 16>}, {pipeline_mode = #tpu.pipeline_mode<synchronous>, transform_indices = @transform_6, window_bounds = array<i64: 16, 192>}, {pipeline_mode = #tpu.pipeline_mode<synchronous>, transform_indices = @transform_7, window_bounds = array<i64: 1, 1664>}, {transform_indices = @transform_8, window_bounds = array<i64: 14>}, {transform_indices = @transform_9, window_bounds = array<i64: 8, 128>}]} {
    %c0 = arith.constant 0 : index
    %c0_0 = arith.constant 0 : index
    %0 = vector.load %arg1[%c0, %c0_0] : memref<8x32xf32, #tpu.memory_space<vmem>>, vector<8x32xf32>
    %c0_1 = arith.constant 0 : index
    %c0_2 = arith.constant 0 : index
    %1 = vector.load %arg2[%c0_1, %c0_2] : memref<8x16xf32, #tpu.memory_space<vmem>>, vector<8x16xf32>
    %2 = arith.truncf %0 : vector<8x32xf32> to vector<8x32xbf16>
    %c0_3 = arith.constant 0 : index
    %c0_4 = arith.constant 0 : index
    %3 = vector.load %arg3[%c0_3, %c0_4] : memref<1504x128xbf16, #tpu.memory_space<vmem>>, vector<32x128xbf16>
    %cst = arith.constant dense<0.000000e+00> : vector<8x128xf32>
    %4 = tpu.matmul %2, %3, %cst {dimension_numbers = #tpu.dot_dimension_numbers<[1], [0], [0], [1], [0, 0, 1, 1], [], []>} : vector<8x32xbf16>, vector<32x128xbf16>, vector<8x128xf32> -> vector<8x128xf32>
    %c0_5 = arith.constant 0 : index
    %c0_6 = arith.constant 0 : index
    %5 = vector.load %arg8[%c0_5, %c0_6] : memref<1x1664xf32, #tpu.memory_space<vmem>>, vector<1x128xf32>
    %6 = vector.broadcast %5 : vector<1x128xf32> to vector<8x128xf32>
    %7 = arith.addf %4, %6 : vector<8x128xf32>
    %cst_7 = arith.constant 0.000000e+00 : f32
    %8 = vector.broadcast %cst_7 : f32 to vector<8x3xf32>
    %9 = tpu.concatenate %8, %1, %8 in 1 : vector<8x3xf32>, vector<8x16xf32>, vector<8x3xf32> -> vector<8x22xf32>
    %10 = vector.shape_cast %9 : vector<8x22xf32> to vector<8x22x1xf32>
    %cst_8 = arith.constant 0.000000e+00 : f32
    %11 = vector.broadcast %cst_8 : f32 to vector<8x16x192xf32>
    %c0_9 = arith.constant 0 : index
    %c0_10 = arith.constant 0 : index
    %12 = vector.load %arg5[%c0_9, %c0_10] : memref<8x192xf32, #tpu.memory_space<vmem>>, vector<1x192xf32>
    %13 = vector.shape_cast %12 : vector<1x192xf32> to vector<1x1x192xf32>
    %14 = vector.extract_strided_slice %10 {offsets = [0, 0, 0], sizes = [8, 16, 1], strides = [1, 1, 1]} : vector<8x22x1xf32> to vector<8x16x1xf32>
    %15 = vector.broadcast %14 : vector<8x16x1xf32> to vector<8x16x192xf32>
    %16 = vector.broadcast %13 : vector<1x1x192xf32> to vector<8x16x192xf32>
    %17 = arith.mulf %15, %16 : vector<8x16x192xf32>
    %18 = arith.addf %11, %17 : vector<8x16x192xf32>
    %c1 = arith.constant 1 : index
    %c0_11 = arith.constant 0 : index
    %19 = vector.load %arg5[%c1, %c0_11] : memref<8x192xf32, #tpu.memory_space<vmem>>, vector<1x192xf32>
    %20 = vector.shape_cast %19 : vector<1x192xf32> to vector<1x1x192xf32>
    %21 = vector.extract_strided_slice %10 {offsets = [0, 1, 0], sizes = [8, 16, 1], strides = [1, 1, 1]} : vector<8x22x1xf32> to vector<8x16x1xf32>
    %22 = vector.broadcast %21 : vector<8x16x1xf32> to vector<8x16x192xf32>
    %23 = vector.broadcast %20 : vector<1x1x192xf32> to vector<8x16x192xf32>
    %24 = arith.mulf %22, %23 : vector<8x16x192xf32>
    %25 = arith.addf %18, %24 : vector<8x16x192xf32>
    %c2 = arith.constant 2 : index
    %c0_12 = arith.constant 0 : index
    %26 = vector.load %arg5[%c2, %c0_12] : memref<8x192xf32, #tpu.memory_space<vmem>>, vector<1x192xf32>
    %27 = vector.shape_cast %26 : vector<1x192xf32> to vector<1x1x192xf32>
    %28 = vector.extract_strided_slice %10 {offsets = [0, 2, 0], sizes = [8, 16, 1], strides = [1, 1, 1]} : vector<8x22x1xf32> to vector<8x16x1xf32>
    %29 = vector.broadcast %28 : vector<8x16x1xf32> to vector<8x16x192xf32>
    %30 = vector.broadcast %27 : vector<1x1x192xf32> to vector<8x16x192xf32>
    %31 = arith.mulf %29, %30 : vector<8x16x192xf32>
    %32 = arith.addf %25, %31 : vector<8x16x192xf32>
    %c3 = arith.constant 3 : index
    %c0_13 = arith.constant 0 : index
    %33 = vector.load %arg5[%c3, %c0_13] : memref<8x192xf32, #tpu.memory_space<vmem>>, vector<1x192xf32>
    %34 = vector.shape_cast %33 : vector<1x192xf32> to vector<1x1x192xf32>
    %35 = vector.extract_strided_slice %10 {offsets = [0, 3, 0], sizes = [8, 16, 1], strides = [1, 1, 1]} : vector<8x22x1xf32> to vector<8x16x1xf32>
    %36 = vector.broadcast %35 : vector<8x16x1xf32> to vector<8x16x192xf32>
    %37 = vector.broadcast %34 : vector<1x1x192xf32> to vector<8x16x192xf32>
    %38 = arith.mulf %36, %37 : vector<8x16x192xf32>
    %39 = arith.addf %32, %38 : vector<8x16x192xf32>
    %c4 = arith.constant 4 : index
    %c0_14 = arith.constant 0 : index
    %40 = vector.load %arg5[%c4, %c0_14] : memref<8x192xf32, #tpu.memory_space<vmem>>, vector<1x192xf32>
    %41 = vector.shape_cast %40 : vector<1x192xf32> to vector<1x1x192xf32>
    %42 = vector.extract_strided_slice %10 {offsets = [0, 4, 0], sizes = [8, 16, 1], strides = [1, 1, 1]} : vector<8x22x1xf32> to vector<8x16x1xf32>
    %43 = vector.broadcast %42 : vector<8x16x1xf32> to vector<8x16x192xf32>
    %44 = vector.broadcast %41 : vector<1x1x192xf32> to vector<8x16x192xf32>
    %45 = arith.mulf %43, %44 : vector<8x16x192xf32>
    %46 = arith.addf %39, %45 : vector<8x16x192xf32>
    %c5 = arith.constant 5 : index
    %c0_15 = arith.constant 0 : index
    %47 = vector.load %arg5[%c5, %c0_15] : memref<8x192xf32, #tpu.memory_space<vmem>>, vector<1x192xf32>
    %48 = vector.shape_cast %47 : vector<1x192xf32> to vector<1x1x192xf32>
    %49 = vector.extract_strided_slice %10 {offsets = [0, 5, 0], sizes = [8, 16, 1], strides = [1, 1, 1]} : vector<8x22x1xf32> to vector<8x16x1xf32>
    %50 = vector.broadcast %49 : vector<8x16x1xf32> to vector<8x16x192xf32>
    %51 = vector.broadcast %48 : vector<1x1x192xf32> to vector<8x16x192xf32>
    %52 = arith.mulf %50, %51 : vector<8x16x192xf32>
    %53 = arith.addf %46, %52 : vector<8x16x192xf32>
    %c6 = arith.constant 6 : index
    %c0_16 = arith.constant 0 : index
    %54 = vector.load %arg5[%c6, %c0_16] : memref<8x192xf32, #tpu.memory_space<vmem>>, vector<1x192xf32>
    %55 = vector.shape_cast %54 : vector<1x192xf32> to vector<1x1x192xf32>
    %56 = vector.extract_strided_slice %10 {offsets = [0, 6, 0], sizes = [8, 16, 1], strides = [1, 1, 1]} : vector<8x22x1xf32> to vector<8x16x1xf32>
    %57 = vector.broadcast %56 : vector<8x16x1xf32> to vector<8x16x192xf32>
    %58 = vector.broadcast %55 : vector<1x1x192xf32> to vector<8x16x192xf32>
    %59 = arith.mulf %57, %58 : vector<8x16x192xf32>
    %60 = arith.addf %53, %59 : vector<8x16x192xf32>
    %c0_17 = arith.constant 0 : index
    %c128 = arith.constant 128 : index
    %61 = vector.load %arg8[%c0_17, %c128] : memref<1x1664xf32, #tpu.memory_space<vmem>>, vector<1x192xf32>
    %62 = vector.shape_cast %61 : vector<1x192xf32> to vector<1x1x192xf32>
    %63 = vector.broadcast %62 : vector<1x1x192xf32> to vector<8x16x192xf32>
    %64 = arith.addf %60, %63 : vector<8x16x192xf32>
    %cst_18 = arith.constant 0.000000e+00 : f32
    %65 = vector.broadcast %cst_18 : f32 to vector<8x16x192xf32>
    %66 = arith.maximumf %64, %65 : vector<8x16x192xf32>
    %cst_19 = arith.constant dense<0.000000e+00> : vector<8x192xf32>
    %67 = vector.multi_reduction <add>, %66, %cst_19 [1] : vector<8x16x192xf32> to vector<8x192xf32>
    %cst_20 = arith.constant 1.600000e+01 : f32
    %68 = vector.broadcast %cst_20 : f32 to vector<8x192xf32>
    %69 = arith.divf %67, %68 : vector<8x192xf32>
    %c0_21 = arith.constant 0 : index
    %c0_22 = arith.constant 0 : index
    %70 = vector.load %arg6[%c0_21, %c0_22] : memref<192x16xf32, #tpu.memory_space<vmem>>, vector<192x16xf32>
    %cst_23 = arith.constant dense<0.000000e+00> : vector<8x16xf32>
    %71 = tpu.matmul %69, %70, %cst_23 {dimension_numbers = #tpu.dot_dimension_numbers<[1], [0], [0], [1], [0, 0, 1, 1], [], []>} : vector<8x192xf32>, vector<192x16xf32>, vector<8x16xf32> -> vector<8x16xf32>
    %cst_24 = arith.constant 0.000000e+00 : f32
    %72 = vector.broadcast %cst_24 : f32 to vector<8x16xf32>
    %73 = arith.maximumf %71, %72 : vector<8x16xf32>
    %c0_25 = arith.constant 0 : index
    %c0_26 = arith.constant 0 : index
    %74 = vector.load %arg7[%c0_25, %c0_26] : memref<16x192xf32, #tpu.memory_space<vmem>>, vector<16x192xf32>
    %cst_27 = arith.constant dense<0.000000e+00> : vector<8x192xf32>
    %75 = tpu.matmul %73, %74, %cst_27 {dimension_numbers = #tpu.dot_dimension_numbers<[1], [0], [0], [1], [0, 0, 1, 1], [], []>} : vector<8x16xf32>, vector<16x192xf32>, vector<8x192xf32> -> vector<8x192xf32>
    %76 = arith.negf %75 : vector<8x192xf32>
    %77 = math.exp %76 : vector<8x192xf32>
    %cst_28 = arith.constant 1.000000e+00 : f32
    %78 = vector.broadcast %cst_28 : f32 to vector<8x192xf32>
    %79 = arith.addf %78, %77 : vector<8x192xf32>
    %80 = arith.divf %78, %79 : vector<8x192xf32>
    %81 = vector.shape_cast %80 : vector<8x192xf32> to vector<8x1x192xf32>
    %82 = vector.broadcast %81 : vector<8x1x192xf32> to vector<8x16x192xf32>
    %83 = arith.mulf %66, %82 : vector<8x16x192xf32>
    %cst_29 = arith.constant dense<0.000000e+00> : vector<8x16xf32>
    %84 = vector.multi_reduction <add>, %83, %cst_29 [2] : vector<8x16x192xf32> to vector<8x16xf32>
    %85 = vector.shape_cast %84 : vector<8x16xf32> to vector<8x16x1xf32>
    %cst_30 = arith.constant 1.920000e+02 : f32
    %86 = vector.broadcast %cst_30 : f32 to vector<8x16x1xf32>
    %87 = arith.divf %85, %86 : vector<8x16x1xf32>
    %cst_31 = arith.constant dense<0xFF800000> : vector<8x16xf32>
    %88 = vector.multi_reduction <maximumf>, %83, %cst_31 [2] : vector<8x16x192xf32> to vector<8x16xf32>
    %89 = vector.shape_cast %88 : vector<8x16xf32> to vector<8x16x1xf32>
    %cst_32 = arith.constant 0.000000e+00 : f32
    %90 = vector.broadcast %cst_32 : f32 to vector<8x3x1xf32>
    %91 = tpu.concatenate %90, %87, %90 in 1 : vector<8x3x1xf32>, vector<8x16x1xf32>, vector<8x3x1xf32> -> vector<8x22x1xf32>
    %92 = tpu.concatenate %90, %89, %90 in 1 : vector<8x3x1xf32>, vector<8x16x1xf32>, vector<8x3x1xf32> -> vector<8x22x1xf32>
    %cst_33 = arith.constant 0.000000e+00 : f32
    %93 = vector.broadcast %cst_33 : f32 to vector<8x16x1xf32>
    %94 = vector.extract_strided_slice %91 {offsets = [0, 0, 0], sizes = [8, 16, 1], strides = [1, 1, 1]} : vector<8x22x1xf32> to vector<8x16x1xf32>
    %c0_34 = arith.constant 0 : index
    %95 = memref.load %arg9[%c0_34] : memref<14xf32, #tpu.memory_space<smem>>
    %96 = vector.broadcast %95 : f32 to vector<8x16x1xf32>
    %97 = arith.mulf %94, %96 : vector<8x16x1xf32>
    %98 = arith.addf %93, %97 : vector<8x16x1xf32>
    %99 = vector.extract_strided_slice %92 {offsets = [0, 0, 0], sizes = [8, 16, 1], strides = [1, 1, 1]} : vector<8x22x1xf32> to vector<8x16x1xf32>
    %c7 = arith.constant 7 : index
    %100 = memref.load %arg9[%c7] : memref<14xf32, #tpu.memory_space<smem>>
    %101 = vector.broadcast %100 : f32 to vector<8x16x1xf32>
    %102 = arith.mulf %99, %101 : vector<8x16x1xf32>
    %103 = arith.addf %98, %102 : vector<8x16x1xf32>
    %104 = vector.extract_strided_slice %91 {offsets = [0, 1, 0], sizes = [8, 16, 1], strides = [1, 1, 1]} : vector<8x22x1xf32> to vector<8x16x1xf32>
    %c1_35 = arith.constant 1 : index
    %105 = memref.load %arg9[%c1_35] : memref<14xf32, #tpu.memory_space<smem>>
    %106 = vector.broadcast %105 : f32 to vector<8x16x1xf32>
    %107 = arith.mulf %104, %106 : vector<8x16x1xf32>
    %108 = arith.addf %103, %107 : vector<8x16x1xf32>
    %109 = vector.extract_strided_slice %92 {offsets = [0, 1, 0], sizes = [8, 16, 1], strides = [1, 1, 1]} : vector<8x22x1xf32> to vector<8x16x1xf32>
    %c8 = arith.constant 8 : index
    %110 = memref.load %arg9[%c8] : memref<14xf32, #tpu.memory_space<smem>>
    %111 = vector.broadcast %110 : f32 to vector<8x16x1xf32>
    %112 = arith.mulf %109, %111 : vector<8x16x1xf32>
    %113 = arith.addf %108, %112 : vector<8x16x1xf32>
    %114 = vector.extract_strided_slice %91 {offsets = [0, 2, 0], sizes = [8, 16, 1], strides = [1, 1, 1]} : vector<8x22x1xf32> to vector<8x16x1xf32>
    %c2_36 = arith.constant 2 : index
    %115 = memref.load %arg9[%c2_36] : memref<14xf32, #tpu.memory_space<smem>>
    %116 = vector.broadcast %115 : f32 to vector<8x16x1xf32>
    %117 = arith.mulf %114, %116 : vector<8x16x1xf32>
    %118 = arith.addf %113, %117 : vector<8x16x1xf32>
    %119 = vector.extract_strided_slice %92 {offsets = [0, 2, 0], sizes = [8, 16, 1], strides = [1, 1, 1]} : vector<8x22x1xf32> to vector<8x16x1xf32>
    %c9 = arith.constant 9 : index
    %120 = memref.load %arg9[%c9] : memref<14xf32, #tpu.memory_space<smem>>
    %121 = vector.broadcast %120 : f32 to vector<8x16x1xf32>
    %122 = arith.mulf %119, %121 : vector<8x16x1xf32>
    %123 = arith.addf %118, %122 : vector<8x16x1xf32>
    %124 = vector.extract_strided_slice %91 {offsets = [0, 3, 0], sizes = [8, 16, 1], strides = [1, 1, 1]} : vector<8x22x1xf32> to vector<8x16x1xf32>
    %c3_37 = arith.constant 3 : index
    %125 = memref.load %arg9[%c3_37] : memref<14xf32, #tpu.memory_space<smem>>
    %126 = vector.broadcast %125 : f32 to vector<8x16x1xf32>
    %127 = arith.mulf %124, %126 : vector<8x16x1xf32>
    %128 = arith.addf %123, %127 : vector<8x16x1xf32>
    %129 = vector.extract_strided_slice %92 {offsets = [0, 3, 0], sizes = [8, 16, 1], strides = [1, 1, 1]} : vector<8x22x1xf32> to vector<8x16x1xf32>
    %c10 = arith.constant 10 : index
    %130 = memref.load %arg9[%c10] : memref<14xf32, #tpu.memory_space<smem>>
    %131 = vector.broadcast %130 : f32 to vector<8x16x1xf32>
    %132 = arith.mulf %129, %131 : vector<8x16x1xf32>
    %133 = arith.addf %128, %132 : vector<8x16x1xf32>
    %134 = vector.extract_strided_slice %91 {offsets = [0, 4, 0], sizes = [8, 16, 1], strides = [1, 1, 1]} : vector<8x22x1xf32> to vector<8x16x1xf32>
    %c4_38 = arith.constant 4 : index
    %135 = memref.load %arg9[%c4_38] : memref<14xf32, #tpu.memory_space<smem>>
    %136 = vector.broadcast %135 : f32 to vector<8x16x1xf32>
    %137 = arith.mulf %134, %136 : vector<8x16x1xf32>
    %138 = arith.addf %133, %137 : vector<8x16x1xf32>
    %139 = vector.extract_strided_slice %92 {offsets = [0, 4, 0], sizes = [8, 16, 1], strides = [1, 1, 1]} : vector<8x22x1xf32> to vector<8x16x1xf32>
    %c11 = arith.constant 11 : index
    %140 = memref.load %arg9[%c11] : memref<14xf32, #tpu.memory_space<smem>>
    %141 = vector.broadcast %140 : f32 to vector<8x16x1xf32>
    %142 = arith.mulf %139, %141 : vector<8x16x1xf32>
    %143 = arith.addf %138, %142 : vector<8x16x1xf32>
    %144 = vector.extract_strided_slice %91 {offsets = [0, 5, 0], sizes = [8, 16, 1], strides = [1, 1, 1]} : vector<8x22x1xf32> to vector<8x16x1xf32>
    %c5_39 = arith.constant 5 : index
    %145 = memref.load %arg9[%c5_39] : memref<14xf32, #tpu.memory_space<smem>>
    %146 = vector.broadcast %145 : f32 to vector<8x16x1xf32>
    %147 = arith.mulf %144, %146 : vector<8x16x1xf32>
    %148 = arith.addf %143, %147 : vector<8x16x1xf32>
    %149 = vector.extract_strided_slice %92 {offsets = [0, 5, 0], sizes = [8, 16, 1], strides = [1, 1, 1]} : vector<8x22x1xf32> to vector<8x16x1xf32>
    %c12 = arith.constant 12 : index
    %150 = memref.load %arg9[%c12] : memref<14xf32, #tpu.memory_space<smem>>
    %151 = vector.broadcast %150 : f32 to vector<8x16x1xf32>
    %152 = arith.mulf %149, %151 : vector<8x16x1xf32>
    %153 = arith.addf %148, %152 : vector<8x16x1xf32>
    %154 = vector.extract_strided_slice %91 {offsets = [0, 6, 0], sizes = [8, 16, 1], strides = [1, 1, 1]} : vector<8x22x1xf32> to vector<8x16x1xf32>
    %c6_40 = arith.constant 6 : index
    %155 = memref.load %arg9[%c6_40] : memref<14xf32, #tpu.memory_space<smem>>
    %156 = vector.broadcast %155 : f32 to vector<8x16x1xf32>
    %157 = arith.mulf %154, %156 : vector<8x16x1xf32>
    %158 = arith.addf %153, %157 : vector<8x16x1xf32>
    %159 = vector.extract_strided_slice %92 {offsets = [0, 6, 0], sizes = [8, 16, 1], strides = [1, 1, 1]} : vector<8x22x1xf32> to vector<8x16x1xf32>
    %c13 = arith.constant 13 : index
    %160 = memref.load %arg9[%c13] : memref<14xf32, #tpu.memory_space<smem>>
    %161 = vector.broadcast %160 : f32 to vector<8x16x1xf32>
    %162 = arith.mulf %159, %161 : vector<8x16x1xf32>
    %163 = arith.addf %158, %162 : vector<8x16x1xf32>
    %164 = arith.negf %163 : vector<8x16x1xf32>
    %165 = math.exp %164 : vector<8x16x1xf32>
    %cst_41 = arith.constant 1.000000e+00 : f32
    %166 = vector.broadcast %cst_41 : f32 to vector<8x16x1xf32>
    %167 = arith.addf %166, %165 : vector<8x16x1xf32>
    %168 = arith.divf %166, %167 : vector<8x16x1xf32>
    %169 = vector.broadcast %168 : vector<8x16x1xf32> to vector<8x16x192xf32>
    %170 = arith.mulf %83, %169 : vector<8x16x192xf32>
    %c0_42 = arith.constant 0 : index
    %c384 = arith.constant 384 : index
    %171 = vector.load %arg8[%c0_42, %c384] : memref<1x1664xf32, #tpu.memory_space<vmem>>, vector<1x128xf32>
    %c0_43 = arith.constant 0 : index
    %c512 = arith.constant 512 : index
    %172 = vector.load %arg8[%c0_43, %c512] : memref<1x1664xf32, #tpu.memory_space<vmem>>, vector<1x128xf32>
    %cst_44 = arith.constant 0.000000e+00 : f32
    %173 = vector.broadcast %cst_44 : f32 to vector<8x1x192xf32>
    %174 = tpu.concatenate %173, %170, %173 in 1 : vector<8x1x192xf32>, vector<8x16x192xf32>, vector<8x1x192xf32> -> vector<8x18x192xf32>
    %cst_45 = arith.constant 0.000000e+00 : f32
    %175 = vector.broadcast %cst_45 : f32 to vector<128x128xf32>
    %176 = vector.extract_strided_slice %174 {offsets = [0, 0, 0], sizes = [8, 16, 192], strides = [1, 1, 1]} : vector<8x18x192xf32> to vector<8x16x192xf32>
    %177 = vector.shape_cast %176 : vector<8x16x192xf32> to vector<128x192xf32>
    %178 = arith.truncf %177 : vector<128x192xf32> to vector<128x192xbf16>
    %c32 = arith.constant 32 : index
    %c0_46 = arith.constant 0 : index
    %179 = vector.load %arg3[%c32, %c0_46] : memref<1504x128xbf16, #tpu.memory_space<vmem>>, vector<192x128xbf16>
    %cst_47 = arith.constant dense<0.000000e+00> : vector<128x128xf32>
    %180 = tpu.matmul %178, %179, %cst_47 {dimension_numbers = #tpu.dot_dimension_numbers<[1], [0], [0], [1], [0, 0, 1, 1], [], []>} : vector<128x192xbf16>, vector<192x128xbf16>, vector<128x128xf32> -> vector<128x128xf32>
    %181 = arith.addf %175, %180 : vector<128x128xf32>
    %182 = vector.extract_strided_slice %174 {offsets = [0, 1, 0], sizes = [8, 16, 192], strides = [1, 1, 1]} : vector<8x18x192xf32> to vector<8x16x192xf32>
    %183 = vector.shape_cast %182 : vector<8x16x192xf32> to vector<128x192xf32>
    %184 = arith.truncf %183 : vector<128x192xf32> to vector<128x192xbf16>
    %c224 = arith.constant 224 : index
    %c0_48 = arith.constant 0 : index
    %185 = vector.load %arg3[%c224, %c0_48] : memref<1504x128xbf16, #tpu.memory_space<vmem>>, vector<192x128xbf16>
    %cst_49 = arith.constant dense<0.000000e+00> : vector<128x128xf32>
    %186 = tpu.matmul %184, %185, %cst_49 {dimension_numbers = #tpu.dot_dimension_numbers<[1], [0], [0], [1], [0, 0, 1, 1], [], []>} : vector<128x192xbf16>, vector<192x128xbf16>, vector<128x128xf32> -> vector<128x128xf32>
    %187 = arith.addf %181, %186 : vector<128x128xf32>
    %188 = vector.extract_strided_slice %174 {offsets = [0, 2, 0], sizes = [8, 16, 192], strides = [1, 1, 1]} : vector<8x18x192xf32> to vector<8x16x192xf32>
    %189 = vector.shape_cast %188 : vector<8x16x192xf32> to vector<128x192xf32>
    %190 = arith.truncf %189 : vector<128x192xf32> to vector<128x192xbf16>
    %c416 = arith.constant 416 : index
    %c0_50 = arith.constant 0 : index
    %191 = vector.load %arg3[%c416, %c0_50] : memref<1504x128xbf16, #tpu.memory_space<vmem>>, vector<192x128xbf16>
    %cst_51 = arith.constant dense<0.000000e+00> : vector<128x128xf32>
    %192 = tpu.matmul %190, %191, %cst_51 {dimension_numbers = #tpu.dot_dimension_numbers<[1], [0], [0], [1], [0, 0, 1, 1], [], []>} : vector<128x192xbf16>, vector<192x128xbf16>, vector<128x128xf32> -> vector<128x128xf32>
    %193 = arith.addf %187, %192 : vector<128x128xf32>
    %194 = vector.broadcast %171 : vector<1x128xf32> to vector<128x128xf32>
    %195 = arith.mulf %193, %194 : vector<128x128xf32>
    %196 = vector.broadcast %172 : vector<1x128xf32> to vector<128x128xf32>
    %197 = arith.addf %195, %196 : vector<128x128xf32>
    %cst_52 = arith.constant 0.000000e+00 : f32
    %198 = vector.broadcast %cst_52 : f32 to vector<128x128xf32>
    %199 = arith.maximumf %197, %198 : vector<128x128xf32>
    %200 = vector.shape_cast %199 : vector<128x128xf32> to vector<8x16x128xf32>
    %c0_53 = arith.constant 0 : index
    %c640 = arith.constant 640 : index
    %201 = vector.load %arg8[%c0_53, %c640] : memref<1x1664xf32, #tpu.memory_space<vmem>>, vector<1x128xf32>
    %c0_54 = arith.constant 0 : index
    %c768 = arith.constant 768 : index
    %202 = vector.load %arg8[%c0_54, %c768] : memref<1x1664xf32, #tpu.memory_space<vmem>>, vector<1x128xf32>
    %cst_55 = arith.constant 0.000000e+00 : f32
    %203 = vector.broadcast %cst_55 : f32 to vector<8x1x128xf32>
    %204 = tpu.concatenate %203, %200, %203 in 1 : vector<8x1x128xf32>, vector<8x16x128xf32>, vector<8x1x128xf32> -> vector<8x18x128xf32>
    %cst_56 = arith.constant 0.000000e+00 : f32
    %205 = vector.broadcast %cst_56 : f32 to vector<128x128xf32>
    %206 = vector.extract_strided_slice %204 {offsets = [0, 0, 0], sizes = [8, 16, 128], strides = [1, 1, 1]} : vector<8x18x128xf32> to vector<8x16x128xf32>
    %207 = vector.shape_cast %206 : vector<8x16x128xf32> to vector<128x128xf32>
    %208 = arith.truncf %207 : vector<128x128xf32> to vector<128x128xbf16>
    %c608 = arith.constant 608 : index
    %c0_57 = arith.constant 0 : index
    %209 = vector.load %arg3[%c608, %c0_57] : memref<1504x128xbf16, #tpu.memory_space<vmem>>, vector<128x128xbf16>
    %cst_58 = arith.constant dense<0.000000e+00> : vector<128x128xf32>
    %210 = tpu.matmul %208, %209, %cst_58 {dimension_numbers = #tpu.dot_dimension_numbers<[1], [0], [0], [1], [0, 0, 1, 1], [], []>} : vector<128x128xbf16>, vector<128x128xbf16>, vector<128x128xf32> -> vector<128x128xf32>
    %211 = arith.addf %205, %210 : vector<128x128xf32>
    %212 = vector.extract_strided_slice %204 {offsets = [0, 1, 0], sizes = [8, 16, 128], strides = [1, 1, 1]} : vector<8x18x128xf32> to vector<8x16x128xf32>
    %213 = vector.shape_cast %212 : vector<8x16x128xf32> to vector<128x128xf32>
    %214 = arith.truncf %213 : vector<128x128xf32> to vector<128x128xbf16>
    %c736 = arith.constant 736 : index
    %c0_59 = arith.constant 0 : index
    %215 = vector.load %arg3[%c736, %c0_59] : memref<1504x128xbf16, #tpu.memory_space<vmem>>, vector<128x128xbf16>
    %cst_60 = arith.constant dense<0.000000e+00> : vector<128x128xf32>
    %216 = tpu.matmul %214, %215, %cst_60 {dimension_numbers = #tpu.dot_dimension_numbers<[1], [0], [0], [1], [0, 0, 1, 1], [], []>} : vector<128x128xbf16>, vector<128x128xbf16>, vector<128x128xf32> -> vector<128x128xf32>
    %217 = arith.addf %211, %216 : vector<128x128xf32>
    %218 = vector.extract_strided_slice %204 {offsets = [0, 2, 0], sizes = [8, 16, 128], strides = [1, 1, 1]} : vector<8x18x128xf32> to vector<8x16x128xf32>
    %219 = vector.shape_cast %218 : vector<8x16x128xf32> to vector<128x128xf32>
    %220 = arith.truncf %219 : vector<128x128xf32> to vector<128x128xbf16>
    %c864 = arith.constant 864 : index
    %c0_61 = arith.constant 0 : index
    %221 = vector.load %arg3[%c864, %c0_61] : memref<1504x128xbf16, #tpu.memory_space<vmem>>, vector<128x128xbf16>
    %cst_62 = arith.constant dense<0.000000e+00> : vector<128x128xf32>
    %222 = tpu.matmul %220, %221, %cst_62 {dimension_numbers = #tpu.dot_dimension_numbers<[1], [0], [0], [1], [0, 0, 1, 1], [], []>} : vector<128x128xbf16>, vector<128x128xbf16>, vector<128x128xf32> -> vector<128x128xf32>
    %223 = arith.addf %217, %222 : vector<128x128xf32>
    %224 = vector.broadcast %201 : vector<1x128xf32> to vector<128x128xf32>
    %225 = arith.mulf %223, %224 : vector<128x128xf32>
    %226 = vector.broadcast %202 : vector<1x128xf32> to vector<128x128xf32>
    %227 = arith.addf %225, %226 : vector<128x128xf32>
    %cst_63 = arith.constant 0.000000e+00 : f32
    %228 = vector.broadcast %cst_63 : f32 to vector<128x128xf32>
    %229 = arith.maximumf %227, %228 : vector<128x128xf32>
    %230 = vector.shape_cast %229 : vector<128x128xf32> to vector<8x16x128xf32>
    %cst_64 = arith.constant dense<0xFF800000> : vector<8x128xf32>
    %231 = vector.multi_reduction <maximumf>, %230, %cst_64 [1] : vector<8x16x128xf32> to vector<8x128xf32>
    %232 = arith.truncf %231 : vector<8x128xf32> to vector<8x128xbf16>
    %c0_65 = arith.constant 0 : index
    %c0_66 = arith.constant 0 : index
    %233 = vector.load %arg4[%c0_65, %c0_66] : memref<384x256xbf16, #tpu.memory_space<vmem>>, vector<128x256xbf16>
    %cst_67 = arith.constant dense<0.000000e+00> : vector<8x256xf32>
    %234 = tpu.matmul %232, %233, %cst_67 {dimension_numbers = #tpu.dot_dimension_numbers<[1], [0], [0], [1], [0, 0, 1, 1], [], []>} : vector<8x128xbf16>, vector<128x256xbf16>, vector<8x256xf32> -> vector<8x256xf32>
    %c0_68 = arith.constant 0 : index
    %c896 = arith.constant 896 : index
    %235 = vector.load %arg8[%c0_68, %c896] : memref<1x1664xf32, #tpu.memory_space<vmem>>, vector<1x256xf32>
    %236 = vector.broadcast %235 : vector<1x256xf32> to vector<8x256xf32>
    %237 = arith.addf %234, %236 : vector<8x256xf32>
    %cst_69 = arith.constant 0.000000e+00 : f32
    %238 = vector.broadcast %cst_69 : f32 to vector<8x256xf32>
    %239 = arith.maximumf %237, %238 : vector<8x256xf32>
    %240 = arith.truncf %239 : vector<8x256xf32> to vector<8x256xbf16>
    %c992 = arith.constant 992 : index
    %c0_70 = arith.constant 0 : index
    %241 = vector.load %arg3[%c992, %c0_70] : memref<1504x128xbf16, #tpu.memory_space<vmem>>, vector<256x128xbf16>
    %cst_71 = arith.constant dense<0.000000e+00> : vector<8x128xf32>
    %242 = tpu.matmul %240, %241, %cst_71 {dimension_numbers = #tpu.dot_dimension_numbers<[1], [0], [0], [1], [0, 0, 1, 1], [], []>} : vector<8x256xbf16>, vector<256x128xbf16>, vector<8x128xf32> -> vector<8x128xf32>
    %c0_72 = arith.constant 0 : index
    %c1152 = arith.constant 1152 : index
    %243 = vector.load %arg8[%c0_72, %c1152] : memref<1x1664xf32, #tpu.memory_space<vmem>>, vector<1x128xf32>
    %244 = vector.broadcast %243 : vector<1x128xf32> to vector<8x128xf32>
    %245 = arith.addf %242, %244 : vector<8x128xf32>
    %cst_73 = arith.constant 0.000000e+00 : f32
    %246 = vector.broadcast %cst_73 : f32 to vector<8x128xf32>
    %247 = arith.maximumf %245, %246 : vector<8x128xf32>
    %248 = arith.truncf %7 : vector<8x128xf32> to vector<8x128xbf16>
    %c128_74 = arith.constant 128 : index
    %c0_75 = arith.constant 0 : index
    %249 = vector.load %arg4[%c128_74, %c0_75] : memref<384x256xbf16, #tpu.memory_space<vmem>>, vector<128x256xbf16>
    %cst_76 = arith.constant dense<0.000000e+00> : vector<8x256xf32>
    %250 = tpu.matmul %248, %249, %cst_76 {dimension_numbers = #tpu.dot_dimension_numbers<[1], [0], [0], [1], [0, 0, 1, 1], [], []>} : vector<8x128xbf16>, vector<128x256xbf16>, vector<8x256xf32> -> vector<8x256xf32>
    %251 = arith.truncf %247 : vector<8x128xf32> to vector<8x128xbf16>
    %c256 = arith.constant 256 : index
    %c0_77 = arith.constant 0 : index
    %252 = vector.load %arg4[%c256, %c0_77] : memref<384x256xbf16, #tpu.memory_space<vmem>>, vector<128x256xbf16>
    %cst_78 = arith.constant dense<0.000000e+00> : vector<8x256xf32>
    %253 = tpu.matmul %251, %252, %cst_78 {dimension_numbers = #tpu.dot_dimension_numbers<[1], [0], [0], [1], [0, 0, 1, 1], [], []>} : vector<8x128xbf16>, vector<128x256xbf16>, vector<8x256xf32> -> vector<8x256xf32>
    %254 = arith.addf %250, %253 : vector<8x256xf32>
    %c0_79 = arith.constant 0 : index
    %c1280 = arith.constant 1280 : index
    %255 = vector.load %arg8[%c0_79, %c1280] : memref<1x1664xf32, #tpu.memory_space<vmem>>, vector<1x256xf32>
    %256 = vector.broadcast %255 : vector<1x256xf32> to vector<8x256xf32>
    %257 = arith.addf %254, %256 : vector<8x256xf32>
    %cst_80 = arith.constant 0.000000e+00 : f32
    %258 = vector.broadcast %cst_80 : f32 to vector<8x256xf32>
    %259 = arith.maximumf %257, %258 : vector<8x256xf32>
    %260 = arith.truncf %259 : vector<8x256xf32> to vector<8x256xbf16>
    %c1248 = arith.constant 1248 : index
    %c0_81 = arith.constant 0 : index
    %261 = vector.load %arg3[%c1248, %c0_81] : memref<1504x128xbf16, #tpu.memory_space<vmem>>, vector<256x128xbf16>
    %cst_82 = arith.constant dense<0.000000e+00> : vector<8x128xf32>
    %262 = tpu.matmul %260, %261, %cst_82 {dimension_numbers = #tpu.dot_dimension_numbers<[1], [0], [0], [1], [0, 0, 1, 1], [], []>} : vector<8x256xbf16>, vector<256x128xbf16>, vector<8x128xf32> -> vector<8x128xf32>
    %c0_83 = arith.constant 0 : index
    %c1536 = arith.constant 1536 : index
    %263 = vector.load %arg8[%c0_83, %c1536] : memref<1x1664xf32, #tpu.memory_space<vmem>>, vector<1x128xf32>
    %264 = vector.broadcast %263 : vector<1x128xf32> to vector<8x128xf32>
    %265 = arith.addf %262, %264 : vector<8x128xf32>
    %c0_84 = arith.constant 0 : index
    %c0_85 = arith.constant 0 : index
    %266 = vector.load %arg10[%c0_84, %c0_85] : memref<8x128xf32, #tpu.memory_space<vmem>>, vector<8x128xf32>
    tpu.vector_store %arg10[%c0_84, %c0_85], %265 {strides = array<i32>} : memref<8x128xf32, #tpu.memory_space<vmem>>, vector<8x128xf32>,
    return
  }
  func.func @transform_0(%arg0: i32) -> (i32, i32) {
    %c0_i32 = arith.constant 0 : i32
    %c0_i32_0 = arith.constant 0 : i32
    return %arg0, %c0_i32 : i32, i32
  }
  func.func @transform_1(%arg0: i32) -> (i32, i32) {
    %c0_i32 = arith.constant 0 : i32
    %c0_i32_0 = arith.constant 0 : i32
    return %arg0, %c0_i32 : i32, i32
  }
  func.func @transform_2(%arg0: i32) -> (i32, i32) {
    %c0_i32 = arith.constant 0 : i32
    %c0_i32_0 = arith.constant 0 : i32
    %c0_i32_1 = arith.constant 0 : i32
    return %c0_i32, %c0_i32_0 : i32, i32
  }
  func.func @transform_3(%arg0: i32) -> (i32, i32) {
    %c0_i32 = arith.constant 0 : i32
    %c0_i32_0 = arith.constant 0 : i32
    %c0_i32_1 = arith.constant 0 : i32
    return %c0_i32, %c0_i32_0 : i32, i32
  }
  func.func @transform_4(%arg0: i32) -> (i32, i32) {
    %c0_i32 = arith.constant 0 : i32
    %c0_i32_0 = arith.constant 0 : i32
    %c0_i32_1 = arith.constant 0 : i32
    return %c0_i32, %c0_i32_0 : i32, i32
  }
  func.func @transform_5(%arg0: i32) -> (i32, i32) {
    %c0_i32 = arith.constant 0 : i32
    %c0_i32_0 = arith.constant 0 : i32
    %c0_i32_1 = arith.constant 0 : i32
    return %c0_i32, %c0_i32_0 : i32, i32
  }
  func.func @transform_6(%arg0: i32) -> (i32, i32) {
    %c0_i32 = arith.constant 0 : i32
    %c0_i32_0 = arith.constant 0 : i32
    %c0_i32_1 = arith.constant 0 : i32
    return %c0_i32, %c0_i32_0 : i32, i32
  }
  func.func @transform_7(%arg0: i32) -> (i32, i32) {
    %c0_i32 = arith.constant 0 : i32
    %c0_i32_0 = arith.constant 0 : i32
    %c0_i32_1 = arith.constant 0 : i32
    return %c0_i32, %c0_i32_0 : i32, i32
  }
  func.func @transform_8(%arg0: i32) -> i32 {
    %c0_i32 = arith.constant 0 : i32
    %c0_i32_0 = arith.constant 0 : i32
    return %c0_i32 : i32
  }
  func.func @transform_9(%arg0: i32) -> (i32, i32) {
    %c0_i32 = arith.constant 0 : i32
    %c0_i32_0 = arith.constant 0 : i32
    return %arg0, %c0_i32 : i32, i32
  }
}

</mosaic_0001>

<llo_original>
// kernel: squeeze.7
$region0: #{squeeze.7}
  %s0 = inlined_call_operand.vmem [shape: f32[1,2,7], index: 0, kind: input, shape index: {}]
  %s1 = inlined_call_operand.vmem [shape: f32[14], index: 1, kind: output, shape index: {}]
  $region1: #{squeeze.7} parent=0
    #allocation0 [shape = 'u8[4096]{0}', space=vmem, size = 0x1000, scoped, tag = 'scoped mem for output reshape']
    #allocation1 [shape = 'u8[4096]{0}', space=vmem, size = 0x1000, scoped, tag = 'scoped mem for input reshape']
    %s3 = ssub.s32 4, 1
    %v4 = vld [vmem:[%s0] sm:%s3]
    %5 = vst [vmem:[#allocation1] sm:%s3] %v4
    %v6 = vld [vmem:[#allocation1] sm:$0x1]
    %vm7 = vcmask 56320
    %8 = vst.msk [vmem:[#allocation0] sm:$0x1] %vm7, %v6
    %s9 = scalar_lea.vmem [#allocation1], 1
    %v10 = vld [vmem:[%s9] sm:$0x1]
    %11 = vrot.lane.b32.xlu0 %v10, 7
    %v12 = vpop.permute.xlu0 %11
    %vm13 = vcmask 113720
    %14 = vst.msk [vmem:[#allocation0] sm:$0x1] %vm13, %v12
    %s16 = ssub.s32 2, 1
    %v17 = vld [vmem:[#allocation0] sm:%s16]
    %s19 = ssub.s32 2, 1
    %20 = vst [vmem:[%s1] sm:%s19] %v17

// kernel: multimodal_classifier.1
$region0: #{multimodal_classifier.1}
  #allocation0 [shape = 'u32[]', space=smem, size = 0x4, offset = 0x4, fixed_abs, tag = 'smem constant byte address 0x4 - core index']
  #allocation1 [shape = 'u32[72,128]{1,0:T(1,128)}', space=vmem, size = 0x9000, scoped, tag = 'internal scratch']
  %s0 = inlined_call_operand.vmem [shape: f32[8,32], index: 0, kind: input, shape index: {}]
  %s1 = inlined_call_operand.vmem [shape: f32[8,16], index: 1, kind: input, shape index: {}]
  %s2 = inlined_call_operand.vmem [shape: bf16[1504,128], index: 2, kind: input, shape index: {}]
  %s3 = inlined_call_operand.vmem [shape: bf16[384,256], index: 3, kind: input, shape index: {}]
  %s4 = inlined_call_operand.vmem [shape: f32[8,192], index: 4, kind: input, shape index: {}]
  %s5 = inlined_call_operand.vmem [shape: f32[192,16], index: 5, kind: input, shape index: {}]
  %s6 = inlined_call_operand.vmem [shape: f32[16,192], index: 6, kind: input, shape index: {}]
  %s7 = inlined_call_operand.vmem [shape: f32[1,1664], index: 7, kind: input, shape index: {}]
  %s8 = inlined_call_operand.vmem [shape: f32[14], index: 8, kind: input, shape index: {}]
  %s9 = inlined_call_operand.vmem [shape: f32[8,128], index: 9, kind: output, shape index: {}]
  %s10 = sld [smem:[#allocation0]]
  $region50: #{multimodal_classifier.1} parent=0
    _
  %s12 = ssub.s32 1, %s10
  %s13 = scalar_select 0, %s12, %s10
  $region1: #{multimodal_classifier.1} parent=0
    #allocation2 [shape = 'u8[512]{0}', space=smem, size = 0x200, scoped, tag = 'input window, operand 8, single buffered']
    #allocation3 [shape = 's32[1]{0}', space=sflag, size = 0x4, scoped, tag = 'scoped memory for multimodal_classifier.1']
    %14 = vsyncpa [#allocation3], 0
    // Predicated region
    $region2: #{multimodal_classifier.1} parent=1 // pred_check
      _
    $region3: #{multimodal_classifier.1} parent=1 // pred_check_branch
      %16 = sbr.rel (0) target = $region5
    $region4: #{multimodal_classifier.1} parent=1 // pred_region
      _
    $region5: #{multimodal_classifier.1} parent=1 // pred_fallthru
      _
    // Predicated region
    $region6: #{multimodal_classifier.1} parent=1 // pred_check
      _
    $region7: #{multimodal_classifier.1} parent=1 // pred_check_branch
      %18 = sbr.rel (0) target = $region9
    $region8: #{multimodal_classifier.1} parent=1 // pred_region
      _
    $region9: #{multimodal_classifier.1} parent=1 // pred_fallthru
      _
    // Predicated region
    $region10: #{multimodal_classifier.1} parent=1 // pred_check
      _
    $region11: #{multimodal_classifier.1} parent=1 // pred_check_branch
      %20 = sbr.rel (0) target = $region13
    $region12: #{multimodal_classifier.1} parent=1 // pred_region
      _
    $region13: #{multimodal_classifier.1} parent=1 // pred_fallthru
      _
    // Predicated region
    $region14: #{multimodal_classifier.1} parent=1 // pred_check
      _
    $region15: #{multimodal_classifier.1} parent=1 // pred_check_branch
      %22 = sbr.rel (0) target = $region17
    $region16: #{multimodal_classifier.1} parent=1 // pred_region
      _
    $region17: #{multimodal_classifier.1} parent=1 // pred_fallthru
      _
    // Predicated region
    $region18: #{multimodal_classifier.1} parent=1 // pred_check
      _
    $region19: #{multimodal_classifier.1} parent=1 // pred_check_branch
      %24 = sbr.rel (0) target = $region21
    $region20: #{multimodal_classifier.1} parent=1 // pred_region
      _
    $region21: #{multimodal_classifier.1} parent=1 // pred_fallthru
      _
    // Predicated region
    $region22: #{multimodal_classifier.1} parent=1 // pred_check
      _
    $region23: #{multimodal_classifier.1} parent=1 // pred_check_branch
      %26 = sbr.rel (0) target = $region25
    $region24: #{multimodal_classifier.1} parent=1 // pred_region
      _
    $region25: #{multimodal_classifier.1} parent=1 // pred_fallthru
      _
    // Predicated region
    $region26: #{multimodal_classifier.1} parent=1 // pred_check
      _
    $region27: #{multimodal_classifier.1} parent=1 // pred_check_branch
      %28 = sbr.rel (0) target = $region29
    $region28: #{multimodal_classifier.1} parent=1 // pred_region
      _
    $region29: #{multimodal_classifier.1} parent=1 // pred_fallthru
      _
    // Predicated region
    $region30: #{multimodal_classifier.1} parent=1 // pred_check
      _
    $region31: #{multimodal_classifier.1} parent=1 // pred_check_branch
      %30 = sbr.rel (0) target = $region33
    $region32: #{multimodal_classifier.1} parent=1 // pred_region
      _
    $region33: #{multimodal_classifier.1} parent=1 // pred_fallthru
      _
    // Predicated region
    $region34: #{multimodal_classifier.1} parent=1 // pred_check
      _
    $region35: #{multimodal_classifier.1} parent=1 // pred_check_branch
      %32 = sbr.rel (0) target = $region37
    $region36: #{multimodal_classifier.1} parent=1 // pred_region
      %34 = vsyncadd [#allocation3], 0
      %s36 = sshll.u32 %s8, 4
      %s37 = int_to_ptr.vmem [resolvable:$true] %s36
      %39 = dma.vmem_to_smem %s37, 16, [#allocation2], [#allocation3]
    $region37: #{multimodal_classifier.1} parent=1 // pred_fallthru
      _
    // Predicated region
    $region38: #{multimodal_classifier.1} parent=1 // pred_check
      _
    $region39: #{multimodal_classifier.1} parent=1 // pred_check_branch
      %41 = sbr.rel (0) target = $region41
    $region40: #{multimodal_classifier.1} parent=1 // pred_region
      %43 = dma.done [#allocation3], 16
    $region41: #{multimodal_classifier.1} parent=1 // pred_fallthru
      _
    %44 = sfence
    %v46 = vld [vmem:[%s0] sm:$0xff]
    %v47 = vld [vmem:[%s1] sm:$0xff]
    %v48 = vpack.c.bf16 %v46, %v46
    %v49 = vld [vmem:[%s2] sm:$0xf]
    %v50 = vld [vmem:[%s2 + $0x4] sm:$0xf]
    %v51 = vld [vmem:[%s2 + $0x8] sm:$0xf]
    %v52 = vld [vmem:[%s2 + $0xc] sm:$0xf]
    %v53 = vld [vmem:[%s7] sm:$0x1]
    %v55 = vperm.slane %v53, 0
    %v61 = vunpack.c.l.b16 %v49
    %v62 = vunpack.c.l.b16 %v50
    %v63 = vunpack.c.l.b16 %v51
    %v64 = vunpack.c.l.b16 %v52
    %v65 = vpack.c.b16 %v62, %v61
    %v66 = vpack.c.b16 %v64, %v63
    %vm69 = vcmask 261120
    %v71 = vsel %vm69, %v48, 0
    %73 = vmatpush.bf16.msra.mxu0 0
    %74 = vmatpush.bf16.msra.mxu0 0
    %75 = vmatpush.bf16.msra.mxu0 0
    %76 = vmatpush.bf16.msra.mxu0 0
    %77 = vmatpush.bf16.msra.mxu0 0
    %78 = vmatpush.bf16.msra.mxu0 0
    %79 = vmatpush.bf16.msra.mxu0 %v66
    %80 = vmatpush.bf16.msra.mxu0 %v65
    %81 = vmatmul.bf16.gmra.mxu0 %v71
    %v82 = vpop.f32.mrf.mxu0
    %v83 = vadd.f32 %v55, %v82
    %v84 = vpop.f32.mrf.mxu0
    %85 = vdwg.mxu0
    %87 = vrot.lane.b32.xlu0 %v47, 3
    %v88 = vpop.permute.xlu0 %87
    %vm90 = vcmask 23552
    %v91 = vsel %vm90, 0.0, %v88
    %vm92 = vcmask 154624
    %v93 = vsel %vm92, %v91, 0.0
    %v94 = vperm.slane %v93, 0
    %v95 = vlaneseq
    %v96 = vshrl.u32 %v95, 7
    %98 = vset.pattern.permute.xlu0 %v96
    %99 = vperm.xlu0 %98, %v94
    %v100 = vpop.permute.xlu0 %99
    %v101 = vlaneseq
    %v102 = vshrl.u32 %v101, 7
    %v103 = vadd.s32 %v102, 8
    %104 = vset.pattern.permute.xlu0 %v103
    %105 = vperm.xlu0 %104, %v94
    %v106 = vpop.permute.xlu0 %105
    %v107 = vlaneseq
    %v108 = vshrl.u32 %v107, 7
    %v109 = vadd.s32 %v108, 16
    %110 = vset.pattern.permute.xlu0 %v109
    %111 = vperm.xlu0 %110, %v94
    %v112 = vpop.permute.xlu0 %111
    %v113 = vperm.slane %v93, 1
    %v114 = vlaneseq
    %v115 = vshrl.u32 %v114, 7
    %117 = vset.pattern.permute.xlu0 %v115
    %118 = vperm.xlu0 %117, %v113
    %v119 = vpop.permute.xlu0 %118
    %v120 = vlaneseq
    %v121 = vshrl.u32 %v120, 7
    %v122 = vadd.s32 %v121, 8
    %123 = vset.pattern.permute.xlu0 %v122
    %124 = vperm.xlu0 %123, %v113
    %v125 = vpop.permute.xlu0 %124
    %v126 = vlaneseq
    %v127 = vshrl.u32 %v126, 7
    %v128 = vadd.s32 %v127, 16
    %129 = vset.pattern.permute.xlu0 %v128
    %130 = vperm.xlu0 %129, %v113
    %v131 = vpop.permute.xlu0 %130
    %v132 = vperm.slane %v93, 2
    %v133 = vlaneseq
    %v134 = vshrl.u32 %v133, 7
    %136 = vset.pattern.permute.xlu0 %v134
    %137 = vperm.xlu0 %136, %v132
    %v138 = vpop.permute.xlu0 %137
    %v139 = vlaneseq
    %v140 = vshrl.u32 %v139, 7
    %v141 = vadd.s32 %v140, 8
    %142 = vset.pattern.permute.xlu0 %v141
    %143 = vperm.xlu0 %142, %v132
    %v144 = vpop.permute.xlu0 %143
    %v145 = vlaneseq
    %v146 = vshrl.u32 %v145, 7
    %v147 = vadd.s32 %v146, 16
    %148 = vset.pattern.permute.xlu0 %v147
    %149 = vperm.xlu0 %148, %v132
    %v150 = vpop.permute.xlu0 %149
    %v151 = vperm.slane %v93, 3
    %v152 = vlaneseq
    %v153 = vshrl.u32 %v152, 7
    %155 = vset.pattern.permute.xlu0 %v153
    %156 = vperm.xlu0 %155, %v151
    %v157 = vpop.permute.xlu0 %156
    %v158 = vlaneseq
    %v159 = vshrl.u32 %v158, 7
    %v160 = vadd.s32 %v159, 8
    %161 = vset.pattern.permute.xlu0 %v160
    %162 = vperm.xlu0 %161, %v151
    %v163 = vpop.permute.xlu0 %162
    %v164 = vlaneseq
    %v165 = vshrl.u32 %v164, 7
    %v166 = vadd.s32 %v165, 16
    %167 = vset.pattern.permute.xlu0 %v166
    %168 = vperm.xlu0 %167, %v151
    %v169 = vpop.permute.xlu0 %168
    %v170 = vperm.slane %v93, 4
    %v171 = vlaneseq
    %v172 = vshrl.u32 %v171, 7
    %174 = vset.pattern.permute.xlu0 %v172
    %175 = vperm.xlu0 %174, %v170
    %v176 = vpop.permute.xlu0 %175
    %v177 = vlaneseq
    %v178 = vshrl.u32 %v177, 7
    %v179 = vadd.s32 %v178, 8
    %180 = vset.pattern.permute.xlu0 %v179
    %181 = vperm.xlu0 %180, %v170
    %v182 = vpop.permute.xlu0 %181
    %v183 = vlaneseq
    %v184 = vshrl.u32 %v183, 7
    %v185 = vadd.s32 %v184, 16
    %186 = vset.pattern.permute.xlu0 %v185
    %187 = vperm.xlu0 %186, %v170
    %v188 = vpop.permute.xlu0 %187
    %v189 = vperm.slane %v93, 5
    %v190 = vlaneseq
    %v191 = vshrl.u32 %v190, 7
    %193 = vset.pattern.permute.xlu0 %v191
    %194 = vperm.xlu0 %193, %v189
    %v195 = vpop.permute.xlu0 %194
    %v196 = vlaneseq
    %v197 = vshrl.u32 %v196, 7
    %v198 = vadd.s32 %v197, 8
    %199 = vset.pattern.permute.xlu0 %v198
    %200 = vperm.xlu0 %199, %v189
    %v201 = vpop.permute.xlu0 %200
    %v202 = vlaneseq
    %v203 = vshrl.u32 %v202, 7
    %v204 = vadd.s32 %v203, 16
    %205 = vset.pattern.permute.xlu0 %v204
    %206 = vperm.xlu0 %205, %v189
    %v207 = vpop.permute.xlu0 %206
    %v208 = vperm.slane %v93, 6
    %v209 = vlaneseq
    %v210 = vshrl.u32 %v209, 7
    %212 = vset.pattern.permute.xlu0 %v210
    %213 = vperm.xlu0 %212, %v208
    %v214 = vpop.permute.xlu0 %213
    %v215 = vlaneseq
    %v216 = vshrl.u32 %v215, 7
    %v217 = vadd.s32 %v216, 8
    %218 = vset.pattern.permute.xlu0 %v217
    %219 = vperm.xlu0 %218, %v208
    %v220 = vpop.permute.xlu0 %219
    %v221 = vlaneseq
    %v222 = vshrl.u32 %v221, 7
    %v223 = vadd.s32 %v222, 16
    %224 = vset.pattern.permute.xlu0 %v223
    %225 = vperm.xlu0 %224, %v208
    %v226 = vpop.permute.xlu0 %225
    %v227 = vperm.slane %v93, 7
    %v228 = vlaneseq
    %v229 = vshrl.u32 %v228, 7
    %231 = vset.pattern.permute.xlu0 %v229
    %232 = vperm.xlu0 %231, %v227
    %v233 = vpop.permute.xlu0 %232
    %v234 = vlaneseq
    %v235 = vshrl.u32 %v234, 7
    %v236 = vadd.s32 %v235, 8
    %237 = vset.pattern.permute.xlu0 %v236
    %238 = vperm.xlu0 %237, %v227
    %v239 = vpop.permute.xlu0 %238
    %v240 = vlaneseq
    %v241 = vshrl.u32 %v240, 7
    %v242 = vadd.s32 %v241, 16
    %243 = vset.pattern.permute.xlu0 %v242
    %244 = vperm.xlu0 %243, %v227
    %v245 = vpop.permute.xlu0 %244
    %v246 = vld [vmem:[%s4] ss:$8 sm:$0x3]
    %v248 = vperm.slane %v246, 0
    %v249 = vperm.slane %v246, 1
    %v252 = vmul.f32 %v100, %v248
    %v253 = vmul.f32 %v100, %v249
    %v254 = vmul.f32 %v106, %v248
    %v255 = vmul.f32 %v106, %v249
    %v256 = vmul.f32 %v119, %v248
    %v257 = vmul.f32 %v119, %v249
    %v258 = vmul.f32 %v125, %v248
    %v259 = vmul.f32 %v125, %v249
    %v260 = vmul.f32 %v138, %v248
    %v261 = vmul.f32 %v138, %v249
    %v262 = vmul.f32 %v144, %v248
    %v263 = vmul.f32 %v144, %v249
    %v264 = vmul.f32 %v157, %v248
    %v265 = vmul.f32 %v157, %v249
    %v266 = vmul.f32 %v163, %v248
    %v267 = vmul.f32 %v163, %v249
    %v268 = vmul.f32 %v176, %v248
    %v269 = vmul.f32 %v176, %v249
    %v270 = vmul.f32 %v182, %v248
    %v271 = vmul.f32 %v182, %v249
    %v272 = vmul.f32 %v195, %v248
    %v273 = vmul.f32 %v195, %v249
    %v274 = vmul.f32 %v201, %v248
    %v275 = vmul.f32 %v201, %v249
    %v276 = vmul.f32 %v214, %v248
    %v277 = vmul.f32 %v214, %v249
    %v278 = vmul.f32 %v220, %v248
    %v279 = vmul.f32 %v220, %v249
    %v280 = vmul.f32 %v233, %v248
    %v281 = vmul.f32 %v233, %v249
    %v282 = vmul.f32 %v239, %v248
    %v283 = vmul.f32 %v239, %v249
    %v284 = vadd.f32 %v252, 0.0
    %v285 = vadd.f32 %v253, 0.0
    %v286 = vadd.f32 %v254, 0.0
    %v287 = vadd.f32 %v255, 0.0
    %v288 = vadd.f32 %v256, 0.0
    %v289 = vadd.f32 %v257, 0.0
    %v290 = vadd.f32 %v258, 0.0
    %v291 = vadd.f32 %v259, 0.0
    %v292 = vadd.f32 %v260, 0.0
    %v293 = vadd.f32 %v261, 0.0
    %v294 = vadd.f32 %v262, 0.0
    %v295 = vadd.f32 %v263, 0.0
    %v296 = vadd.f32 %v264, 0.0
    %v297 = vadd.f32 %v265, 0.0
    %v298 = vadd.f32 %v266, 0.0
    %v299 = vadd.f32 %v267, 0.0
    %v300 = vadd.f32 %v268, 0.0
    %v301 = vadd.f32 %v269, 0.0
    %v302 = vadd.f32 %v270, 0.0
    %v303 = vadd.f32 %v271, 0.0
    %v304 = vadd.f32 %v272, 0.0
    %v305 = vadd.f32 %v273, 0.0
    %v306 = vadd.f32 %v274, 0.0
    %v307 = vadd.f32 %v275, 0.0
    %v308 = vadd.f32 %v276, 0.0
    %v309 = vadd.f32 %v277, 0.0
    %v310 = vadd.f32 %v278, 0.0
    %v311 = vadd.f32 %v279, 0.0
    %v312 = vadd.f32 %v280, 0.0
    %v313 = vadd.f32 %v281, 0.0
    %v314 = vadd.f32 %v282, 0.0
    %v315 = vadd.f32 %v283, 0.0
    %s316 = scalar_lea.vmem %s4, 1
    %v317 = vld [vmem:[%s316] ss:$8 sm:$0x3]
    %v319 = vperm.slane %v317, 0
    %v320 = vperm.slane %v317, 1
    %v323 = vmul.f32 %v100, %v319
    %v324 = vmul.f32 %v100, %v320
    %v325 = vmul.f32 %v106, %v319
    %v326 = vmul.f32 %v106, %v320
    %v327 = vmul.f32 %v112, %v319
    %v328 = vmul.f32 %v112, %v320
    %v329 = vmul.f32 %v119, %v319
    %v330 = vmul.f32 %v119, %v320
    %v331 = vmul.f32 %v125, %v319
    %v332 = vmul.f32 %v125, %v320
    %v333 = vmul.f32 %v131, %v319
    %v334 = vmul.f32 %v131, %v320
    %v335 = vmul.f32 %v138, %v319
    %v336 = vmul.f32 %v138, %v320
    %v337 = vmul.f32 %v144, %v319
    %v338 = vmul.f32 %v144, %v320
    %v339 = vmul.f32 %v150, %v319
    %v340 = vmul.f32 %v150, %v320
    %v341 = vmul.f32 %v157, %v319
    %v342 = vmul.f32 %v157, %v320
    %v343 = vmul.f32 %v163, %v319
    %v344 = vmul.f32 %v163, %v320
    %v345 = vmul.f32 %v169, %v319
    %v346 = vmul.f32 %v169, %v320
    %v347 = vmul.f32 %v176, %v319
    %v348 = vmul.f32 %v176, %v320
    %v349 = vmul.f32 %v182, %v319
    %v350 = vmul.f32 %v182, %v320
    %v351 = vmul.f32 %v188, %v319
    %v352 = vmul.f32 %v188, %v320
    %v353 = vmul.f32 %v195, %v319
    %v354 = vmul.f32 %v195, %v320
    %v355 = vmul.f32 %v201, %v319
    %v356 = vmul.f32 %v201, %v320
    %v357 = vmul.f32 %v207, %v319
    %v358 = vmul.f32 %v207, %v320
    %v359 = vmul.f32 %v214, %v319
    %v360 = vmul.f32 %v214, %v320
    %v361 = vmul.f32 %v220, %v319
    %v362 = vmul.f32 %v220, %v320
    %v363 = vmul.f32 %v226, %v319
    %v364 = vmul.f32 %v226, %v320
    %v365 = vmul.f32 %v233, %v319
    %v366 = vmul.f32 %v233, %v320
    %v367 = vmul.f32 %v239, %v319
    %v368 = vmul.f32 %v239, %v320
    %v369 = vmul.f32 %v245, %v319
    %v370 = vmul.f32 %v245, %v320
    %vm419 = vcmask 1046528
    %v420 = vrot.slane %v323, 1
    %v421 = vrot.slane %v325, 1
    %v422 = vsel %vm419, %v420, %v421
    %v423 = vrot.slane %v324, 1
    %v424 = vrot.slane %v326, 1
    %v425 = vsel %vm419, %v423, %v424
    %v426 = vrot.slane %v327, 1
    %v427 = vsel %vm419, %v421, %v426
    %v428 = vrot.slane %v328, 1
    %v429 = vsel %vm419, %v424, %v428
    %v430 = vrot.slane %v329, 1
    %v431 = vrot.slane %v331, 1
    %v432 = vsel %vm419, %v430, %v431
    %v433 = vrot.slane %v330, 1
    %v434 = vrot.slane %v332, 1
    %v435 = vsel %vm419, %v433, %v434
    %v436 = vrot.slane %v333, 1
    %v437 = vsel %vm419, %v431, %v436
    %v438 = vrot.slane %v334, 1
    %v439 = vsel %vm419, %v434, %v438
    %v440 = vrot.slane %v335, 1
    %v441 = vrot.slane %v337, 1
    %v442 = vsel %vm419, %v440, %v441
    %v443 = vrot.slane %v336, 1
    %v444 = vrot.slane %v338, 1
    %v445 = vsel %vm419, %v443, %v444
    %v446 = vrot.slane %v339, 1
    %v447 = vsel %vm419, %v441, %v446
    %v448 = vrot.slane %v340, 1
    %v449 = vsel %vm419, %v444, %v448
    %v450 = vrot.slane %v341, 1
    %v451 = vrot.slane %v343, 1
    %v452 = vsel %vm419, %v450, %v451
    %v453 = vrot.slane %v342, 1
    %v454 = vrot.slane %v344, 1
    %v455 = vsel %vm419, %v453, %v454
    %v456 = vrot.slane %v345, 1
    %v457 = vsel %vm419, %v451, %v456
    %v458 = vrot.slane %v346, 1
    %v459 = vsel %vm419, %v454, %v458
    %v460 = vrot.slane %v347, 1
    %v461 = vrot.slane %v349, 1
    %v462 = vsel %vm419, %v460, %v461
    %v463 = vrot.slane %v348, 1
    %v464 = vrot.slane %v350, 1
    %v465 = vsel %vm419, %v463, %v464
    %v466 = vrot.slane %v351, 1
    %v467 = vsel %vm419, %v461, %v466
    %v468 = vrot.slane %v352, 1
    %v469 = vsel %vm419, %v464, %v468
    %v470 = vrot.slane %v353, 1
    %v471 = vrot.slane %v355, 1
    %v472 = vsel %vm419, %v470, %v471
    %v473 = vrot.slane %v354, 1
    %v474 = vrot.slane %v356, 1
    %v475 = vsel %vm419, %v473, %v474
    %v476 = vrot.slane %v357, 1
    %v477 = vsel %vm419, %v471, %v476
    %v478 = vrot.slane %v358, 1
    %v479 = vsel %vm419, %v474, %v478
    %v480 = vrot.slane %v359, 1
    %v481 = vrot.slane %v361, 1
    %v482 = vsel %vm419, %v480, %v481
    %v483 = vrot.slane %v360, 1
    %v484 = vrot.slane %v362, 1
    %v485 = vsel %vm419, %v483, %v484
    %v486 = vrot.slane %v363, 1
    %v487 = vsel %vm419, %v481, %v486
    %v488 = vrot.slane %v364, 1
    %v489 = vsel %vm419, %v484, %v488
    %v490 = vrot.slane %v365, 1
    %v491 = vrot.slane %v367, 1
    %v492 = vsel %vm419, %v490, %v491
    %v493 = vrot.slane %v366, 1
    %v494 = vrot.slane %v368, 1
    %v495 = vsel %vm419, %v493, %v494
    %v496 = vrot.slane %v369, 1
    %v497 = vsel %vm419, %v491, %v496
    %v498 = vrot.slane %v370, 1
    %v499 = vsel %vm419, %v494, %v498
    %v532 = vadd.f32 %v284, %v422
    %v533 = vadd.f32 %v285, %v425
    %v534 = vadd.f32 %v286, %v427
    %v535 = vadd.f32 %v287, %v429
    %v536 = vadd.f32 %v288, %v432
    %v537 = vadd.f32 %v289, %v435
    %v538 = vadd.f32 %v290, %v437
    %v539 = vadd.f32 %v291, %v439
    %v540 = vadd.f32 %v292, %v442
    %v541 = vadd.f32 %v293, %v445
    %v542 = vadd.f32 %v294, %v447
    %v543 = vadd.f32 %v295, %v449
    %v544 = vadd.f32 %v296, %v452
    %v545 = vadd.f32 %v297, %v455
    %v546 = vadd.f32 %v298, %v457
    %v547 = vadd.f32 %v299, %v459
    %v548 = vadd.f32 %v300, %v462
    %v549 = vadd.f32 %v301, %v465
    %v550 = vadd.f32 %v302, %v467
    %v551 = vadd.f32 %v303, %v469
    %v552 = vadd.f32 %v304, %v472
    %v553 = vadd.f32 %v305, %v475
    %v554 = vadd.f32 %v306, %v477
    %v555 = vadd.f32 %v307, %v479
    %v556 = vadd.f32 %v308, %v482
    %v557 = vadd.f32 %v309, %v485
    %v558 = vadd.f32 %v310, %v487
    %v559 = vadd.f32 %v311, %v489
    %v560 = vadd.f32 %v312, %v492
    %v561 = vadd.f32 %v313, %v495
    %v562 = vadd.f32 %v314, %v497
    %v563 = vadd.f32 %v315, %v499
    %s564 = scalar_lea.vmem %s4, 2
    %v565 = vld [vmem:[%s564] ss:$8 sm:$0x3]
    %v567 = vperm.slane %v565, 0
    %v568 = vperm.slane %v565, 1
    %v571 = vmul.f32 %v100, %v567
    %v572 = vmul.f32 %v100, %v568
    %v573 = vmul.f32 %v106, %v567
    %v574 = vmul.f32 %v106, %v568
    %v575 = vmul.f32 %v112, %v567
    %v576 = vmul.f32 %v112, %v568
    %v577 = vmul.f32 %v119, %v567
    %v578 = vmul.f32 %v119, %v568
    %v579 = vmul.f32 %v125, %v567
    %v580 = vmul.f32 %v125, %v568
    %v581 = vmul.f32 %v131, %v567
    %v582 = vmul.f32 %v131, %v568
    %v583 = vmul.f32 %v138, %v567
    %v584 = vmul.f32 %v138, %v568
    %v585 = vmul.f32 %v144, %v567
    %v586 = vmul.f32 %v144, %v568
    %v587 = vmul.f32 %v150, %v567
    %v588 = vmul.f32 %v150, %v568
    %v589 = vmul.f32 %v157, %v567
    %v590 = vmul.f32 %v157, %v568
    %v591 = vmul.f32 %v163, %v567
    %v592 = vmul.f32 %v163, %v568
    %v593 = vmul.f32 %v169, %v567
    %v594 = vmul.f32 %v169, %v568
    %v595 = vmul.f32 %v176, %v567
    %v596 = vmul.f32 %v176, %v568
    %v597 = vmul.f32 %v182, %v567
    %v598 = vmul.f32 %v182, %v568
    %v599 = vmul.f32 %v188, %v567
    %v600 = vmul.f32 %v188, %v568
    %v601 = vmul.f32 %v195, %v567
    %v602 = vmul.f32 %v195, %v568
    %v603 = vmul.f32 %v201, %v567
    %v604 = vmul.f32 %v201, %v568
    %v605 = vmul.f32 %v207, %v567
    %v606 = vmul.f32 %v207, %v568
    %v607 = vmul.f32 %v214, %v567
    %v608 = vmul.f32 %v214, %v568
    %v609 = vmul.f32 %v220, %v567
    %v610 = vmul.f32 %v220, %v568
    %v611 = vmul.f32 %v226, %v567
    %v612 = vmul.f32 %v226, %v568
    %v613 = vmul.f32 %v233, %v567
    %v614 = vmul.f32 %v233, %v568
    %v615 = vmul.f32 %v239, %v567
    %v616 = vmul.f32 %v239, %v568
    %v617 = vmul.f32 %v245, %v567
    %v618 = vmul.f32 %v245, %v568
    %vm667 = vcmask 1045504
    %v668 = vrot.slane %v571, 2
    %v669 = vrot.slane %v573, 2
    %v670 = vsel %vm667, %v668, %v669
    %v671 = vrot.slane %v572, 2
    %v672 = vrot.slane %v574, 2
    %v673 = vsel %vm667, %v671, %v672
    %v674 = vrot.slane %v575, 2
    %v675 = vsel %vm667, %v669, %v674
    %v676 = vrot.slane %v576, 2
    %v677 = vsel %vm667, %v672, %v676
    %v678 = vrot.slane %v577, 2
    %v679 = vrot.slane %v579, 2
    %v680 = vsel %vm667, %v678, %v679
    %v681 = vrot.slane %v578, 2
    %v682 = vrot.slane %v580, 2
    %v683 = vsel %vm667, %v681, %v682
    %v684 = vrot.slane %v581, 2
    %v685 = vsel %vm667, %v679, %v684
    %v686 = vrot.slane %v582, 2
    %v687 = vsel %vm667, %v682, %v686
    %v688 = vrot.slane %v583, 2
    %v689 = vrot.slane %v585, 2
    %v690 = vsel %vm667, %v688, %v689
    %v691 = vrot.slane %v584, 2
    %v692 = vrot.slane %v586, 2
    %v693 = vsel %vm667, %v691, %v692
    %v694 = vrot.slane %v587, 2
    %v695 = vsel %vm667, %v689, %v694
    %v696 = vrot.slane %v588, 2
    %v697 = vsel %vm667, %v692, %v696
    %v698 = vrot.slane %v589, 2
    %v699 = vrot.slane %v591, 2
    %v700 = vsel %vm667, %v698, %v699
    %v701 = vrot.slane %v590, 2
    %v702 = vrot.slane %v592, 2
    %v703 = vsel %vm667, %v701, %v702
    %v704 = vrot.slane %v593, 2
    %v705 = vsel %vm667, %v699, %v704
    %v706 = vrot.slane %v594, 2
    %v707 = vsel %vm667, %v702, %v706
    %v708 = vrot.slane %v595, 2
    %v709 = vrot.slane %v597, 2
    %v710 = vsel %vm667, %v708, %v709
    %v711 = vrot.slane %v596, 2
    %v712 = vrot.slane %v598, 2
    %v713 = vsel %vm667, %v711, %v712
    %v714 = vrot.slane %v599, 2
    %v715 = vsel %vm667, %v709, %v714
    %v716 = vrot.slane %v600, 2
    %v717 = vsel %vm667, %v712, %v716
    %v718 = vrot.slane %v601, 2
    %v719 = vrot.slane %v603, 2
    %v720 = vsel %vm667, %v718, %v719
    %v721 = vrot.slane %v602, 2
    %v722 = vrot.slane %v604, 2
    %v723 = vsel %vm667, %v721, %v722
    %v724 = vrot.slane %v605, 2
    %v725 = vsel %vm667, %v719, %v724
    %v726 = vrot.slane %v606, 2
    %v727 = vsel %vm667, %v722, %v726
    %v728 = vrot.slane %v607, 2
    %v729 = vrot.slane %v609, 2
    %v730 = vsel %vm667, %v728, %v729
    %v731 = vrot.slane %v608, 2
    %v732 = vrot.slane %v610, 2
    %v733 = vsel %vm667, %v731, %v732
    %v734 = vrot.slane %v611, 2
    %v735 = vsel %vm667, %v729, %v734
    %v736 = vrot.slane %v612, 2
    %v737 = vsel %vm667, %v732, %v736
    %v738 = vrot.slane %v613, 2
    %v739 = vrot.slane %v615, 2
    %v740 = vsel %vm667, %v738, %v739
    %v741 = vrot.slane %v614, 2
    %v742 = vrot.slane %v616, 2
    %v743 = vsel %vm667, %v741, %v742
    %v744 = vrot.slane %v617, 2
    %v745 = vsel %vm667, %v739, %v744
    %v746 = vrot.slane %v618, 2
    %v747 = vsel %vm667, %v742, %v746
    %v780 = vadd.f32 %v532, %v670
    %v781 = vadd.f32 %v533, %v673
    %v782 = vadd.f32 %v534, %v675
    %v783 = vadd.f32 %v535, %v677
    %v784 = vadd.f32 %v536, %v680
    %v785 = vadd.f32 %v537, %v683
    %v786 = vadd.f32 %v538, %v685
    %v787 = vadd.f32 %v539, %v687
    %v788 = vadd.f32 %v540, %v690
    %v789 = vadd.f32 %v541, %v693
    %v790 = vadd.f32 %v542, %v695
    %v791 = vadd.f32 %v543, %v697
    %v792 = vadd.f32 %v544, %v700
    %v793 = vadd.f32 %v545, %v703
    %v794 = vadd.f32 %v546, %v705
    %v795 = vadd.f32 %v547, %v707
    %v796 = vadd.f32 %v548, %v710
    %v797 = vadd.f32 %v549, %v713
    %v798 = vadd.f32 %v550, %v715
    %v799 = vadd.f32 %v551, %v717
    %v800 = vadd.f32 %v552, %v720
    %v801 = vadd.f32 %v553, %v723
    %v802 = vadd.f32 %v554, %v725
    %v803 = vadd.f32 %v555, %v727
    %v804 = vadd.f32 %v556, %v730
    %v805 = vadd.f32 %v557, %v733
    %v806 = vadd.f32 %v558, %v735
    %v807 = vadd.f32 %v559, %v737
    %v808 = vadd.f32 %v560, %v740
    %v809 = vadd.f32 %v561, %v743
    %v810 = vadd.f32 %v562, %v745
    %v811 = vadd.f32 %v563, %v747
    %s812 = scalar_lea.vmem %s4, 3
    %v813 = vld [vmem:[%s812] ss:$8 sm:$0x3]
    %v815 = vperm.slane %v813, 0
    %v816 = vperm.slane %v813, 1
    %v819 = vmul.f32 %v100, %v815
    %v820 = vmul.f32 %v100, %v816
    %v821 = vmul.f32 %v106, %v815
    %v822 = vmul.f32 %v106, %v816
    %v823 = vmul.f32 %v112, %v815
    %v824 = vmul.f32 %v112, %v816
    %v825 = vmul.f32 %v119, %v815
    %v826 = vmul.f32 %v119, %v816
    %v827 = vmul.f32 %v125, %v815
    %v828 = vmul.f32 %v125, %v816
    %v829 = vmul.f32 %v131, %v815
    %v830 = vmul.f32 %v131, %v816
    %v831 = vmul.f32 %v138, %v815
    %v832 = vmul.f32 %v138, %v816
    %v833 = vmul.f32 %v144, %v815
    %v834 = vmul.f32 %v144, %v816
    %v835 = vmul.f32 %v150, %v815
    %v836 = vmul.f32 %v150, %v816
    %v837 = vmul.f32 %v157, %v815
    %v838 = vmul.f32 %v157, %v816
    %v839 = vmul.f32 %v163, %v815
    %v840 = vmul.f32 %v163, %v816
    %v841 = vmul.f32 %v169, %v815
    %v842 = vmul.f32 %v169, %v816
    %v843 = vmul.f32 %v176, %v815
    %v844 = vmul.f32 %v176, %v816
    %v845 = vmul.f32 %v182, %v815
    %v846 = vmul.f32 %v182, %v816
    %v847 = vmul.f32 %v188, %v815
    %v848 = vmul.f32 %v188, %v816
    %v849 = vmul.f32 %v195, %v815
    %v850 = vmul.f32 %v195, %v816
    %v851 = vmul.f32 %v201, %v815
    %v852 = vmul.f32 %v201, %v816
    %v853 = vmul.f32 %v207, %v815
    %v854 = vmul.f32 %v207, %v816
    %v855 = vmul.f32 %v214, %v815
    %v856 = vmul.f32 %v214, %v816
    %v857 = vmul.f32 %v220, %v815
    %v858 = vmul.f32 %v220, %v816
    %v859 = vmul.f32 %v226, %v815
    %v860 = vmul.f32 %v226, %v816
    %v861 = vmul.f32 %v233, %v815
    %v862 = vmul.f32 %v233, %v816
    %v863 = vmul.f32 %v239, %v815
    %v864 = vmul.f32 %v239, %v816
    %v865 = vmul.f32 %v245, %v815
    %v866 = vmul.f32 %v245, %v816
    %vm915 = vcmask 1044480
    %v916 = vrot.slane %v819, 3
    %v917 = vrot.slane %v821, 3
    %v918 = vsel %vm915, %v916, %v917
    %v919 = vrot.slane %v820, 3
    %v920 = vrot.slane %v822, 3
    %v921 = vsel %vm915, %v919, %v920
    %v922 = vrot.slane %v823, 3
    %v923 = vsel %vm915, %v917, %v922
    %v924 = vrot.slane %v824, 3
    %v925 = vsel %vm915, %v920, %v924
    %v926 = vrot.slane %v825, 3
    %v927 = vrot.slane %v827, 3
    %v928 = vsel %vm915, %v926, %v927
    %v929 = vrot.slane %v826, 3
    %v930 = vrot.slane %v828, 3
    %v931 = vsel %vm915, %v929, %v930
    %v932 = vrot.slane %v829, 3
    %v933 = vsel %vm915, %v927, %v932
    %v934 = vrot.slane %v830, 3
    %v935 = vsel %vm915, %v930, %v934
    %v936 = vrot.slane %v831, 3
    %v937 = vrot.slane %v833, 3
    %v938 = vsel %vm915, %v936, %v937
    %v939 = vrot.slane %v832, 3
    %v940 = vrot.slane %v834, 3
    %v941 = vsel %vm915, %v939, %v940
    %v942 = vrot.slane %v835, 3
    %v943 = vsel %vm915, %v937, %v942
    %v944 = vrot.slane %v836, 3
    %v945 = vsel %vm915, %v940, %v944
    %v946 = vrot.slane %v837, 3
    %v947 = vrot.slane %v839, 3
    %v948 = vsel %vm915, %v946, %v947
    %v949 = vrot.slane %v838, 3
    %v950 = vrot.slane %v840, 3
    %v951 = vsel %vm915, %v949, %v950
    %v952 = vrot.slane %v841, 3
    %v953 = vsel %vm915, %v947, %v952
    %v954 = vrot.slane %v842, 3
    %v955 = vsel %vm915, %v950, %v954
    %v956 = vrot.slane %v843, 3
    %v957 = vrot.slane %v845, 3
    %v958 = vsel %vm915, %v956, %v957
    %v959 = vrot.slane %v844, 3
    %v960 = vrot.slane %v846, 3
    %v961 = vsel %vm915, %v959, %v960
    %v962 = vrot.slane %v847, 3
    %v963 = vsel %vm915, %v957, %v962
    %v964 = vrot.slane %v848, 3
    %v965 = vsel %vm915, %v960, %v964
    %v966 = vrot.slane %v849, 3
    %v967 = vrot.slane %v851, 3
    %v968 = vsel %vm915, %v966, %v967
    %v969 = vrot.slane %v850, 3
    %v970 = vrot.slane %v852, 3
    %v971 = vsel %vm915, %v969, %v970
    %v972 = vrot.slane %v853, 3
    %v973 = vsel %vm915, %v967, %v972
    %v974 = vrot.slane %v854, 3
    %v975 = vsel %vm915, %v970, %v974
    %v976 = vrot.slane %v855, 3
    %v977 = vrot.slane %v857, 3
    %v978 = vsel %vm915, %v976, %v977
    %v979 = vrot.slane %v856, 3
    %v980 = vrot.slane %v858, 3
    %v981 = vsel %vm915, %v979, %v980
    %v982 = vrot.slane %v859, 3
    %v983 = vsel %vm915, %v977, %v982
    %v984 = vrot.slane %v860, 3
    %v985 = vsel %vm915, %v980, %v984
    %v986 = vrot.slane %v861, 3
    %v987 = vrot.slane %v863, 3
    %v988 = vsel %vm915, %v986, %v987
    %v989 = vrot.slane %v862, 3
    %v990 = vrot.slane %v864, 3
    %v991 = vsel %vm915, %v989, %v990
    %v992 = vrot.slane %v865, 3
    %v993 = vsel %vm915, %v987, %v992
    %v994 = vrot.slane %v866, 3
    %v995 = vsel %vm915, %v990, %v994
    %v1028 = vadd.f32 %v780, %v918
    %v1029 = vadd.f32 %v781, %v921
    %v1030 = vadd.f32 %v782, %v923
    %v1031 = vadd.f32 %v783, %v925
    %v1032 = vadd.f32 %v784, %v928
    %v1033 = vadd.f32 %v785, %v931
    %v1034 = vadd.f32 %v786, %v933
    %v1035 = vadd.f32 %v787, %v935
    %v1036 = vadd.f32 %v788, %v938
    %v1037 = vadd.f32 %v789, %v941
    %v1038 = vadd.f32 %v790, %v943
    %v1039 = vadd.f32 %v791, %v945
    %v1040 = vadd.f32 %v792, %v948
    %v1041 = vadd.f32 %v793, %v951
    %v1042 = vadd.f32 %v794, %v953
    %v1043 = vadd.f32 %v795, %v955
    %v1044 = vadd.f32 %v796, %v958
    %v1045 = vadd.f32 %v797, %v961
    %v1046 = vadd.f32 %v798, %v963
    %v1047 = vadd.f32 %v799, %v965
    %v1048 = vadd.f32 %v800, %v968
    %v1049 = vadd.f32 %v801, %v971
    %v1050 = vadd.f32 %v802, %v973
    %v1051 = vadd.f32 %v803, %v975
    %v1052 = vadd.f32 %v804, %v978
    %v1053 = vadd.f32 %v805, %v981
    %v1054 = vadd.f32 %v806, %v983
    %v1055 = vadd.f32 %v807, %v985
    %v1056 = vadd.f32 %v808, %v988
    %v1057 = vadd.f32 %v809, %v991
    %v1058 = vadd.f32 %v810, %v993
    %v1059 = vadd.f32 %v811, %v995
    %s1060 = scalar_lea.vmem %s4, 4
    %v1061 = vld [vmem:[%s1060] ss:$8 sm:$0x3]
    %v1063 = vperm.slane %v1061, 0
    %v1064 = vperm.slane %v1061, 1
    %v1067 = vmul.f32 %v100, %v1063
    %v1068 = vmul.f32 %v100, %v1064
    %v1069 = vmul.f32 %v106, %v1063
    %v1070 = vmul.f32 %v106, %v1064
    %v1071 = vmul.f32 %v112, %v1063
    %v1072 = vmul.f32 %v112, %v1064
    %v1073 = vmul.f32 %v119, %v1063
    %v1074 = vmul.f32 %v119, %v1064
    %v1075 = vmul.f32 %v125, %v1063
    %v1076 = vmul.f32 %v125, %v1064
    %v1077 = vmul.f32 %v131, %v1063
    %v1078 = vmul.f32 %v131, %v1064
    %v1079 = vmul.f32 %v138, %v1063
    %v1080 = vmul.f32 %v138, %v1064
    %v1081 = vmul.f32 %v144, %v1063
    %v1082 = vmul.f32 %v144, %v1064
    %v1083 = vmul.f32 %v150, %v1063
    %v1084 = vmul.f32 %v150, %v1064
    %v1085 = vmul.f32 %v157, %v1063
    %v1086 = vmul.f32 %v157, %v1064
    %v1087 = vmul.f32 %v163, %v1063
    %v1088 = vmul.f32 %v163, %v1064
    %v1089 = vmul.f32 %v169, %v1063
    %v1090 = vmul.f32 %v169, %v1064
    %v1091 = vmul.f32 %v176, %v1063
    %v1092 = vmul.f32 %v176, %v1064
    %v1093 = vmul.f32 %v182, %v1063
    %v1094 = vmul.f32 %v182, %v1064
    %v1095 = vmul.f32 %v188, %v1063
    %v1096 = vmul.f32 %v188, %v1064
    %v1097 = vmul.f32 %v195, %v1063
    %v1098 = vmul.f32 %v195, %v1064
    %v1099 = vmul.f32 %v201, %v1063
    %v1100 = vmul.f32 %v201, %v1064
    %v1101 = vmul.f32 %v207, %v1063
    %v1102 = vmul.f32 %v207, %v1064
    %v1103 = vmul.f32 %v214, %v1063
    %v1104 = vmul.f32 %v214, %v1064
    %v1105 = vmul.f32 %v220, %v1063
    %v1106 = vmul.f32 %v220, %v1064
    %v1107 = vmul.f32 %v226, %v1063
    %v1108 = vmul.f32 %v226, %v1064
    %v1109 = vmul.f32 %v233, %v1063
    %v1110 = vmul.f32 %v233, %v1064
    %v1111 = vmul.f32 %v239, %v1063
    %v1112 = vmul.f32 %v239, %v1064
    %v1113 = vmul.f32 %v245, %v1063
    %v1114 = vmul.f32 %v245, %v1064
    %vm1163 = vcmask 1043456
    %v1164 = vrot.slane %v1067, 4
    %v1165 = vrot.slane %v1069, 4
    %v1166 = vsel %vm1163, %v1164, %v1165
    %v1167 = vrot.slane %v1068, 4
    %v1168 = vrot.slane %v1070, 4
    %v1169 = vsel %vm1163, %v1167, %v1168
    %v1170 = vrot.slane %v1071, 4
    %v1171 = vsel %vm1163, %v1165, %v1170
    %v1172 = vrot.slane %v1072, 4
    %v1173 = vsel %vm1163, %v1168, %v1172
    %v1174 = vrot.slane %v1073, 4
    %v1175 = vrot.slane %v1075, 4
    %v1176 = vsel %vm1163, %v1174, %v1175
    %v1177 = vrot.slane %v1074, 4
    %v1178 = vrot.slane %v1076, 4
    %v1179 = vsel %vm1163, %v1177, %v1178
    %v1180 = vrot.slane %v1077, 4
    %v1181 = vsel %vm1163, %v1175, %v1180
    %v1182 = vrot.slane %v1078, 4
    %v1183 = vsel %vm1163, %v1178, %v1182
    %v1184 = vrot.slane %v1079, 4
    %v1185 = vrot.slane %v1081, 4
    %v1186 = vsel %vm1163, %v1184, %v1185
    %v1187 = vrot.slane %v1080, 4
    %v1188 = vrot.slane %v1082, 4
    %v1189 = vsel %vm1163, %v1187, %v1188
    %v1190 = vrot.slane %v1083, 4
    %v1191 = vsel %vm1163, %v1185, %v1190
    %v1192 = vrot.slane %v1084, 4
    %v1193 = vsel %vm1163, %v1188, %v1192
    %v1194 = vrot.slane %v1085, 4
    %v1195 = vrot.slane %v1087, 4
    %v1196 = vsel %vm1163, %v1194, %v1195
    %v1197 = vrot.slane %v1086, 4
    %v1198 = vrot.slane %v1088, 4
    %v1199 = vsel %vm1163, %v1197, %v1198
    %v1200 = vrot.slane %v1089, 4
    %v1201 = vsel %vm1163, %v1195, %v1200
    %v1202 = vrot.slane %v1090, 4
    %v1203 = vsel %vm1163, %v1198, %v1202
    %v1204 = vrot.slane %v1091, 4
    %v1205 = vrot.slane %v1093, 4
    %v1206 = vsel %vm1163, %v1204, %v1205
    %v1207 = vrot.slane %v1092, 4
    %v1208 = vrot.slane %v1094, 4
    %v1209 = vsel %vm1163, %v1207, %v1208
    %v1210 = vrot.slane %v1095, 4
    %v1211 = vsel %vm1163, %v1205, %v1210
    %v1212 = vrot.slane %v1096, 4
    %v1213 = vsel %vm1163, %v1208, %v1212
    %v1214 = vrot.slane %v1097, 4
    %v1215 = vrot.slane %v1099, 4
    %v1216 = vsel %vm1163, %v1214, %v1215
    %v1217 = vrot.slane %v1098, 4
    %v1218 = vrot.slane %v1100, 4
    %v1219 = vsel %vm1163, %v1217, %v1218
    %v1220 = vrot.slane %v1101, 4
    %v1221 = vsel %vm1163, %v1215, %v1220
    %v1222 = vrot.slane %v1102, 4
    %v1223 = vsel %vm1163, %v1218, %v1222
    %v1224 = vrot.slane %v1103, 4
    %v1225 = vrot.slane %v1105, 4
    %v1226 = vsel %vm1163, %v1224, %v1225
    %v1227 = vrot.slane %v1104, 4
    %v1228 = vrot.slane %v1106, 4
    %v1229 = vsel %vm1163, %v1227, %v1228
    %v1230 = vrot.slane %v1107, 4
    %v1231 = vsel %vm1163, %v1225, %v1230
    %v1232 = vrot.slane %v1108, 4
    %v1233 = vsel %vm1163, %v1228, %v1232
    %v1234 = vrot.slane %v1109, 4
    %v1235 = vrot.slane %v1111, 4
    %v1236 = vsel %vm1163, %v1234, %v1235
    %v1237 = vrot.slane %v1110, 4
    %v1238 = vrot.slane %v1112, 4
    %v1239 = vsel %vm1163, %v1237, %v1238
    %v1240 = vrot.slane %v1113, 4
    %v1241 = vsel %vm1163, %v1235, %v1240
    %v1242 = vrot.slane %v1114, 4
    %v1243 = vsel %vm1163, %v1238, %v1242
    %v1276 = vadd.f32 %v1028, %v1166
    %v1277 = vadd.f32 %v1029, %v1169
    %v1278 = vadd.f32 %v1030, %v1171
    %v1279 = vadd.f32 %v1031, %v1173
    %v1280 = vadd.f32 %v1032, %v1176
    %v1281 = vadd.f32 %v1033, %v1179
    %v1282 = vadd.f32 %v1034, %v1181
    %v1283 = vadd.f32 %v1035, %v1183
    %v1284 = vadd.f32 %v1036, %v1186
    %v1285 = vadd.f32 %v1037, %v1189
    %v1286 = vadd.f32 %v1038, %v1191
    %v1287 = vadd.f32 %v1039, %v1193
    %v1288 = vadd.f32 %v1040, %v1196
    %v1289 = vadd.f32 %v1041, %v1199
    %v1290 = vadd.f32 %v1042, %v1201
    %v1291 = vadd.f32 %v1043, %v1203
    %v1292 = vadd.f32 %v1044, %v1206
    %v1293 = vadd.f32 %v1045, %v1209
    %v1294 = vadd.f32 %v1046, %v1211
    %v1295 = vadd.f32 %v1047, %v1213
    %v1296 = vadd.f32 %v1048, %v1216
    %v1297 = vadd.f32 %v1049, %v1219
    %v1298 = vadd.f32 %v1050, %v1221
    %v1299 = vadd.f32 %v1051, %v1223
    %v1300 = vadd.f32 %v1052, %v1226
    %v1301 = vadd.f32 %v1053, %v1229
    %v1302 = vadd.f32 %v1054, %v1231
    %v1303 = vadd.f32 %v1055, %v1233
    %v1304 = vadd.f32 %v1056, %v1236
    %v1305 = vadd.f32 %v1057, %v1239
    %v1306 = vadd.f32 %v1058, %v1241
    %v1307 = vadd.f32 %v1059, %v1243
    %s1308 = scalar_lea.vmem %s4, 5
    %v1309 = vld [vmem:[%s1308] ss:$8 sm:$0x3]
    %v1311 = vperm.slane %v1309, 0
    %v1312 = vperm.slane %v1309, 1
    %v1315 = vmul.f32 %v100, %v1311
    %v1316 = vmul.f32 %v100, %v1312
    %v1317 = vmul.f32 %v106, %v1311
    %v1318 = vmul.f32 %v106, %v1312
    %v1319 = vmul.f32 %v112, %v1311
    %v1320 = vmul.f32 %v112, %v1312
    %v1321 = vmul.f32 %v119, %v1311
    %v1322 = vmul.f32 %v119, %v1312
    %v1323 = vmul.f32 %v125, %v1311
    %v1324 = vmul.f32 %v125, %v1312
    %v1325 = vmul.f32 %v131, %v1311
    %v1326 = vmul.f32 %v131, %v1312
    %v1327 = vmul.f32 %v138, %v1311
    %v1328 = vmul.f32 %v138, %v1312
    %v1329 = vmul.f32 %v144, %v1311
    %v1330 = vmul.f32 %v144, %v1312
    %v1331 = vmul.f32 %v150, %v1311
    %v1332 = vmul.f32 %v150, %v1312
    %v1333 = vmul.f32 %v157, %v1311
    %v1334 = vmul.f32 %v157, %v1312
    %v1335 = vmul.f32 %v163, %v1311
    %v1336 = vmul.f32 %v163, %v1312
    %v1337 = vmul.f32 %v169, %v1311
    %v1338 = vmul.f32 %v169, %v1312
    %v1339 = vmul.f32 %v176, %v1311
    %v1340 = vmul.f32 %v176, %v1312
    %v1341 = vmul.f32 %v182, %v1311
    %v1342 = vmul.f32 %v182, %v1312
    %v1343 = vmul.f32 %v188, %v1311
    %v1344 = vmul.f32 %v188, %v1312
    %v1345 = vmul.f32 %v195, %v1311
    %v1346 = vmul.f32 %v195, %v1312
    %v1347 = vmul.f32 %v201, %v1311
    %v1348 = vmul.f32 %v201, %v1312
    %v1349 = vmul.f32 %v207, %v1311
    %v1350 = vmul.f32 %v207, %v1312
    %v1351 = vmul.f32 %v214, %v1311
    %v1352 = vmul.f32 %v214, %v1312
    %v1353 = vmul.f32 %v220, %v1311
    %v1354 = vmul.f32 %v220, %v1312
    %v1355 = vmul.f32 %v226, %v1311
    %v1356 = vmul.f32 %v226, %v1312
    %v1357 = vmul.f32 %v233, %v1311
    %v1358 = vmul.f32 %v233, %v1312
    %v1359 = vmul.f32 %v239, %v1311
    %v1360 = vmul.f32 %v239, %v1312
    %v1361 = vmul.f32 %v245, %v1311
    %v1362 = vmul.f32 %v245, %v1312
    %vm1411 = vcmask 1042432
    %v1412 = vrot.slane %v1315, 5
    %v1413 = vrot.slane %v1317, 5
    %v1414 = vsel %vm1411, %v1412, %v1413
    %v1415 = vrot.slane %v1316, 5
    %v1416 = vrot.slane %v1318, 5
    %v1417 = vsel %vm1411, %v1415, %v1416
    %v1418 = vrot.slane %v1319, 5
    %v1419 = vsel %vm1411, %v1413, %v1418
    %v1420 = vrot.slane %v1320, 5
    %v1421 = vsel %vm1411, %v1416, %v1420
    %v1422 = vrot.slane %v1321, 5
    %v1423 = vrot.slane %v1323, 5
    %v1424 = vsel %vm1411, %v1422, %v1423
    %v1425 = vrot.slane %v1322, 5
    %v1426 = vrot.slane %v1324, 5
    %v1427 = vsel %vm1411, %v1425, %v1426
    %v1428 = vrot.slane %v1325, 5
    %v1429 = vsel %vm1411, %v1423, %v1428
    %v1430 = vrot.slane %v1326, 5
    %v1431 = vsel %vm1411, %v1426, %v1430
    %v1432 = vrot.slane %v1327, 5
    %v1433 = vrot.slane %v1329, 5
    %v1434 = vsel %vm1411, %v1432, %v1433
    %v1435 = vrot.slane %v1328, 5
    %v1436 = vrot.slane %v1330, 5
    %v1437 = vsel %vm1411, %v1435, %v1436
    %v1438 = vrot.slane %v1331, 5
    %v1439 = vsel %vm1411, %v1433, %v1438
    %v1440 = vrot.slane %v1332, 5
    %v1441 = vsel %vm1411, %v1436, %v1440
    %v1442 = vrot.slane %v1333, 5
    %v1443 = vrot.slane %v1335, 5
    %v1444 = vsel %vm1411, %v1442, %v1443
    %v1445 = vrot.slane %v1334, 5
    %v1446 = vrot.slane %v1336, 5
    %v1447 = vsel %vm1411, %v1445, %v1446
    %v1448 = vrot.slane %v1337, 5
    %v1449 = vsel %vm1411, %v1443, %v1448
    %v1450 = vrot.slane %v1338, 5
    %v1451 = vsel %vm1411, %v1446, %v1450
    %v1452 = vrot.slane %v1339, 5
    %v1453 = vrot.slane %v1341, 5
    %v1454 = vsel %vm1411, %v1452, %v1453
    %v1455 = vrot.slane %v1340, 5
    %v1456 = vrot.slane %v1342, 5
    %v1457 = vsel %vm1411, %v1455, %v1456
    %v1458 = vrot.slane %v1343, 5
    %v1459 = vsel %vm1411, %v1453, %v1458
    %v1460 = vrot.slane %v1344, 5
    %v1461 = vsel %vm1411, %v1456, %v1460
    %v1462 = vrot.slane %v1345, 5
    %v1463 = vrot.slane %v1347, 5
    %v1464 = vsel %vm1411, %v1462, %v1463
    %v1465 = vrot.slane %v1346, 5
    %v1466 = vrot.slane %v1348, 5
    %v1467 = vsel %vm1411, %v1465, %v1466
    %v1468 = vrot.slane %v1349, 5
    %v1469 = vsel %vm1411, %v1463, %v1468
    %v1470 = vrot.slane %v1350, 5
    %v1471 = vsel %vm1411, %v1466, %v1470
    %v1472 = vrot.slane %v1351, 5
    %v1473 = vrot.slane %v1353, 5
    %v1474 = vsel %vm1411, %v1472, %v1473
    %v1475 = vrot.slane %v1352, 5
    %v1476 = vrot.slane %v1354, 5
    %v1477 = vsel %vm1411, %v1475, %v1476
    %v1478 = vrot.slane %v1355, 5
    %v1479 = vsel %vm1411, %v1473, %v1478
    %v1480 = vrot.slane %v1356, 5
    %v1481 = vsel %vm1411, %v1476, %v1480
    %v1482 = vrot.slane %v1357, 5
    %v1483 = vrot.slane %v1359, 5
    %v1484 = vsel %vm1411, %v1482, %v1483
    %v1485 = vrot.slane %v1358, 5
    %v1486 = vrot.slane %v1360, 5
    %v1487 = vsel %vm1411, %v1485, %v1486
    %v1488 = vrot.slane %v1361, 5
    %v1489 = vsel %vm1411, %v1483, %v1488
    %v1490 = vrot.slane %v1362, 5
    %v1491 = vsel %vm1411, %v1486, %v1490
    %v1524 = vadd.f32 %v1276, %v1414
    %v1525 = vadd.f32 %v1277, %v1417
    %v1526 = vadd.f32 %v1278, %v1419
    %v1527 = vadd.f32 %v1279, %v1421
    %v1528 = vadd.f32 %v1280, %v1424
    %v1529 = vadd.f32 %v1281, %v1427
    %v1530 = vadd.f32 %v1282, %v1429
    %v1531 = vadd.f32 %v1283, %v1431
    %v1532 = vadd.f32 %v1284, %v1434
    %v1533 = vadd.f32 %v1285, %v1437
    %v1534 = vadd.f32 %v1286, %v1439
    %v1535 = vadd.f32 %v1287, %v1441
    %v1536 = vadd.f32 %v1288, %v1444
    %v1537 = vadd.f32 %v1289, %v1447
    %v1538 = vadd.f32 %v1290, %v1449
    %v1539 = vadd.f32 %v1291, %v1451
    %v1540 = vadd.f32 %v1292, %v1454
    %v1541 = vadd.f32 %v1293, %v1457
    %v1542 = vadd.f32 %v1294, %v1459
    %v1543 = vadd.f32 %v1295, %v1461
    %v1544 = vadd.f32 %v1296, %v1464
    %v1545 = vadd.f32 %v1297, %v1467
    %v1546 = vadd.f32 %v1298, %v1469
    %v1547 = vadd.f32 %v1299, %v1471
    %v1548 = vadd.f32 %v1300, %v1474
    %v1549 = vadd.f32 %v1301, %v1477
    %v1550 = vadd.f32 %v1302, %v1479
    %v1551 = vadd.f32 %v1303, %v1481
    %v1552 = vadd.f32 %v1304, %v1484
    %v1553 = vadd.f32 %v1305, %v1487
    %v1554 = vadd.f32 %v1306, %v1489
    %v1555 = vadd.f32 %v1307, %v1491
    %s1556 = scalar_lea.vmem %s4, 6
    %v1557 = vld [vmem:[%s1556] ss:$8 sm:$0x3]
    %v1559 = vperm.slane %v1557, 0
    %v1560 = vperm.slane %v1557, 1
    %v1563 = vmul.f32 %v100, %v1559
    %v1564 = vmul.f32 %v100, %v1560
    %v1565 = vmul.f32 %v106, %v1559
    %v1566 = vmul.f32 %v106, %v1560
    %v1567 = vmul.f32 %v112, %v1559
    %v1568 = vmul.f32 %v112, %v1560
    %v1569 = vmul.f32 %v119, %v1559
    %v1570 = vmul.f32 %v119, %v1560
    %v1571 = vmul.f32 %v125, %v1559
    %v1572 = vmul.f32 %v125, %v1560
    %v1573 = vmul.f32 %v131, %v1559
    %v1574 = vmul.f32 %v131, %v1560
    %v1575 = vmul.f32 %v138, %v1559
    %v1576 = vmul.f32 %v138, %v1560
    %v1577 = vmul.f32 %v144, %v1559
    %v1578 = vmul.f32 %v144, %v1560
    %v1579 = vmul.f32 %v150, %v1559
    %v1580 = vmul.f32 %v150, %v1560
    %v1581 = vmul.f32 %v157, %v1559
    %v1582 = vmul.f32 %v157, %v1560
    %v1583 = vmul.f32 %v163, %v1559
    %v1584 = vmul.f32 %v163, %v1560
    %v1585 = vmul.f32 %v169, %v1559
    %v1586 = vmul.f32 %v169, %v1560
    %v1587 = vmul.f32 %v176, %v1559
    %v1588 = vmul.f32 %v176, %v1560
    %v1589 = vmul.f32 %v182, %v1559
    %v1590 = vmul.f32 %v182, %v1560
    %v1591 = vmul.f32 %v188, %v1559
    %v1592 = vmul.f32 %v188, %v1560
    %v1593 = vmul.f32 %v195, %v1559
    %v1594 = vmul.f32 %v195, %v1560
    %v1595 = vmul.f32 %v201, %v1559
    %v1596 = vmul.f32 %v201, %v1560
    %v1597 = vmul.f32 %v207, %v1559
    %v1598 = vmul.f32 %v207, %v1560
    %v1599 = vmul.f32 %v214, %v1559
    %v1600 = vmul.f32 %v214, %v1560
    %v1601 = vmul.f32 %v220, %v1559
    %v1602 = vmul.f32 %v220, %v1560
    %v1603 = vmul.f32 %v226, %v1559
    %v1604 = vmul.f32 %v226, %v1560
    %v1605 = vmul.f32 %v233, %v1559
    %v1606 = vmul.f32 %v233, %v1560
    %v1607 = vmul.f32 %v239, %v1559
    %v1608 = vmul.f32 %v239, %v1560
    %v1609 = vmul.f32 %v245, %v1559
    %v1610 = vmul.f32 %v245, %v1560
    %vm1659 = vcmask 1041408
    %v1660 = vrot.slane %v1563, 6
    %v1661 = vrot.slane %v1565, 6
    %v1662 = vsel %vm1659, %v1660, %v1661
    %v1663 = vrot.slane %v1564, 6
    %v1664 = vrot.slane %v1566, 6
    %v1665 = vsel %vm1659, %v1663, %v1664
    %v1666 = vrot.slane %v1567, 6
    %v1667 = vsel %vm1659, %v1661, %v1666
    %v1668 = vrot.slane %v1568, 6
    %v1669 = vsel %vm1659, %v1664, %v1668
    %v1670 = vrot.slane %v1569, 6
    %v1671 = vrot.slane %v1571, 6
    %v1672 = vsel %vm1659, %v1670, %v1671
    %v1673 = vrot.slane %v1570, 6
    %v1674 = vrot.slane %v1572, 6
    %v1675 = vsel %vm1659, %v1673, %v1674
    %v1676 = vrot.slane %v1573, 6
    %v1677 = vsel %vm1659, %v1671, %v1676
    %v1678 = vrot.slane %v1574, 6
    %v1679 = vsel %vm1659, %v1674, %v1678
    %v1680 = vrot.slane %v1575, 6
    %v1681 = vrot.slane %v1577, 6
    %v1682 = vsel %vm1659, %v1680, %v1681
    %v1683 = vrot.slane %v1576, 6
    %v1684 = vrot.slane %v1578, 6
    %v1685 = vsel %vm1659, %v1683, %v1684
    %v1686 = vrot.slane %v1579, 6
    %v1687 = vsel %vm1659, %v1681, %v1686
    %v1688 = vrot.slane %v1580, 6
    %v1689 = vsel %vm1659, %v1684, %v1688
    %v1690 = vrot.slane %v1581, 6
    %v1691 = vrot.slane %v1583, 6
    %v1692 = vsel %vm1659, %v1690, %v1691
    %v1693 = vrot.slane %v1582, 6
    %v1694 = vrot.slane %v1584, 6
    %v1695 = vsel %vm1659, %v1693, %v1694
    %v1696 = vrot.slane %v1585, 6
    %v1697 = vsel %vm1659, %v1691, %v1696
    %v1698 = vrot.slane %v1586, 6
    %v1699 = vsel %vm1659, %v1694, %v1698
    %v1700 = vrot.slane %v1587, 6
    %v1701 = vrot.slane %v1589, 6
    %v1702 = vsel %vm1659, %v1700, %v1701
    %v1703 = vrot.slane %v1588, 6
    %v1704 = vrot.slane %v1590, 6
    %v1705 = vsel %vm1659, %v1703, %v1704
    %v1706 = vrot.slane %v1591, 6
    %v1707 = vsel %vm1659, %v1701, %v1706
    %v1708 = vrot.slane %v1592, 6
    %v1709 = vsel %vm1659, %v1704, %v1708
    %v1710 = vrot.slane %v1593, 6
    %v1711 = vrot.slane %v1595, 6
    %v1712 = vsel %vm1659, %v1710, %v1711
    %v1713 = vrot.slane %v1594, 6
    %v1714 = vrot.slane %v1596, 6
    %v1715 = vsel %vm1659, %v1713, %v1714
    %v1716 = vrot.slane %v1597, 6
    %v1717 = vsel %vm1659, %v1711, %v1716
    %v1718 = vrot.slane %v1598, 6
    %v1719 = vsel %vm1659, %v1714, %v1718
    %v1720 = vrot.slane %v1599, 6
    %v1721 = vrot.slane %v1601, 6
    %v1722 = vsel %vm1659, %v1720, %v1721
    %v1723 = vrot.slane %v1600, 6
    %v1724 = vrot.slane %v1602, 6
    %v1725 = vsel %vm1659, %v1723, %v1724
    %v1726 = vrot.slane %v1603, 6
    %v1727 = vsel %vm1659, %v1721, %v1726
    %v1728 = vrot.slane %v1604, 6
    %v1729 = vsel %vm1659, %v1724, %v1728
    %v1730 = vrot.slane %v1605, 6
    %v1731 = vrot.slane %v1607, 6
    %v1732 = vsel %vm1659, %v1730, %v1731
    %v1733 = vrot.slane %v1606, 6
    %v1734 = vrot.slane %v1608, 6
    %v1735 = vsel %vm1659, %v1733, %v1734
    %v1736 = vrot.slane %v1609, 6
    %v1737 = vsel %vm1659, %v1731, %v1736
    %v1738 = vrot.slane %v1610, 6
    %v1739 = vsel %vm1659, %v1734, %v1738
    %v1772 = vadd.f32 %v1524, %v1662
    %v1773 = vadd.f32 %v1525, %v1665
    %v1774 = vadd.f32 %v1526, %v1667
    %v1775 = vadd.f32 %v1527, %v1669
    %v1776 = vadd.f32 %v1528, %v1672
    %v1777 = vadd.f32 %v1529, %v1675
    %v1778 = vadd.f32 %v1530, %v1677
    %v1779 = vadd.f32 %v1531, %v1679
    %v1780 = vadd.f32 %v1532, %v1682
    %v1781 = vadd.f32 %v1533, %v1685
    %v1782 = vadd.f32 %v1534, %v1687
    %v1783 = vadd.f32 %v1535, %v1689
    %v1784 = vadd.f32 %v1536, %v1692
    %v1785 = vadd.f32 %v1537, %v1695
    %v1786 = vadd.f32 %v1538, %v1697
    %v1787 = vadd.f32 %v1539, %v1699
    %v1788 = vadd.f32 %v1540, %v1702
    %v1789 = vadd.f32 %v1541, %v1705
    %v1790 = vadd.f32 %v1542, %v1707
    %v1791 = vadd.f32 %v1543, %v1709
    %v1792 = vadd.f32 %v1544, %v1712
    %v1793 = vadd.f32 %v1545, %v1715
    %v1794 = vadd.f32 %v1546, %v1717
    %v1795 = vadd.f32 %v1547, %v1719
    %v1796 = vadd.f32 %v1548, %v1722
    %v1797 = vadd.f32 %v1549, %v1725
    %v1798 = vadd.f32 %v1550, %v1727
    %v1799 = vadd.f32 %v1551, %v1729
    %v1800 = vadd.f32 %v1552, %v1732
    %v1801 = vadd.f32 %v1553, %v1735
    %v1802 = vadd.f32 %v1554, %v1737
    %v1803 = vadd.f32 %v1555, %v1739
    %v1804 = vld [vmem:[%s7 + $0x1] sm:$0x3]
    %v1806 = vperm.slane %v1804, 0
    %v1807 = vperm.slane %v1804, 1
    %v1810 = vadd.f32 %v1772, %v1806
    %v1811 = vadd.f32 %v1773, %v1807
    %v1812 = vadd.f32 %v1774, %v1806
    %v1813 = vadd.f32 %v1775, %v1807
    %v1814 = vadd.f32 %v1776, %v1806
    %v1815 = vadd.f32 %v1777, %v1807
    %v1816 = vadd.f32 %v1778, %v1806
    %v1817 = vadd.f32 %v1779, %v1807
    %v1818 = vadd.f32 %v1780, %v1806
    %v1819 = vadd.f32 %v1781, %v1807
    %v1820 = vadd.f32 %v1782, %v1806
    %v1821 = vadd.f32 %v1783, %v1807
    %v1822 = vadd.f32 %v1784, %v1806
    %v1823 = vadd.f32 %v1785, %v1807
    %v1824 = vadd.f32 %v1786, %v1806
    %v1825 = vadd.f32 %v1787, %v1807
    %v1826 = vadd.f32 %v1788, %v1806
    %v1827 = vadd.f32 %v1789, %v1807
    %v1828 = vadd.f32 %v1790, %v1806
    %v1829 = vadd.f32 %v1791, %v1807
    %v1830 = vadd.f32 %v1792, %v1806
    %v1831 = vadd.f32 %v1793, %v1807
    %v1832 = vadd.f32 %v1794, %v1806
    %v1833 = vadd.f32 %v1795, %v1807
    %v1834 = vadd.f32 %v1796, %v1806
    %v1835 = vadd.f32 %v1797, %v1807
    %v1836 = vadd.f32 %v1798, %v1806
    %v1837 = vadd.f32 %v1799, %v1807
    %v1838 = vadd.f32 %v1800, %v1806
    %v1839 = vadd.f32 %v1801, %v1807
    %v1840 = vadd.f32 %v1802, %v1806
    %v1841 = vadd.f32 %v1803, %v1807
    %v1842 = vmax.f32 %v1810, 0.0
    %v1843 = vmax.f32 %v1811, 0.0
    %v1844 = vmax.f32 %v1812, 0.0
    %v1845 = vmax.f32 %v1813, 0.0
    %v1846 = vmax.f32 %v1814, 0.0
    %v1847 = vmax.f32 %v1815, 0.0
    %v1848 = vmax.f32 %v1816, 0.0
    %v1849 = vmax.f32 %v1817, 0.0
    %v1850 = vmax.f32 %v1818, 0.0
    %v1851 = vmax.f32 %v1819, 0.0
    %v1852 = vmax.f32 %v1820, 0.0
    %v1853 = vmax.f32 %v1821, 0.0
    %v1854 = vmax.f32 %v1822, 0.0
    %v1855 = vmax.f32 %v1823, 0.0
    %v1856 = vmax.f32 %v1824, 0.0
    %v1857 = vmax.f32 %v1825, 0.0
    %v1858 = vmax.f32 %v1826, 0.0
    %v1859 = vmax.f32 %v1827, 0.0
    %v1860 = vmax.f32 %v1828, 0.0
    %v1861 = vmax.f32 %v1829, 0.0
    %v1862 = vmax.f32 %v1830, 0.0
    %v1863 = vmax.f32 %v1831, 0.0
    %v1864 = vmax.f32 %v1832, 0.0
    %v1865 = vmax.f32 %v1833, 0.0
    %v1866 = vmax.f32 %v1834, 0.0
    %v1867 = vmax.f32 %v1835, 0.0
    %v1868 = vmax.f32 %v1836, 0.0
    %v1869 = vmax.f32 %v1837, 0.0
    %v1870 = vmax.f32 %v1838, 0.0
    %v1871 = vmax.f32 %v1839, 0.0
    %v1872 = vmax.f32 %v1840, 0.0
    %v1873 = vmax.f32 %v1841, 0.0
    %v1874 = vadd.f32 %v1842, %v1844
    %v1875 = vrot.slane %v1874, 4
    %v1876 = vadd.f32 %v1874, %v1875
    %v1877 = vrot.slane %v1876, 2
    %v1878 = vadd.f32 %v1876, %v1877
    %v1879 = vrot.slane %v1878, 1
    %v1880 = vadd.f32 %v1878, %v1879
    %vm1881 = vcmask 523264
    %v1882 = vsel %vm1881, %v1843, 0.0
    %v1883 = vsel %vm1881, %v1845, 0.0
    %v1884 = vadd.f32 %v1882, %v1883
    %v1885 = vrot.slane %v1884, 4
    %v1886 = vadd.f32 %v1884, %v1885
    %v1887 = vrot.slane %v1886, 2
    %v1888 = vadd.f32 %v1886, %v1887
    %v1889 = vrot.slane %v1888, 1
    %v1890 = vadd.f32 %v1888, %v1889
    %v1891 = vadd.f32 %v1846, %v1848
    %v1892 = vrot.slane %v1891, 4
    %v1893 = vadd.f32 %v1891, %v1892
    %v1894 = vrot.slane %v1893, 2
    %v1895 = vadd.f32 %v1893, %v1894
    %v1896 = vrot.slane %v1895, 1
    %v1897 = vadd.f32 %v1895, %v1896
    %v1898 = vsel %vm1881, %v1847, 0.0
    %v1899 = vsel %vm1881, %v1849, 0.0
    %v1900 = vadd.f32 %v1898, %v1899
    %v1901 = vrot.slane %v1900, 4
    %v1902 = vadd.f32 %v1900, %v1901
    %v1903 = vrot.slane %v1902, 2
    %v1904 = vadd.f32 %v1902, %v1903
    %v1905 = vrot.slane %v1904, 1
    %v1906 = vadd.f32 %v1904, %v1905
    %v1907 = vadd.f32 %v1850, %v1852
    %v1908 = vrot.slane %v1907, 4
    %v1909 = vadd.f32 %v1907, %v1908
    %v1910 = vrot.slane %v1909, 2
    %v1911 = vadd.f32 %v1909, %v1910
    %v1912 = vrot.slane %v1911, 1
    %v1913 = vadd.f32 %v1911, %v1912
    %v1914 = vsel %vm1881, %v1851, 0.0
    %v1915 = vsel %vm1881, %v1853, 0.0
    %v1916 = vadd.f32 %v1914, %v1915
    %v1917 = vrot.slane %v1916, 4
    %v1918 = vadd.f32 %v1916, %v1917
    %v1919 = vrot.slane %v1918, 2
    %v1920 = vadd.f32 %v1918, %v1919
    %v1921 = vrot.slane %v1920, 1
    %v1922 = vadd.f32 %v1920, %v1921
    %v1923 = vadd.f32 %v1854, %v1856
    %v1924 = vrot.slane %v1923, 4
    %v1925 = vadd.f32 %v1923, %v1924
    %v1926 = vrot.slane %v1925, 2
    %v1927 = vadd.f32 %v1925, %v1926
    %v1928 = vrot.slane %v1927, 1
    %v1929 = vadd.f32 %v1927, %v1928
    %v1930 = vsel %vm1881, %v1855, 0.0
    %v1931 = vsel %vm1881, %v1857, 0.0
    %v1932 = vadd.f32 %v1930, %v1931
    %v1933 = vrot.slane %v1932, 4
    %v1934 = vadd.f32 %v1932, %v1933
    %v1935 = vrot.slane %v1934, 2
    %v1936 = vadd.f32 %v1934, %v1935
    %v1937 = vrot.slane %v1936, 1
    %v1938 = vadd.f32 %v1936, %v1937
    %v1939 = vadd.f32 %v1858, %v1860
    %v1940 = vrot.slane %v1939, 4
    %v1941 = vadd.f32 %v1939, %v1940
    %v1942 = vrot.slane %v1941, 2
    %v1943 = vadd.f32 %v1941, %v1942
    %v1944 = vrot.slane %v1943, 1
    %v1945 = vadd.f32 %v1943, %v1944
    %v1946 = vsel %vm1881, %v1859, 0.0
    %v1947 = vsel %vm1881, %v1861, 0.0
    %v1948 = vadd.f32 %v1946, %v1947
    %v1949 = vrot.slane %v1948, 4
    %v1950 = vadd.f32 %v1948, %v1949
    %v1951 = vrot.slane %v1950, 2
    %v1952 = vadd.f32 %v1950, %v1951
    %v1953 = vrot.slane %v1952, 1
    %v1954 = vadd.f32 %v1952, %v1953
    %v1955 = vadd.f32 %v1862, %v1864
    %v1956 = vrot.slane %v1955, 4
    %v1957 = vadd.f32 %v1955, %v1956
    %v1958 = vrot.slane %v1957, 2
    %v1959 = vadd.f32 %v1957, %v1958
    %v1960 = vrot.slane %v1959, 1
    %v1961 = vadd.f32 %v1959, %v1960
    %v1962 = vsel %vm1881, %v1863, 0.0
    %v1963 = vsel %vm1881, %v1865, 0.0
    %v1964 = vadd.f32 %v1962, %v1963
    %v1965 = vrot.slane %v1964, 4
    %v1966 = vadd.f32 %v1964, %v1965
    %v1967 = vrot.slane %v1966, 2
    %v1968 = vadd.f32 %v1966, %v1967
    %v1969 = vrot.slane %v1968, 1
    %v1970 = vadd.f32 %v1968, %v1969
    %v1971 = vadd.f32 %v1866, %v1868
    %v1972 = vrot.slane %v1971, 4
    %v1973 = vadd.f32 %v1971, %v1972
    %v1974 = vrot.slane %v1973, 2
    %v1975 = vadd.f32 %v1973, %v1974
    %v1976 = vrot.slane %v1975, 1
    %v1977 = vadd.f32 %v1975, %v1976
    %v1978 = vsel %vm1881, %v1867, 0.0
    %v1979 = vsel %vm1881, %v1869, 0.0
    %v1980 = vadd.f32 %v1978, %v1979
    %v1981 = vrot.slane %v1980, 4
    %v1982 = vadd.f32 %v1980, %v1981
    %v1983 = vrot.slane %v1982, 2
    %v1984 = vadd.f32 %v1982, %v1983
    %v1985 = vrot.slane %v1984, 1
    %v1986 = vadd.f32 %v1984, %v1985
    %v1987 = vadd.f32 %v1870, %v1872
    %v1988 = vrot.slane %v1987, 4
    %v1989 = vadd.f32 %v1987, %v1988
    %v1990 = vrot.slane %v1989, 2
    %v1991 = vadd.f32 %v1989, %v1990
    %v1992 = vrot.slane %v1991, 1
    %v1993 = vadd.f32 %v1991, %v1992
    %v1994 = vsel %vm1881, %v1871, 0.0
    %v1995 = vsel %vm1881, %v1873, 0.0
    %v1996 = vadd.f32 %v1994, %v1995
    %v1997 = vrot.slane %v1996, 4
    %v1998 = vadd.f32 %v1996, %v1997
    %v1999 = vrot.slane %v1998, 2
    %v2000 = vadd.f32 %v1998, %v1999
    %v2001 = vrot.slane %v2000, 1
    %v2002 = vadd.f32 %v2000, %v2001
    %v2003 = vrcp.pop 16.0
    %v2004 = vmul.f32 16.0, %v2003
    %v2005 = vsub.f32 1.0, %v2004
    %v2006 = vmul.f32 %v2003, %v2005
    %v2007 = vadd.f32 %v2003, %v2006
    %vm2008 = vweird.f32 %v2003
    %v2009 = vsel %vm2008, %v2003, %v2007
    %v2010 = vmul.f32 %v1880, %v2009
    %v2011 = vmul.f32 %v1890, %v2009
    %v2012 = vmul.f32 %v1897, %v2009
    %v2013 = vmul.f32 %v1906, %v2009
    %v2014 = vmul.f32 %v1913, %v2009
    %v2015 = vmul.f32 %v1922, %v2009
    %v2016 = vmul.f32 %v1929, %v2009
    %v2017 = vmul.f32 %v1938, %v2009
    %v2018 = vmul.f32 %v1945, %v2009
    %v2019 = vmul.f32 %v1954, %v2009
    %v2020 = vmul.f32 %v1961, %v2009
    %v2021 = vmul.f32 %v1970, %v2009
    %v2022 = vmul.f32 %v1977, %v2009
    %v2023 = vmul.f32 %v1986, %v2009
    %v2024 = vmul.f32 %v1993, %v2009
    %v2025 = vmul.f32 %v2002, %v2009
    %v2026 = vld [vmem:[%s5] sm:$0xff]
    %v2027 = vld [vmem:[%s5 + $0x8] sm:$0xff]
    %v2028 = vld [vmem:[%s5 + $0x10] sm:$0xff]
    %v2029 = vld [vmem:[%s5 + $0x18] sm:$0xff]
    %v2030 = vld [vmem:[%s5 + $0x20] sm:$0xff]
    %v2031 = vld [vmem:[%s5 + $0x28] sm:$0xff]
    %v2032 = vld [vmem:[%s5 + $0x30] sm:$0xff]
    %v2033 = vld [vmem:[%s5 + $0x38] sm:$0xff]
    %v2034 = vld [vmem:[%s5 + $0x40] sm:$0xff]
    %v2035 = vld [vmem:[%s5 + $0x48] sm:$0xff]
    %v2036 = vld [vmem:[%s5 + $0x50] sm:$0xff]
    %v2037 = vld [vmem:[%s5 + $0x58] sm:$0xff]
    %v2038 = vld [vmem:[%s5 + $0x60] sm:$0xff]
    %v2039 = vld [vmem:[%s5 + $0x68] sm:$0xff]
    %v2040 = vld [vmem:[%s5 + $0x70] sm:$0xff]
    %v2041 = vld [vmem:[%s5 + $0x78] sm:$0xff]
    %v2042 = vld [vmem:[%s5 + $0x80] sm:$0xff]
    %v2043 = vld [vmem:[%s5 + $0x88] sm:$0xff]
    %v2044 = vld [vmem:[%s5 + $0x90] sm:$0xff]
    %v2045 = vld [vmem:[%s5 + $0x98] sm:$0xff]
    %v2046 = vld [vmem:[%s5 + $0xa0] sm:$0xff]
    %v2047 = vld [vmem:[%s5 + $0xa8] sm:$0xff]
    %v2048 = vld [vmem:[%s5 + $0xb0] sm:$0xff]
    %v2049 = vld [vmem:[%s5 + $0xb8] sm:$0xff]
    %vm2066 = vcmask 1041409
    %v2067 = vsel %vm2066, %v2012, %v2010
    %vm2068 = vcmask 1042434
    %v2069 = vsel %vm2068, %v2014, %v2067
    %vm2070 = vcmask 1043459
    %v2071 = vsel %vm2070, %v2016, %v2069
    %vm2072 = vcmask 1044484
    %v2073 = vsel %vm2072, %v2018, %v2071
    %vm2074 = vcmask 1045509
    %v2075 = vsel %vm2074, %v2020, %v2073
    %vm2076 = vcmask 1046534
    %v2077 = vsel %vm2076, %v2022, %v2075
    %vm2078 = vcmask 1047559
    %v2079 = vsel %vm2078, %v2024, %v2077
    %v2080 = vsel %vm2066, %v2013, %v2011
    %v2081 = vsel %vm2068, %v2015, %v2080
    %v2082 = vsel %vm2070, %v2017, %v2081
    %v2083 = vsel %vm2072, %v2019, %v2082
    %v2084 = vsel %vm2074, %v2021, %v2083
    %v2085 = vsel %vm2076, %v2023, %v2084
    %v2086 = vsel %vm2078, %v2025, %v2085
    %v2088 = vsel %vm1881, %v2086, 0
    %2090 = vmatpush.msra.mxu0 %v2041
    %2091 = vmatpush.msra.mxu0 %v2040
    %2092 = vmatpush.msra.mxu0 %v2039
    %2093 = vmatpush.msra.mxu0 %v2038
    %2094 = vmatpush.msra.mxu0 %v2037
    %2095 = vmatpush.msra.mxu0 %v2036
    %2096 = vmatpush.msra.mxu0 %v2035
    %2097 = vmatpush.msra.mxu0 %v2034
    %2098 = vmatpush.msra.mxu0 %v2033
    %2099 = vmatpush.msra.mxu0 %v2032
    %2100 = vmatpush.msra.mxu0 %v2031
    %2101 = vmatpush.msra.mxu0 %v2030
    %2102 = vmatpush.msra.mxu0 %v2029
    %2103 = vmatpush.msra.mxu0 %v2028
    %2104 = vmatpush.msra.mxu0 %v2027
    %2105 = vmatpush.msra.mxu0 %v2026
    %2106 = vmatmul.f32.gmra.mxu0 %v2079
    %v2107 = vpop.f32.mrf.mxu0
    %v2108 = vadd.f32 0.0, %v2107
    %2109 = vdwg.mxu0
    %2110 = vmatpush.msra.mxu0 0.0
    %2111 = vmatpush.msra.mxu0 0.0
    %2112 = vmatpush.msra.mxu0 0.0
    %2113 = vmatpush.msra.mxu0 0.0
    %2114 = vmatpush.msra.mxu0 0.0
    %2115 = vmatpush.msra.mxu0 0.0
    %2116 = vmatpush.msra.mxu0 0.0
    %2117 = vmatpush.msra.mxu0 0.0
    %2118 = vmatpush.msra.mxu0 %v2049
    %2119 = vmatpush.msra.mxu0 %v2048
    %2120 = vmatpush.msra.mxu0 %v2047
    %2121 = vmatpush.msra.mxu0 %v2046
    %2122 = vmatpush.msra.mxu0 %v2045
    %2123 = vmatpush.msra.mxu0 %v2044
    %2124 = vmatpush.msra.mxu0 %v2043
    %2125 = vmatpush.msra.mxu0 %v2042
    %2126 = vmatmul.f32.gmra.mxu0 %v2088
    %v2127 = vpop.f32.mrf.mxu0
    %v2128 = vadd.f32 %v2108, %v2127
    %2129 = vdwg.mxu0
    %v2130 = vmax.f32 %v2128, 0.0
    %v2131 = vld [vmem:[%s6] sm:$0xff]
    %v2132 = vld [vmem:[%s6 + $0x8] sm:$0xff]
    %v2133 = vld [vmem:[%s6 + $0x10] sm:$0xff]
    %v2134 = vld [vmem:[%s6 + $0x18] sm:$0xff]
    %vm2135 = vcmask 130048
    %v2137 = vsel %vm2135, %v2130, 0
    %2139 = vmatpush.msra.mxu0 0.0
    %2140 = vmatpush.msra.mxu0 0.0
    %2141 = vmatpush.msra.mxu0 0.0
    %2142 = vmatpush.msra.mxu0 0.0
    %2143 = vmatpush.msra.mxu0 0.0
    %2144 = vmatpush.msra.mxu0 0.0
    %2145 = vmatpush.msra.mxu0 0.0
    %2146 = vmatpush.msra.mxu0 0.0
    %2147 = vmatpush.msra.mxu0 0.0
    %2148 = vmatpush.msra.mxu0 0.0
    %2149 = vmatpush.msra.mxu0 0.0
    %2150 = vmatpush.msra.mxu0 0.0
    %2151 = vmatpush.msra.mxu0 0.0
    %2152 = vmatpush.msra.mxu0 0.0
    %2153 = vmatpush.msra.mxu0 %v2133
    %2154 = vmatpush.msra.mxu0 %v2131
    %2155 = vmatmul.f32.gmra.mxu0 %v2137
    %v2156 = vpop.f32.mrf.mxu0
    %v2157 = vadd.f32 0.0, %v2156
    %2158 = vdwg.mxu0
    %2159 = vmatpush.msra.mxu0 0.0
    %2160 = vmatpush.msra.mxu0 0.0
    %2161 = vmatpush.msra.mxu0 0.0
    %2162 = vmatpush.msra.mxu0 0.0
    %2163 = vmatpush.msra.mxu0 0.0
    %2164 = vmatpush.msra.mxu0 0.0
    %2165 = vmatpush.msra.mxu0 0.0
    %2166 = vmatpush.msra.mxu0 0.0
    %2167 = vmatpush.msra.mxu0 0.0
    %2168 = vmatpush.msra.mxu0 0.0
    %2169 = vmatpush.msra.mxu0 0.0
    %2170 = vmatpush.msra.mxu0 0.0
    %2171 = vmatpush.msra.mxu0 0.0
    %2172 = vmatpush.msra.mxu0 0.0
    %2173 = vmatpush.msra.mxu0 %v2134
    %2174 = vmatpush.msra.mxu0 %v2132
    %2175 = vmatmul.f32.gmra.mxu0 %v2137
    %v2176 = vpop.f32.mrf.mxu0
    %v2177 = vadd.f32 0.0, %v2176
    %2178 = vdwg.mxu0
    %v2179 = vxor.u32 %v2157, 2147483648
    %v2180 = vxor.u32 %v2177, 2147483648
    %v2181 = vmul.f32 %v2179, 1.442695
    %v2182 = vpow.pop %v2181
    %v2183 = vmul.f32 %v2180, 1.442695
    %v2184 = vpow.pop %v2183
    %v2185 = vadd.f32 %v2182, 1.0
    %v2186 = vadd.f32 %v2184, 1.0
    %v2187 = vrcp.pop %v2185
    %v2188 = vmul.f32 %v2185, %v2187
    %v2189 = vsub.f32 1.0, %v2188
    %v2190 = vmul.f32 %v2187, %v2189
    %v2191 = vadd.f32 %v2187, %v2190
    %vm2192 = vweird.f32 %v2185
    %vm2193 = vweird.f32 %v2187
    %vm2194 = vmor %vm2192, %vm2193
    %v2195 = vsel %vm2194, %v2187, %v2191
    %v2196 = vand.u32 2147483647, %v2185
    %vm2197 = vcmp.eq.f32.partialorder %v2196, 8.507059e+37
    %v2198 = vand.u32 %v2185, 2147483648
    %v2199 = vor.u32 1.1754944e-38, %v2198
    %v2200 = vsel %vm2197, %v2199, %v2195
    %v2201 = vmul.f32 1.0, %v2200
    %v2202 = vrcp.pop %v2186
    %v2203 = vmul.f32 %v2186, %v2202
    %v2204 = vsub.f32 1.0, %v2203
    %v2205 = vmul.f32 %v2202, %v2204
    %v2206 = vadd.f32 %v2202, %v2205
    %vm2207 = vweird.f32 %v2186
    %vm2208 = vweird.f32 %v2202
    %vm2209 = vmor %vm2207, %vm2208
    %v2210 = vsel %vm2209, %v2202, %v2206
    %v2211 = vand.u32 2147483647, %v2186
    %vm2212 = vcmp.eq.f32.partialorder %v2211, 8.507059e+37
    %v2213 = vand.u32 %v2186, 2147483648
    %v2214 = vor.u32 1.1754944e-38, %v2213
    %v2215 = vsel %vm2212, %v2214, %v2210
    %v2216 = vmul.f32 1.0, %v2215
    %v2219 = vrot.slane %v2216, 7
    %vm2220 = vcmask 1040384
    %v2221 = vsel %vm2220, %v2201, %v2219
    %v2222 = vsel %vm2066, %v2201, %v2219
    %v2223 = vrot.slane %v2222, 1
    %v2224 = vsel %vm2068, %v2201, %v2219
    %v2225 = vrot.slane %v2224, 2
    %v2226 = vsel %vm2070, %v2201, %v2219
    %v2227 = vrot.slane %v2226, 3
    %v2228 = vsel %vm2072, %v2201, %v2219
    %v2229 = vrot.slane %v2228, 4
    %v2230 = vsel %vm2074, %v2201, %v2219
    %v2231 = vrot.slane %v2230, 5
    %v2232 = vsel %vm2076, %v2201, %v2219
    %v2233 = vrot.slane %v2232, 6
    %v2234 = vsel %vm419, %v2219, %v2201
    %v2235 = vrot.slane %v2234, 7
    %v2236 = vperm.slane %v2221, 0
    %v2237 = vperm.slane %v2221, 1
    %v2238 = vperm.slane %v2223, 0
    %v2239 = vperm.slane %v2223, 1
    %v2240 = vperm.slane %v2225, 0
    %v2241 = vperm.slane %v2225, 1
    %v2242 = vperm.slane %v2227, 0
    %v2243 = vperm.slane %v2227, 1
    %v2244 = vperm.slane %v2229, 0
    %v2245 = vperm.slane %v2229, 1
    %v2246 = vperm.slane %v2231, 0
    %v2247 = vperm.slane %v2231, 1
    %v2248 = vperm.slane %v2233, 0
    %v2249 = vperm.slane %v2233, 1
    %v2250 = vperm.slane %v2235, 0
    %v2251 = vperm.slane %v2235, 1
    %v2268 = vmul.f32 %v1842, %v2236
    %v2269 = vmul.f32 %v1843, %v2237
    %v2270 = vmul.f32 %v1844, %v2236
    %v2271 = vmul.f32 %v1845, %v2237
    %v2272 = vmul.f32 %v1846, %v2238
    %v2273 = vmul.f32 %v1847, %v2239
    %v2274 = vmul.f32 %v1848, %v2238
    %v2275 = vmul.f32 %v1849, %v2239
    %v2276 = vmul.f32 %v1850, %v2240
    %v2277 = vmul.f32 %v1851, %v2241
    %v2278 = vmul.f32 %v1852, %v2240
    %v2279 = vmul.f32 %v1853, %v2241
    %v2280 = vmul.f32 %v1854, %v2242
    %v2281 = vmul.f32 %v1855, %v2243
    %v2282 = vmul.f32 %v1856, %v2242
    %v2283 = vmul.f32 %v1857, %v2243
    %v2284 = vmul.f32 %v1858, %v2244
    %v2285 = vmul.f32 %v1859, %v2245
    %v2286 = vmul.f32 %v1860, %v2244
    %v2287 = vmul.f32 %v1861, %v2245
    %v2288 = vmul.f32 %v1862, %v2246
    %v2289 = vmul.f32 %v1863, %v2247
    %v2290 = vmul.f32 %v1864, %v2246
    %v2291 = vmul.f32 %v1865, %v2247
    %v2292 = vmul.f32 %v1866, %v2248
    %v2293 = vmul.f32 %v1867, %v2249
    %v2294 = vmul.f32 %v1868, %v2248
    %v2295 = vmul.f32 %v1869, %v2249
    %v2296 = vmul.f32 %v1870, %v2250
    %v2297 = vmul.f32 %v1871, %v2251
    %v2298 = vmul.f32 %v1872, %v2250
    %v2299 = vmul.f32 %v1873, %v2251
    %v2300 = vsel %vm1881, %v2269, 0.0
    %v2301 = vadd.f32 %v2268, %v2300
    %2302 = vadd.xlane.f32.xlu0 %v2301
    %v2303 = vpop.xlane.xlu0 %2302
    %v2304 = vsel %vm1881, %v2271, 0.0
    %v2305 = vadd.f32 %v2270, %v2304
    %2306 = vadd.xlane.f32.xlu0 %v2305
    %v2307 = vpop.xlane.xlu0 %2306
    %v2308 = vsel %vm1881, %v2273, 0.0
    %v2309 = vadd.f32 %v2272, %v2308
    %2310 = vadd.xlane.f32.xlu0 %v2309
    %v2311 = vpop.xlane.xlu0 %2310
    %v2312 = vsel %vm1881, %v2275, 0.0
    %v2313 = vadd.f32 %v2274, %v2312
    %2314 = vadd.xlane.f32.xlu0 %v2313
    %v2315 = vpop.xlane.xlu0 %2314
    %v2316 = vsel %vm1881, %v2277, 0.0
    %v2317 = vadd.f32 %v2276, %v2316
    %2318 = vadd.xlane.f32.xlu0 %v2317
    %v2319 = vpop.xlane.xlu0 %2318
    %v2320 = vsel %vm1881, %v2279, 0.0
    %v2321 = vadd.f32 %v2278, %v2320
    %2322 = vadd.xlane.f32.xlu0 %v2321
    %v2323 = vpop.xlane.xlu0 %2322
    %v2324 = vsel %vm1881, %v2281, 0.0
    %v2325 = vadd.f32 %v2280, %v2324
    %2326 = vadd.xlane.f32.xlu0 %v2325
    %v2327 = vpop.xlane.xlu0 %2326
    %v2328 = vsel %vm1881, %v2283, 0.0
    %v2329 = vadd.f32 %v2282, %v2328
    %2330 = vadd.xlane.f32.xlu0 %v2329
    %v2331 = vpop.xlane.xlu0 %2330
    %v2332 = vsel %vm1881, %v2285, 0.0
    %v2333 = vadd.f32 %v2284, %v2332
    %2334 = vadd.xlane.f32.xlu0 %v2333
    %v2335 = vpop.xlane.xlu0 %2334
    %v2336 = vsel %vm1881, %v2287, 0.0
    %v2337 = vadd.f32 %v2286, %v2336
    %2338 = vadd.xlane.f32.xlu0 %v2337
    %v2339 = vpop.xlane.xlu0 %2338
    %v2340 = vsel %vm1881, %v2289, 0.0
    %v2341 = vadd.f32 %v2288, %v2340
    %2342 = vadd.xlane.f32.xlu0 %v2341
    %v2343 = vpop.xlane.xlu0 %2342
    %v2344 = vsel %vm1881, %v2291, 0.0
    %v2345 = vadd.f32 %v2290, %v2344
    %2346 = vadd.xlane.f32.xlu0 %v2345
    %v2347 = vpop.xlane.xlu0 %2346
    %v2348 = vsel %vm1881, %v2293, 0.0
    %v2349 = vadd.f32 %v2292, %v2348
    %2350 = vadd.xlane.f32.xlu0 %v2349
    %v2351 = vpop.xlane.xlu0 %2350
    %v2352 = vsel %vm1881, %v2295, 0.0
    %v2353 = vadd.f32 %v2294, %v2352
    %2354 = vadd.xlane.f32.xlu0 %v2353
    %v2355 = vpop.xlane.xlu0 %2354
    %v2356 = vsel %vm1881, %v2297, 0.0
    %v2357 = vadd.f32 %v2296, %v2356
    %2358 = vadd.xlane.f32.xlu0 %v2357
    %v2359 = vpop.xlane.xlu0 %2358
    %v2360 = vsel %vm1881, %v2299, 0.0
    %v2361 = vadd.f32 %v2298, %v2360
    %2362 = vadd.xlane.f32.xlu0 %v2361
    %v2363 = vpop.xlane.xlu0 %2362
    %v2364 = vrcp.pop 192.0
    %v2365 = vmul.f32 192.0, %v2364
    %v2366 = vsub.f32 1.0, %v2365
    %v2367 = vmul.f32 %v2364, %v2366
    %v2368 = vadd.f32 %v2364, %v2367
    %vm2369 = vweird.f32 %v2364
    %v2370 = vsel %vm2369, %v2364, %v2368
    %v2371 = vmul.f32 %v2303, %v2370
    %v2372 = vmul.f32 %v2307, %v2370
    %v2373 = vmul.f32 %v2311, %v2370
    %v2374 = vmul.f32 %v2315, %v2370
    %v2375 = vmul.f32 %v2319, %v2370
    %v2376 = vmul.f32 %v2323, %v2370
    %v2377 = vmul.f32 %v2327, %v2370
    %v2378 = vmul.f32 %v2331, %v2370
    %v2379 = vmul.f32 %v2335, %v2370
    %v2380 = vmul.f32 %v2339, %v2370
    %v2381 = vmul.f32 %v2343, %v2370
    %v2382 = vmul.f32 %v2347, %v2370
    %v2383 = vmul.f32 %v2351, %v2370
    %v2384 = vmul.f32 %v2355, %v2370
    %v2385 = vmul.f32 %v2359, %v2370
    %v2386 = vmul.f32 %v2363, %v2370
    %v2387 = vsel %vm1881, %v2269, -inf
    %v2388 = vmax.f32 %v2268, %v2387
    %2389 = vmax.xlane.f32.xlu0 %v2388
    %v2390 = vpop.xlane.xlu0 %2389
    %v2391 = vsel %vm1881, %v2271, -inf
    %v2392 = vmax.f32 %v2270, %v2391
    %2393 = vmax.xlane.f32.xlu0 %v2392
    %v2394 = vpop.xlane.xlu0 %2393
    %v2395 = vsel %vm1881, %v2273, -inf
    %v2396 = vmax.f32 %v2272, %v2395
    %2397 = vmax.xlane.f32.xlu0 %v2396
    %v2398 = vpop.xlane.xlu0 %2397
    %v2399 = vsel %vm1881, %v2275, -inf
    %v2400 = vmax.f32 %v2274, %v2399
    %2401 = vmax.xlane.f32.xlu0 %v2400
    %v2402 = vpop.xlane.xlu0 %2401
    %v2403 = vsel %vm1881, %v2277, -inf
    %v2404 = vmax.f32 %v2276, %v2403
    %2405 = vmax.xlane.f32.xlu0 %v2404
    %v2406 = vpop.xlane.xlu0 %2405
    %v2407 = vsel %vm1881, %v2279, -inf
    %v2408 = vmax.f32 %v2278, %v2407
    %2409 = vmax.xlane.f32.xlu0 %v2408
    %v2410 = vpop.xlane.xlu0 %2409
    %v2411 = vsel %vm1881, %v2281, -inf
    %v2412 = vmax.f32 %v2280, %v2411
    %2413 = vmax.xlane.f32.xlu0 %v2412
    %v2414 = vpop.xlane.xlu0 %2413
    %v2415 = vsel %vm1881, %v2283, -inf
    %v2416 = vmax.f32 %v2282, %v2415
    %2417 = vmax.xlane.f32.xlu0 %v2416
    %v2418 = vpop.xlane.xlu0 %2417
    %v2419 = vsel %vm1881, %v2285, -inf
    %v2420 = vmax.f32 %v2284, %v2419
    %2421 = vmax.xlane.f32.xlu0 %v2420
    %v2422 = vpop.xlane.xlu0 %2421
    %v2423 = vsel %vm1881, %v2287, -inf
    %v2424 = vmax.f32 %v2286, %v2423
    %2425 = vmax.xlane.f32.xlu0 %v2424
    %v2426 = vpop.xlane.xlu0 %2425
    %v2427 = vsel %vm1881, %v2289, -inf
    %v2428 = vmax.f32 %v2288, %v2427
    %2429 = vmax.xlane.f32.xlu0 %v2428
    %v2430 = vpop.xlane.xlu0 %2429
    %v2431 = vsel %vm1881, %v2291, -inf
    %v2432 = vmax.f32 %v2290, %v2431
    %2433 = vmax.xlane.f32.xlu0 %v2432
    %v2434 = vpop.xlane.xlu0 %2433
    %v2435 = vsel %vm1881, %v2293, -inf
    %v2436 = vmax.f32 %v2292, %v2435
    %2437 = vmax.xlane.f32.xlu0 %v2436
    %v2438 = vpop.xlane.xlu0 %2437
    %v2439 = vsel %vm1881, %v2295, -inf
    %v2440 = vmax.f32 %v2294, %v2439
    %2441 = vmax.xlane.f32.xlu0 %v2440
    %v2442 = vpop.xlane.xlu0 %2441
    %v2443 = vsel %vm1881, %v2297, -inf
    %v2444 = vmax.f32 %v2296, %v2443
    %2445 = vmax.xlane.f32.xlu0 %v2444
    %v2446 = vpop.xlane.xlu0 %2445
    %v2447 = vsel %vm1881, %v2299, -inf
    %v2448 = vmax.f32 %v2298, %v2447
    %2449 = vmax.xlane.f32.xlu0 %v2448
    %v2450 = vpop.xlane.xlu0 %2449
    %v2467 = vrot.slane %v2371, 5
    %v2468 = vrot.slane %v2372, 5
    %v2469 = vsel %vm1411, %v2467, %v2468
    %v2470 = vrot.slane %v2373, 5
    %v2471 = vrot.slane %v2374, 5
    %v2472 = vsel %vm1411, %v2470, %v2471
    %v2473 = vrot.slane %v2375, 5
    %v2474 = vrot.slane %v2376, 5
    %v2475 = vsel %vm1411, %v2473, %v2474
    %v2476 = vrot.slane %v2377, 5
    %v2477 = vrot.slane %v2378, 5
    %v2478 = vsel %vm1411, %v2476, %v2477
    %v2479 = vrot.slane %v2379, 5
    %v2480 = vrot.slane %v2380, 5
    %v2481 = vsel %vm1411, %v2479, %v2480
    %v2482 = vrot.slane %v2381, 5
    %v2483 = vrot.slane %v2382, 5
    %v2484 = vsel %vm1411, %v2482, %v2483
    %v2485 = vrot.slane %v2383, 5
    %v2486 = vrot.slane %v2384, 5
    %v2487 = vsel %vm1411, %v2485, %v2486
    %v2488 = vrot.slane %v2385, 5
    %v2489 = vrot.slane %v2386, 5
    %v2490 = vsel %vm1411, %v2488, %v2489
    %v2515 = vsel %vm1411, 0.0, %v2467
    %v2516 = vsel %vm1411, 0.0, %v2470
    %v2517 = vsel %vm1411, 0.0, %v2473
    %v2518 = vsel %vm1411, 0.0, %v2476
    %v2519 = vsel %vm1411, 0.0, %v2479
    %v2520 = vsel %vm1411, 0.0, %v2482
    %v2521 = vsel %vm1411, 0.0, %v2485
    %v2522 = vsel %vm1411, 0.0, %v2488
    %v2523 = vsel %vm1411, %v2468, 0.0
    %v2524 = vsel %vm1411, %v2471, 0.0
    %v2525 = vsel %vm1411, %v2474, 0.0
    %v2526 = vsel %vm1411, %v2477, 0.0
    %v2527 = vsel %vm1411, %v2480, 0.0
    %v2528 = vsel %vm1411, %v2483, 0.0
    %v2529 = vsel %vm1411, %v2486, 0.0
    %v2530 = vsel %vm1411, %v2489, 0.0
    %v2547 = vrot.slane %v2390, 5
    %v2548 = vrot.slane %v2394, 5
    %v2549 = vsel %vm1411, %v2547, %v2548
    %v2550 = vrot.slane %v2398, 5
    %v2551 = vrot.slane %v2402, 5
    %v2552 = vsel %vm1411, %v2550, %v2551
    %v2553 = vrot.slane %v2406, 5
    %v2554 = vrot.slane %v2410, 5
    %v2555 = vsel %vm1411, %v2553, %v2554
    %v2556 = vrot.slane %v2414, 5
    %v2557 = vrot.slane %v2418, 5
    %v2558 = vsel %vm1411, %v2556, %v2557
    %v2559 = vrot.slane %v2422, 5
    %v2560 = vrot.slane %v2426, 5
    %v2561 = vsel %vm1411, %v2559, %v2560
    %v2562 = vrot.slane %v2430, 5
    %v2563 = vrot.slane %v2434, 5
    %v2564 = vsel %vm1411, %v2562, %v2563
    %v2565 = vrot.slane %v2438, 5
    %v2566 = vrot.slane %v2442, 5
    %v2567 = vsel %vm1411, %v2565, %v2566
    %v2568 = vrot.slane %v2446, 5
    %v2569 = vrot.slane %v2450, 5
    %v2570 = vsel %vm1411, %v2568, %v2569
    %v2595 = vsel %vm1411, 0.0, %v2547
    %v2596 = vsel %vm1411, 0.0, %v2550
    %v2597 = vsel %vm1411, 0.0, %v2553
    %v2598 = vsel %vm1411, 0.0, %v2556
    %v2599 = vsel %vm1411, 0.0, %v2559
    %v2600 = vsel %vm1411, 0.0, %v2562
    %v2601 = vsel %vm1411, 0.0, %v2565
    %v2602 = vsel %vm1411, 0.0, %v2568
    %v2603 = vsel %vm1411, %v2548, 0.0
    %v2604 = vsel %vm1411, %v2551, 0.0
    %v2605 = vsel %vm1411, %v2554, 0.0
    %v2606 = vsel %vm1411, %v2557, 0.0
    %v2607 = vsel %vm1411, %v2560, 0.0
    %v2608 = vsel %vm1411, %v2563, 0.0
    %v2609 = vsel %vm1411, %v2566, 0.0
    %v2610 = vsel %vm1411, %v2569, 0.0
    %s2611 = sld [smem:[#allocation2]]
    %v2612 = vstv %s2611
    %v2613 = vmul.f32 %v2515, %v2612
    %v2614 = vmul.f32 %v2469, %v2612
    %v2615 = vmul.f32 %v2516, %v2612
    %v2616 = vmul.f32 %v2472, %v2612
    %v2617 = vmul.f32 %v2517, %v2612
    %v2618 = vmul.f32 %v2475, %v2612
    %v2619 = vmul.f32 %v2518, %v2612
    %v2620 = vmul.f32 %v2478, %v2612
    %v2621 = vmul.f32 %v2519, %v2612
    %v2622 = vmul.f32 %v2481, %v2612
    %v2623 = vmul.f32 %v2520, %v2612
    %v2624 = vmul.f32 %v2484, %v2612
    %v2625 = vmul.f32 %v2521, %v2612
    %v2626 = vmul.f32 %v2487, %v2612
    %v2627 = vmul.f32 %v2522, %v2612
    %v2628 = vmul.f32 %v2490, %v2612
    %v2629 = vadd.f32 %v2613, 0.0
    %v2630 = vadd.f32 %v2614, 0.0
    %v2631 = vadd.f32 %v2615, 0.0
    %v2632 = vadd.f32 %v2616, 0.0
    %v2633 = vadd.f32 %v2617, 0.0
    %v2634 = vadd.f32 %v2618, 0.0
    %v2635 = vadd.f32 %v2619, 0.0
    %v2636 = vadd.f32 %v2620, 0.0
    %v2637 = vadd.f32 %v2621, 0.0
    %v2638 = vadd.f32 %v2622, 0.0
    %v2639 = vadd.f32 %v2623, 0.0
    %v2640 = vadd.f32 %v2624, 0.0
    %v2641 = vadd.f32 %v2625, 0.0
    %v2642 = vadd.f32 %v2626, 0.0
    %v2643 = vadd.f32 %v2627, 0.0
    %v2644 = vadd.f32 %v2628, 0.0
    %s2645 = sld [smem:[#allocation2 + $0x7]]
    %v2646 = vstv %s2645
    %v2647 = vmul.f32 %v2595, %v2646
    %v2648 = vmul.f32 %v2549, %v2646
    %v2649 = vmul.f32 %v2596, %v2646
    %v2650 = vmul.f32 %v2552, %v2646
    %v2651 = vmul.f32 %v2597, %v2646
    %v2652 = vmul.f32 %v2555, %v2646
    %v2653 = vmul.f32 %v2598, %v2646
    %v2654 = vmul.f32 %v2558, %v2646
    %v2655 = vmul.f32 %v2599, %v2646
    %v2656 = vmul.f32 %v2561, %v2646
    %v2657 = vmul.f32 %v2600, %v2646
    %v2658 = vmul.f32 %v2564, %v2646
    %v2659 = vmul.f32 %v2601, %v2646
    %v2660 = vmul.f32 %v2567, %v2646
    %v2661 = vmul.f32 %v2602, %v2646
    %v2662 = vmul.f32 %v2570, %v2646
    %v2663 = vadd.f32 %v2629, %v2647
    %v2664 = vadd.f32 %v2630, %v2648
    %v2665 = vadd.f32 %v2631, %v2649
    %v2666 = vadd.f32 %v2632, %v2650
    %v2667 = vadd.f32 %v2633, %v2651
    %v2668 = vadd.f32 %v2634, %v2652
    %v2669 = vadd.f32 %v2635, %v2653
    %v2670 = vadd.f32 %v2636, %v2654
    %v2671 = vadd.f32 %v2637, %v2655
    %v2672 = vadd.f32 %v2638, %v2656
    %v2673 = vadd.f32 %v2639, %v2657
    %v2674 = vadd.f32 %v2640, %v2658
    %v2675 = vadd.f32 %v2641, %v2659
    %v2676 = vadd.f32 %v2642, %v2660
    %v2677 = vadd.f32 %v2643, %v2661
    %v2678 = vadd.f32 %v2644, %v2662
    %s2679 = sld [smem:[#allocation2 + $0x1]]
    %v2680 = vstv %s2679
    %v2681 = vmul.f32 %v2515, %v2680
    %v2682 = vmul.f32 %v2469, %v2680
    %v2683 = vmul.f32 %v2523, %v2680
    %v2684 = vmul.f32 %v2516, %v2680
    %v2685 = vmul.f32 %v2472, %v2680
    %v2686 = vmul.f32 %v2524, %v2680
    %v2687 = vmul.f32 %v2517, %v2680
    %v2688 = vmul.f32 %v2475, %v2680
    %v2689 = vmul.f32 %v2525, %v2680
    %v2690 = vmul.f32 %v2518, %v2680
    %v2691 = vmul.f32 %v2478, %v2680
    %v2692 = vmul.f32 %v2526, %v2680
    %v2693 = vmul.f32 %v2519, %v2680
    %v2694 = vmul.f32 %v2481, %v2680
    %v2695 = vmul.f32 %v2527, %v2680
    %v2696 = vmul.f32 %v2520, %v2680
    %v2697 = vmul.f32 %v2484, %v2680
    %v2698 = vmul.f32 %v2528, %v2680
    %v2699 = vmul.f32 %v2521, %v2680
    %v2700 = vmul.f32 %v2487, %v2680
    %v2701 = vmul.f32 %v2529, %v2680
    %v2702 = vmul.f32 %v2522, %v2680
    %v2703 = vmul.f32 %v2490, %v2680
    %v2704 = vmul.f32 %v2530, %v2680
    %v2729 = vrot.slane %v2681, 1
    %v2730 = vrot.slane %v2682, 1
    %v2731 = vsel %vm419, %v2729, %v2730
    %v2732 = vrot.slane %v2683, 1
    %v2733 = vsel %vm419, %v2730, %v2732
    %v2734 = vrot.slane %v2684, 1
    %v2735 = vrot.slane %v2685, 1
    %v2736 = vsel %vm419, %v2734, %v2735
    %v2737 = vrot.slane %v2686, 1
    %v2738 = vsel %vm419, %v2735, %v2737
    %v2739 = vrot.slane %v2687, 1
    %v2740 = vrot.slane %v2688, 1
    %v2741 = vsel %vm419, %v2739, %v2740
    %v2742 = vrot.slane %v2689, 1
    %v2743 = vsel %vm419, %v2740, %v2742
    %v2744 = vrot.slane %v2690, 1
    %v2745 = vrot.slane %v2691, 1
    %v2746 = vsel %vm419, %v2744, %v2745
    %v2747 = vrot.slane %v2692, 1
    %v2748 = vsel %vm419, %v2745, %v2747
    %v2749 = vrot.slane %v2693, 1
    %v2750 = vrot.slane %v2694, 1
    %v2751 = vsel %vm419, %v2749, %v2750
    %v2752 = vrot.slane %v2695, 1
    %v2753 = vsel %vm419, %v2750, %v2752
    %v2754 = vrot.slane %v2696, 1
    %v2755 = vrot.slane %v2697, 1
    %v2756 = vsel %vm419, %v2754, %v2755
    %v2757 = vrot.slane %v2698, 1
    %v2758 = vsel %vm419, %v2755, %v2757
    %v2759 = vrot.slane %v2699, 1
    %v2760 = vrot.slane %v2700, 1
    %v2761 = vsel %vm419, %v2759, %v2760
    %v2762 = vrot.slane %v2701, 1
    %v2763 = vsel %vm419, %v2760, %v2762
    %v2764 = vrot.slane %v2702, 1
    %v2765 = vrot.slane %v2703, 1
    %v2766 = vsel %vm419, %v2764, %v2765
    %v2767 = vrot.slane %v2704, 1
    %v2768 = vsel %vm419, %v2765, %v2767
    %v2785 = vadd.f32 %v2663, %v2731
    %v2786 = vadd.f32 %v2664, %v2733
    %v2787 = vadd.f32 %v2665, %v2736
    %v2788 = vadd.f32 %v2666, %v2738
    %v2789 = vadd.f32 %v2667, %v2741
    %v2790 = vadd.f32 %v2668, %v2743
    %v2791 = vadd.f32 %v2669, %v2746
    %v2792 = vadd.f32 %v2670, %v2748
    %v2793 = vadd.f32 %v2671, %v2751
    %v2794 = vadd.f32 %v2672, %v2753
    %v2795 = vadd.f32 %v2673, %v2756
    %v2796 = vadd.f32 %v2674, %v2758
    %v2797 = vadd.f32 %v2675, %v2761
    %v2798 = vadd.f32 %v2676, %v2763
    %v2799 = vadd.f32 %v2677, %v2766
    %v2800 = vadd.f32 %v2678, %v2768
    %s2801 = sld [smem:[#allocation2 + $0x8]]
    %v2802 = vstv %s2801
    %v2803 = vmul.f32 %v2595, %v2802
    %v2804 = vmul.f32 %v2549, %v2802
    %v2805 = vmul.f32 %v2603, %v2802
    %v2806 = vmul.f32 %v2596, %v2802
    %v2807 = vmul.f32 %v2552, %v2802
    %v2808 = vmul.f32 %v2604, %v2802
    %v2809 = vmul.f32 %v2597, %v2802
    %v2810 = vmul.f32 %v2555, %v2802
    %v2811 = vmul.f32 %v2605, %v2802
    %v2812 = vmul.f32 %v2598, %v2802
    %v2813 = vmul.f32 %v2558, %v2802
    %v2814 = vmul.f32 %v2606, %v2802
    %v2815 = vmul.f32 %v2599, %v2802
    %v2816 = vmul.f32 %v2561, %v2802
    %v2817 = vmul.f32 %v2607, %v2802
    %v2818 = vmul.f32 %v2600, %v2802
    %v2819 = vmul.f32 %v2564, %v2802
    %v2820 = vmul.f32 %v2608, %v2802
    %v2821 = vmul.f32 %v2601, %v2802
    %v2822 = vmul.f32 %v2567, %v2802
    %v2823 = vmul.f32 %v2609, %v2802
    %v2824 = vmul.f32 %v2602, %v2802
    %v2825 = vmul.f32 %v2570, %v2802
    %v2826 = vmul.f32 %v2610, %v2802
    %v2851 = vrot.slane %v2803, 1
    %v2852 = vrot.slane %v2804, 1
    %v2853 = vsel %vm419, %v2851, %v2852
    %v2854 = vrot.slane %v2805, 1
    %v2855 = vsel %vm419, %v2852, %v2854
    %v2856 = vrot.slane %v2806, 1
    %v2857 = vrot.slane %v2807, 1
    %v2858 = vsel %vm419, %v2856, %v2857
    %v2859 = vrot.slane %v2808, 1
    %v2860 = vsel %vm419, %v2857, %v2859
    %v2861 = vrot.slane %v2809, 1
    %v2862 = vrot.slane %v2810, 1
    %v2863 = vsel %vm419, %v2861, %v2862
    %v2864 = vrot.slane %v2811, 1
    %v2865 = vsel %vm419, %v2862, %v2864
    %v2866 = vrot.slane %v2812, 1
    %v2867 = vrot.slane %v2813, 1
    %v2868 = vsel %vm419, %v2866, %v2867
    %v2869 = vrot.slane %v2814, 1
    %v2870 = vsel %vm419, %v2867, %v2869
    %v2871 = vrot.slane %v2815, 1
    %v2872 = vrot.slane %v2816, 1
    %v2873 = vsel %vm419, %v2871, %v2872
    %v2874 = vrot.slane %v2817, 1
    %v2875 = vsel %vm419, %v2872, %v2874
    %v2876 = vrot.slane %v2818, 1
    %v2877 = vrot.slane %v2819, 1
    %v2878 = vsel %vm419, %v2876, %v2877
    %v2879 = vrot.slane %v2820, 1
    %v2880 = vsel %vm419, %v2877, %v2879
    %v2881 = vrot.slane %v2821, 1
    %v2882 = vrot.slane %v2822, 1
    %v2883 = vsel %vm419, %v2881, %v2882
    %v2884 = vrot.slane %v2823, 1
    %v2885 = vsel %vm419, %v2882, %v2884
    %v2886 = vrot.slane %v2824, 1
    %v2887 = vrot.slane %v2825, 1
    %v2888 = vsel %vm419, %v2886, %v2887
    %v2889 = vrot.slane %v2826, 1
    %v2890 = vsel %vm419, %v2887, %v2889
    %v2907 = vadd.f32 %v2785, %v2853
    %v2908 = vadd.f32 %v2786, %v2855
    %v2909 = vadd.f32 %v2787, %v2858
    %v2910 = vadd.f32 %v2788, %v2860
    %v2911 = vadd.f32 %v2789, %v2863
    %v2912 = vadd.f32 %v2790, %v2865
    %v2913 = vadd.f32 %v2791, %v2868
    %v2914 = vadd.f32 %v2792, %v2870
    %v2915 = vadd.f32 %v2793, %v2873
    %v2916 = vadd.f32 %v2794, %v2875
    %v2917 = vadd.f32 %v2795, %v2878
    %v2918 = vadd.f32 %v2796, %v2880
    %v2919 = vadd.f32 %v2797, %v2883
    %v2920 = vadd.f32 %v2798, %v2885
    %v2921 = vadd.f32 %v2799, %v2888
    %v2922 = vadd.f32 %v2800, %v2890
    %s2923 = sld [smem:[#allocation2 + $0x2]]
    %v2924 = vstv %s2923
    %v2925 = vmul.f32 %v2515, %v2924
    %v2926 = vmul.f32 %v2469, %v2924
    %v2927 = vmul.f32 %v2523, %v2924
    %v2928 = vmul.f32 %v2516, %v2924
    %v2929 = vmul.f32 %v2472, %v2924
    %v2930 = vmul.f32 %v2524, %v2924
    %v2931 = vmul.f32 %v2517, %v2924
    %v2932 = vmul.f32 %v2475, %v2924
    %v2933 = vmul.f32 %v2525, %v2924
    %v2934 = vmul.f32 %v2518, %v2924
    %v2935 = vmul.f32 %v2478, %v2924
    %v2936 = vmul.f32 %v2526, %v2924
    %v2937 = vmul.f32 %v2519, %v2924
    %v2938 = vmul.f32 %v2481, %v2924
    %v2939 = vmul.f32 %v2527, %v2924
    %v2940 = vmul.f32 %v2520, %v2924
    %v2941 = vmul.f32 %v2484, %v2924
    %v2942 = vmul.f32 %v2528, %v2924
    %v2943 = vmul.f32 %v2521, %v2924
    %v2944 = vmul.f32 %v2487, %v2924
    %v2945 = vmul.f32 %v2529, %v2924
    %v2946 = vmul.f32 %v2522, %v2924
    %v2947 = vmul.f32 %v2490, %v2924
    %v2948 = vmul.f32 %v2530, %v2924
    %v2973 = vrot.slane %v2925, 2
    %v2974 = vrot.slane %v2926, 2
    %v2975 = vsel %vm667, %v2973, %v2974
    %v2976 = vrot.slane %v2927, 2
    %v2977 = vsel %vm667, %v2974, %v2976
    %v2978 = vrot.slane %v2928, 2
    %v2979 = vrot.slane %v2929, 2
    %v2980 = vsel %vm667, %v2978, %v2979
    %v2981 = vrot.slane %v2930, 2
    %v2982 = vsel %vm667, %v2979, %v2981
    %v2983 = vrot.slane %v2931, 2
    %v2984 = vrot.slane %v2932, 2
    %v2985 = vsel %vm667, %v2983, %v2984
    %v2986 = vrot.slane %v2933, 2
    %v2987 = vsel %vm667, %v2984, %v2986
    %v2988 = vrot.slane %v2934, 2
    %v2989 = vrot.slane %v2935, 2
    %v2990 = vsel %vm667, %v2988, %v2989
    %v2991 = vrot.slane %v2936, 2
    %v2992 = vsel %vm667, %v2989, %v2991
    %v2993 = vrot.slane %v2937, 2
    %v2994 = vrot.slane %v2938, 2
    %v2995 = vsel %vm667, %v2993, %v2994
    %v2996 = vrot.slane %v2939, 2
    %v2997 = vsel %vm667, %v2994, %v2996
    %v2998 = vrot.slane %v2940, 2
    %v2999 = vrot.slane %v2941, 2
    %v3000 = vsel %vm667, %v2998, %v2999
    %v3001 = vrot.slane %v2942, 2
    %v3002 = vsel %vm667, %v2999, %v3001
    %v3003 = vrot.slane %v2943, 2
    %v3004 = vrot.slane %v2944, 2
    %v3005 = vsel %vm667, %v3003, %v3004
    %v3006 = vrot.slane %v2945, 2
    %v3007 = vsel %vm667, %v3004, %v3006
    %v3008 = vrot.slane %v2946, 2
    %v3009 = vrot.slane %v2947, 2
    %v3010 = vsel %vm667, %v3008, %v3009
    %v3011 = vrot.slane %v2948, 2
    %v3012 = vsel %vm667, %v3009, %v3011
    %v3029 = vadd.f32 %v2907, %v2975
    %v3030 = vadd.f32 %v2908, %v2977
    %v3031 = vadd.f32 %v2909, %v2980
    %v3032 = vadd.f32 %v2910, %v2982
    %v3033 = vadd.f32 %v2911, %v2985
    %v3034 = vadd.f32 %v2912, %v2987
    %v3035 = vadd.f32 %v2913, %v2990
    %v3036 = vadd.f32 %v2914, %v2992
    %v3037 = vadd.f32 %v2915, %v2995
    %v3038 = vadd.f32 %v2916, %v2997
    %v3039 = vadd.f32 %v2917, %v3000
    %v3040 = vadd.f32 %v2918, %v3002
    %v3041 = vadd.f32 %v2919, %v3005
    %v3042 = vadd.f32 %v2920, %v3007
    %v3043 = vadd.f32 %v2921, %v3010
    %v3044 = vadd.f32 %v2922, %v3012
    %s3045 = sld [smem:[#allocation2 + $0x9]]
    %v3046 = vstv %s3045
    %v3047 = vmul.f32 %v2595, %v3046
    %v3048 = vmul.f32 %v2549, %v3046
    %v3049 = vmul.f32 %v2603, %v3046
    %v3050 = vmul.f32 %v2596, %v3046
    %v3051 = vmul.f32 %v2552, %v3046
    %v3052 = vmul.f32 %v2604, %v3046
    %v3053 = vmul.f32 %v2597, %v3046
    %v3054 = vmul.f32 %v2555, %v3046
    %v3055 = vmul.f32 %v2605, %v3046
    %v3056 = vmul.f32 %v2598, %v3046
    %v3057 = vmul.f32 %v2558, %v3046
    %v3058 = vmul.f32 %v2606, %v3046
    %v3059 = vmul.f32 %v2599, %v3046
    %v3060 = vmul.f32 %v2561, %v3046
    %v3061 = vmul.f32 %v2607, %v3046
    %v3062 = vmul.f32 %v2600, %v3046
    %v3063 = vmul.f32 %v2564, %v3046
    %v3064 = vmul.f32 %v2608, %v3046
    %v3065 = vmul.f32 %v2601, %v3046
    %v3066 = vmul.f32 %v2567, %v3046
    %v3067 = vmul.f32 %v2609, %v3046
    %v3068 = vmul.f32 %v2602, %v3046
    %v3069 = vmul.f32 %v2570, %v3046
    %v3070 = vmul.f32 %v2610, %v3046
    %v3095 = vrot.slane %v3047, 2
    %v3096 = vrot.slane %v3048, 2
    %v3097 = vsel %vm667, %v3095, %v3096
    %v3098 = vrot.slane %v3049, 2
    %v3099 = vsel %vm667, %v3096, %v3098
    %v3100 = vrot.slane %v3050, 2
    %v3101 = vrot.slane %v3051, 2
    %v3102 = vsel %vm667, %v3100, %v3101
    %v3103 = vrot.slane %v3052, 2
    %v3104 = vsel %vm667, %v3101, %v3103
    %v3105 = vrot.slane %v3053, 2
    %v3106 = vrot.slane %v3054, 2
    %v3107 = vsel %vm667, %v3105, %v3106
    %v3108 = vrot.slane %v3055, 2
    %v3109 = vsel %vm667, %v3106, %v3108
    %v3110 = vrot.slane %v3056, 2
    %v3111 = vrot.slane %v3057, 2
    %v3112 = vsel %vm667, %v3110, %v3111
    %v3113 = vrot.slane %v3058, 2
    %v3114 = vsel %vm667, %v3111, %v3113
    %v3115 = vrot.slane %v3059, 2
    %v3116 = vrot.slane %v3060, 2
    %v3117 = vsel %vm667, %v3115, %v3116
    %v3118 = vrot.slane %v3061, 2
    %v3119 = vsel %vm667, %v3116, %v3118
    %v3120 = vrot.slane %v3062, 2
    %v3121 = vrot.slane %v3063, 2
    %v3122 = vsel %vm667, %v3120, %v3121
    %v3123 = vrot.slane %v3064, 2
    %v3124 = vsel %vm667, %v3121, %v3123
    %v3125 = vrot.slane %v3065, 2
    %v3126 = vrot.slane %v3066, 2
    %v3127 = vsel %vm667, %v3125, %v3126
    %v3128 = vrot.slane %v3067, 2
    %v3129 = vsel %vm667, %v3126, %v3128
    %v3130 = vrot.slane %v3068, 2
    %v3131 = vrot.slane %v3069, 2
    %v3132 = vsel %vm667, %v3130, %v3131
    %v3133 = vrot.slane %v3070, 2
    %v3134 = vsel %vm667, %v3131, %v3133
    %v3151 = vadd.f32 %v3029, %v3097
    %v3152 = vadd.f32 %v3030, %v3099
    %v3153 = vadd.f32 %v3031, %v3102
    %v3154 = vadd.f32 %v3032, %v3104
    %v3155 = vadd.f32 %v3033, %v3107
    %v3156 = vadd.f32 %v3034, %v3109
    %v3157 = vadd.f32 %v3035, %v3112
    %v3158 = vadd.f32 %v3036, %v3114
    %v3159 = vadd.f32 %v3037, %v3117
    %v3160 = vadd.f32 %v3038, %v3119
    %v3161 = vadd.f32 %v3039, %v3122
    %v3162 = vadd.f32 %v3040, %v3124
    %v3163 = vadd.f32 %v3041, %v3127
    %v3164 = vadd.f32 %v3042, %v3129
    %v3165 = vadd.f32 %v3043, %v3132
    %v3166 = vadd.f32 %v3044, %v3134
    %s3167 = sld [smem:[#allocation2 + $0x3]]
    %v3168 = vstv %s3167
    %v3169 = vmul.f32 %v2515, %v3168
    %v3170 = vmul.f32 %v2469, %v3168
    %v3171 = vmul.f32 %v2523, %v3168
    %v3172 = vmul.f32 %v2516, %v3168
    %v3173 = vmul.f32 %v2472, %v3168
    %v3174 = vmul.f32 %v2524, %v3168
    %v3175 = vmul.f32 %v2517, %v3168
    %v3176 = vmul.f32 %v2475, %v3168
    %v3177 = vmul.f32 %v2525, %v3168
    %v3178 = vmul.f32 %v2518, %v3168
    %v3179 = vmul.f32 %v2478, %v3168
    %v3180 = vmul.f32 %v2526, %v3168
    %v3181 = vmul.f32 %v2519, %v3168
    %v3182 = vmul.f32 %v2481, %v3168
    %v3183 = vmul.f32 %v2527, %v3168
    %v3184 = vmul.f32 %v2520, %v3168
    %v3185 = vmul.f32 %v2484, %v3168
    %v3186 = vmul.f32 %v2528, %v3168
    %v3187 = vmul.f32 %v2521, %v3168
    %v3188 = vmul.f32 %v2487, %v3168
    %v3189 = vmul.f32 %v2529, %v3168
    %v3190 = vmul.f32 %v2522, %v3168
    %v3191 = vmul.f32 %v2490, %v3168
    %v3192 = vmul.f32 %v2530, %v3168
    %v3217 = vrot.slane %v3169, 3
    %v3218 = vrot.slane %v3170, 3
    %v3219 = vsel %vm915, %v3217, %v3218
    %v3220 = vrot.slane %v3171, 3
    %v3221 = vsel %vm915, %v3218, %v3220
    %v3222 = vrot.slane %v3172, 3
    %v3223 = vrot.slane %v3173, 3
    %v3224 = vsel %vm915, %v3222, %v3223
    %v3225 = vrot.slane %v3174, 3
    %v3226 = vsel %vm915, %v3223, %v3225
    %v3227 = vrot.slane %v3175, 3
    %v3228 = vrot.slane %v3176, 3
    %v3229 = vsel %vm915, %v3227, %v3228
    %v3230 = vrot.slane %v3177, 3
    %v3231 = vsel %vm915, %v3228, %v3230
    %v3232 = vrot.slane %v3178, 3
    %v3233 = vrot.slane %v3179, 3
    %v3234 = vsel %vm915, %v3232, %v3233
    %v3235 = vrot.slane %v3180, 3
    %v3236 = vsel %vm915, %v3233, %v3235
    %v3237 = vrot.slane %v3181, 3
    %v3238 = vrot.slane %v3182, 3
    %v3239 = vsel %vm915, %v3237, %v3238
    %v3240 = vrot.slane %v3183, 3
    %v3241 = vsel %vm915, %v3238, %v3240
    %v3242 = vrot.slane %v3184, 3
    %v3243 = vrot.slane %v3185, 3
    %v3244 = vsel %vm915, %v3242, %v3243
    %v3245 = vrot.slane %v3186, 3
    %v3246 = vsel %vm915, %v3243, %v3245
    %v3247 = vrot.slane %v3187, 3
    %v3248 = vrot.slane %v3188, 3
    %v3249 = vsel %vm915, %v3247, %v3248
    %v3250 = vrot.slane %v3189, 3
    %v3251 = vsel %vm915, %v3248, %v3250
    %v3252 = vrot.slane %v3190, 3
    %v3253 = vrot.slane %v3191, 3
    %v3254 = vsel %vm915, %v3252, %v3253
    %v3255 = vrot.slane %v3192, 3
    %v3256 = vsel %vm915, %v3253, %v3255
    %v3273 = vadd.f32 %v3151, %v3219
    %v3274 = vadd.f32 %v3152, %v3221
    %v3275 = vadd.f32 %v3153, %v3224
    %v3276 = vadd.f32 %v3154, %v3226
    %v3277 = vadd.f32 %v3155, %v3229
    %v3278 = vadd.f32 %v3156, %v3231
    %v3279 = vadd.f32 %v3157, %v3234
    %v3280 = vadd.f32 %v3158, %v3236
    %v3281 = vadd.f32 %v3159, %v3239
    %v3282 = vadd.f32 %v3160, %v3241
    %v3283 = vadd.f32 %v3161, %v3244
    %v3284 = vadd.f32 %v3162, %v3246
    %v3285 = vadd.f32 %v3163, %v3249
    %v3286 = vadd.f32 %v3164, %v3251
    %v3287 = vadd.f32 %v3165, %v3254
    %v3288 = vadd.f32 %v3166, %v3256
    %s3289 = sld [smem:[#allocation2 + $0xa]]
    %v3290 = vstv %s3289
    %v3291 = vmul.f32 %v2595, %v3290
    %v3292 = vmul.f32 %v2549, %v3290
    %v3293 = vmul.f32 %v2603, %v3290
    %v3294 = vmul.f32 %v2596, %v3290
    %v3295 = vmul.f32 %v2552, %v3290
    %v3296 = vmul.f32 %v2604, %v3290
    %v3297 = vmul.f32 %v2597, %v3290
    %v3298 = vmul.f32 %v2555, %v3290
    %v3299 = vmul.f32 %v2605, %v3290
    %v3300 = vmul.f32 %v2598, %v3290
    %v3301 = vmul.f32 %v2558, %v3290
    %v3302 = vmul.f32 %v2606, %v3290
    %v3303 = vmul.f32 %v2599, %v3290
    %v3304 = vmul.f32 %v2561, %v3290
    %v3305 = vmul.f32 %v2607, %v3290
    %v3306 = vmul.f32 %v2600, %v3290
    %v3307 = vmul.f32 %v2564, %v3290
    %v3308 = vmul.f32 %v2608, %v3290
    %v3309 = vmul.f32 %v2601, %v3290
    %v3310 = vmul.f32 %v2567, %v3290
    %v3311 = vmul.f32 %v2609, %v3290
    %v3312 = vmul.f32 %v2602, %v3290
    %v3313 = vmul.f32 %v2570, %v3290
    %v3314 = vmul.f32 %v2610, %v3290
    %v3339 = vrot.slane %v3291, 3
    %v3340 = vrot.slane %v3292, 3
    %v3341 = vsel %vm915, %v3339, %v3340
    %v3342 = vrot.slane %v3293, 3
    %v3343 = vsel %vm915, %v3340, %v3342
    %v3344 = vrot.slane %v3294, 3
    %v3345 = vrot.slane %v3295, 3
    %v3346 = vsel %vm915, %v3344, %v3345
    %v3347 = vrot.slane %v3296, 3
    %v3348 = vsel %vm915, %v3345, %v3347
    %v3349 = vrot.slane %v3297, 3
    %v3350 = vrot.slane %v3298, 3
    %v3351 = vsel %vm915, %v3349, %v3350
    %v3352 = vrot.slane %v3299, 3
    %v3353 = vsel %vm915, %v3350, %v3352
    %v3354 = vrot.slane %v3300, 3
    %v3355 = vrot.slane %v3301, 3
    %v3356 = vsel %vm915, %v3354, %v3355
    %v3357 = vrot.slane %v3302, 3
    %v3358 = vsel %vm915, %v3355, %v3357
    %v3359 = vrot.slane %v3303, 3
    %v3360 = vrot.slane %v3304, 3
    %v3361 = vsel %vm915, %v3359, %v3360
    %v3362 = vrot.slane %v3305, 3
    %v3363 = vsel %vm915, %v3360, %v3362
    %v3364 = vrot.slane %v3306, 3
    %v3365 = vrot.slane %v3307, 3
    %v3366 = vsel %vm915, %v3364, %v3365
    %v3367 = vrot.slane %v3308, 3
    %v3368 = vsel %vm915, %v3365, %v3367
    %v3369 = vrot.slane %v3309, 3
    %v3370 = vrot.slane %v3310, 3
    %v3371 = vsel %vm915, %v3369, %v3370
    %v3372 = vrot.slane %v3311, 3
    %v3373 = vsel %vm915, %v3370, %v3372
    %v3374 = vrot.slane %v3312, 3
    %v3375 = vrot.slane %v3313, 3
    %v3376 = vsel %vm915, %v3374, %v3375
    %v3377 = vrot.slane %v3314, 3
    %v3378 = vsel %vm915, %v3375, %v3377
    %v3395 = vadd.f32 %v3273, %v3341
    %v3396 = vadd.f32 %v3274, %v3343
    %v3397 = vadd.f32 %v3275, %v3346
    %v3398 = vadd.f32 %v3276, %v3348
    %v3399 = vadd.f32 %v3277, %v3351
    %v3400 = vadd.f32 %v3278, %v3353
    %v3401 = vadd.f32 %v3279, %v3356
    %v3402 = vadd.f32 %v3280, %v3358
    %v3403 = vadd.f32 %v3281, %v3361
    %v3404 = vadd.f32 %v3282, %v3363
    %v3405 = vadd.f32 %v3283, %v3366
    %v3406 = vadd.f32 %v3284, %v3368
    %v3407 = vadd.f32 %v3285, %v3371
    %v3408 = vadd.f32 %v3286, %v3373
    %v3409 = vadd.f32 %v3287, %v3376
    %v3410 = vadd.f32 %v3288, %v3378
    %s3411 = sld [smem:[#allocation2 + $0x4]]
    %v3412 = vstv %s3411
    %v3413 = vmul.f32 %v2515, %v3412
    %v3414 = vmul.f32 %v2469, %v3412
    %v3415 = vmul.f32 %v2523, %v3412
    %v3416 = vmul.f32 %v2516, %v3412
    %v3417 = vmul.f32 %v2472, %v3412
    %v3418 = vmul.f32 %v2524, %v3412
    %v3419 = vmul.f32 %v2517, %v3412
    %v3420 = vmul.f32 %v2475, %v3412
    %v3421 = vmul.f32 %v2525, %v3412
    %v3422 = vmul.f32 %v2518, %v3412
    %v3423 = vmul.f32 %v2478, %v3412
    %v3424 = vmul.f32 %v2526, %v3412
    %v3425 = vmul.f32 %v2519, %v3412
    %v3426 = vmul.f32 %v2481, %v3412
    %v3427 = vmul.f32 %v2527, %v3412
    %v3428 = vmul.f32 %v2520, %v3412
    %v3429 = vmul.f32 %v2484, %v3412
    %v3430 = vmul.f32 %v2528, %v3412
    %v3431 = vmul.f32 %v2521, %v3412
    %v3432 = vmul.f32 %v2487, %v3412
    %v3433 = vmul.f32 %v2529, %v3412
    %v3434 = vmul.f32 %v2522, %v3412
    %v3435 = vmul.f32 %v2490, %v3412
    %v3436 = vmul.f32 %v2530, %v3412
    %v3461 = vrot.slane %v3413, 4
    %v3462 = vrot.slane %v3414, 4
    %v3463 = vsel %vm1163, %v3461, %v3462
    %v3464 = vrot.slane %v3415, 4
    %v3465 = vsel %vm1163, %v3462, %v3464
    %v3466 = vrot.slane %v3416, 4
    %v3467 = vrot.slane %v3417, 4
    %v3468 = vsel %vm1163, %v3466, %v3467
    %v3469 = vrot.slane %v3418, 4
    %v3470 = vsel %vm1163, %v3467, %v3469
    %v3471 = vrot.slane %v3419, 4
    %v3472 = vrot.slane %v3420, 4
    %v3473 = vsel %vm1163, %v3471, %v3472
    %v3474 = vrot.slane %v3421, 4
    %v3475 = vsel %vm1163, %v3472, %v3474
    %v3476 = vrot.slane %v3422, 4
    %v3477 = vrot.slane %v3423, 4
    %v3478 = vsel %vm1163, %v3476, %v3477
    %v3479 = vrot.slane %v3424, 4
    %v3480 = vsel %vm1163, %v3477, %v3479
    %v3481 = vrot.slane %v3425, 4
    %v3482 = vrot.slane %v3426, 4
    %v3483 = vsel %vm1163, %v3481, %v3482
    %v3484 = vrot.slane %v3427, 4
    %v3485 = vsel %vm1163, %v3482, %v3484
    %v3486 = vrot.slane %v3428, 4
    %v3487 = vrot.slane %v3429, 4
    %v3488 = vsel %vm1163, %v3486, %v3487
    %v3489 = vrot.slane %v3430, 4
    %v3490 = vsel %vm1163, %v3487, %v3489
    %v3491 = vrot.slane %v3431, 4
    %v3492 = vrot.slane %v3432, 4
    %v3493 = vsel %vm1163, %v3491, %v3492
    %v3494 = vrot.slane %v3433, 4
    %v3495 = vsel %vm1163, %v3492, %v3494
    %v3496 = vrot.slane %v3434, 4
    %v3497 = vrot.slane %v3435, 4
    %v3498 = vsel %vm1163, %v3496, %v3497
    %v3499 = vrot.slane %v3436, 4
    %v3500 = vsel %vm1163, %v3497, %v3499
    %v3517 = vadd.f32 %v3395, %v3463
    %v3518 = vadd.f32 %v3396, %v3465
    %v3519 = vadd.f32 %v3397, %v3468
    %v3520 = vadd.f32 %v3398, %v3470
    %v3521 = vadd.f32 %v3399, %v3473
    %v3522 = vadd.f32 %v3400, %v3475
    %v3523 = vadd.f32 %v3401, %v3478
    %v3524 = vadd.f32 %v3402, %v3480
    %v3525 = vadd.f32 %v3403, %v3483
    %v3526 = vadd.f32 %v3404, %v3485
    %v3527 = vadd.f32 %v3405, %v3488
    %v3528 = vadd.f32 %v3406, %v3490
    %v3529 = vadd.f32 %v3407, %v3493
    %v3530 = vadd.f32 %v3408, %v3495
    %v3531 = vadd.f32 %v3409, %v3498
    %v3532 = vadd.f32 %v3410, %v3500
    %s3533 = sld [smem:[#allocation2 + $0xb]]
    %v3534 = vstv %s3533
    %v3535 = vmul.f32 %v2595, %v3534
    %v3536 = vmul.f32 %v2549, %v3534
    %v3537 = vmul.f32 %v2603, %v3534
    %v3538 = vmul.f32 %v2596, %v3534
    %v3539 = vmul.f32 %v2552, %v3534
    %v3540 = vmul.f32 %v2604, %v3534
    %v3541 = vmul.f32 %v2597, %v3534
    %v3542 = vmul.f32 %v2555, %v3534
    %v3543 = vmul.f32 %v2605, %v3534
    %v3544 = vmul.f32 %v2598, %v3534
    %v3545 = vmul.f32 %v2558, %v3534
    %v3546 = vmul.f32 %v2606, %v3534
    %v3547 = vmul.f32 %v2599, %v3534
    %v3548 = vmul.f32 %v2561, %v3534
    %v3549 = vmul.f32 %v2607, %v3534
    %v3550 = vmul.f32 %v2600, %v3534
    %v3551 = vmul.f32 %v2564, %v3534
    %v3552 = vmul.f32 %v2608, %v3534
    %v3553 = vmul.f32 %v2601, %v3534
    %v3554 = vmul.f32 %v2567, %v3534
    %v3555 = vmul.f32 %v2609, %v3534
    %v3556 = vmul.f32 %v2602, %v3534
    %v3557 = vmul.f32 %v2570, %v3534
    %v3558 = vmul.f32 %v2610, %v3534
    %v3583 = vrot.slane %v3535, 4
    %v3584 = vrot.slane %v3536, 4
    %v3585 = vsel %vm1163, %v3583, %v3584
    %v3586 = vrot.slane %v3537, 4
    %v3587 = vsel %vm1163, %v3584, %v3586
    %v3588 = vrot.slane %v3538, 4
    %v3589 = vrot.slane %v3539, 4
    %v3590 = vsel %vm1163, %v3588, %v3589
    %v3591 = vrot.slane %v3540, 4
    %v3592 = vsel %vm1163, %v3589, %v3591
    %v3593 = vrot.slane %v3541, 4
    %v3594 = vrot.slane %v3542, 4
    %v3595 = vsel %vm1163, %v3593, %v3594
    %v3596 = vrot.slane %v3543, 4
    %v3597 = vsel %vm1163, %v3594, %v3596
    %v3598 = vrot.slane %v3544, 4
    %v3599 = vrot.slane %v3545, 4
    %v3600 = vsel %vm1163, %v3598, %v3599
    %v3601 = vrot.slane %v3546, 4
    %v3602 = vsel %vm1163, %v3599, %v3601
    %v3603 = vrot.slane %v3547, 4
    %v3604 = vrot.slane %v3548, 4
    %v3605 = vsel %vm1163, %v3603, %v3604
    %v3606 = vrot.slane %v3549, 4
    %v3607 = vsel %vm1163, %v3604, %v3606
    %v3608 = vrot.slane %v3550, 4
    %v3609 = vrot.slane %v3551, 4
    %v3610 = vsel %vm1163, %v3608, %v3609
    %v3611 = vrot.slane %v3552, 4
    %v3612 = vsel %vm1163, %v3609, %v3611
    %v3613 = vrot.slane %v3553, 4
    %v3614 = vrot.slane %v3554, 4
    %v3615 = vsel %vm1163, %v3613, %v3614
    %v3616 = vrot.slane %v3555, 4
    %v3617 = vsel %vm1163, %v3614, %v3616
    %v3618 = vrot.slane %v3556, 4
    %v3619 = vrot.slane %v3557, 4
    %v3620 = vsel %vm1163, %v3618, %v3619
    %v3621 = vrot.slane %v3558, 4
    %v3622 = vsel %vm1163, %v3619, %v3621
    %v3639 = vadd.f32 %v3517, %v3585
    %v3640 = vadd.f32 %v3518, %v3587
    %v3641 = vadd.f32 %v3519, %v3590
    %v3642 = vadd.f32 %v3520, %v3592
    %v3643 = vadd.f32 %v3521, %v3595
    %v3644 = vadd.f32 %v3522, %v3597
    %v3645 = vadd.f32 %v3523, %v3600
    %v3646 = vadd.f32 %v3524, %v3602
    %v3647 = vadd.f32 %v3525, %v3605
    %v3648 = vadd.f32 %v3526, %v3607
    %v3649 = vadd.f32 %v3527, %v3610
    %v3650 = vadd.f32 %v3528, %v3612
    %v3651 = vadd.f32 %v3529, %v3615
    %v3652 = vadd.f32 %v3530, %v3617
    %v3653 = vadd.f32 %v3531, %v3620
    %v3654 = vadd.f32 %v3532, %v3622
    %s3655 = sld [smem:[#allocation2 + $0x5]]
    %v3656 = vstv %s3655
    %v3657 = vmul.f32 %v2515, %v3656
    %v3658 = vmul.f32 %v2469, %v3656
    %v3659 = vmul.f32 %v2523, %v3656
    %v3660 = vmul.f32 %v2516, %v3656
    %v3661 = vmul.f32 %v2472, %v3656
    %v3662 = vmul.f32 %v2524, %v3656
    %v3663 = vmul.f32 %v2517, %v3656
    %v3664 = vmul.f32 %v2475, %v3656
    %v3665 = vmul.f32 %v2525, %v3656
    %v3666 = vmul.f32 %v2518, %v3656
    %v3667 = vmul.f32 %v2478, %v3656
    %v3668 = vmul.f32 %v2526, %v3656
    %v3669 = vmul.f32 %v2519, %v3656
    %v3670 = vmul.f32 %v2481, %v3656
    %v3671 = vmul.f32 %v2527, %v3656
    %v3672 = vmul.f32 %v2520, %v3656
    %v3673 = vmul.f32 %v2484, %v3656
    %v3674 = vmul.f32 %v2528, %v3656
    %v3675 = vmul.f32 %v2521, %v3656
    %v3676 = vmul.f32 %v2487, %v3656
    %v3677 = vmul.f32 %v2529, %v3656
    %v3678 = vmul.f32 %v2522, %v3656
    %v3679 = vmul.f32 %v2490, %v3656
    %v3680 = vmul.f32 %v2530, %v3656
    %v3705 = vrot.slane %v3657, 5
    %v3706 = vrot.slane %v3658, 5
    %v3707 = vsel %vm1411, %v3705, %v3706
    %v3708 = vrot.slane %v3659, 5
    %v3709 = vsel %vm1411, %v3706, %v3708
    %v3710 = vrot.slane %v3660, 5
    %v3711 = vrot.slane %v3661, 5
    %v3712 = vsel %vm1411, %v3710, %v3711
    %v3713 = vrot.slane %v3662, 5
    %v3714 = vsel %vm1411, %v3711, %v3713
    %v3715 = vrot.slane %v3663, 5
    %v3716 = vrot.slane %v3664, 5
    %v3717 = vsel %vm1411, %v3715, %v3716
    %v3718 = vrot.slane %v3665, 5
    %v3719 = vsel %vm1411, %v3716, %v3718
    %v3720 = vrot.slane %v3666, 5
    %v3721 = vrot.slane %v3667, 5
    %v3722 = vsel %vm1411, %v3720, %v3721
    %v3723 = vrot.slane %v3668, 5
    %v3724 = vsel %vm1411, %v3721, %v3723
    %v3725 = vrot.slane %v3669, 5
    %v3726 = vrot.slane %v3670, 5
    %v3727 = vsel %vm1411, %v3725, %v3726
    %v3728 = vrot.slane %v3671, 5
    %v3729 = vsel %vm1411, %v3726, %v3728
    %v3730 = vrot.slane %v3672, 5
    %v3731 = vrot.slane %v3673, 5
    %v3732 = vsel %vm1411, %v3730, %v3731
    %v3733 = vrot.slane %v3674, 5
    %v3734 = vsel %vm1411, %v3731, %v3733
    %v3735 = vrot.slane %v3675, 5
    %v3736 = vrot.slane %v3676, 5
    %v3737 = vsel %vm1411, %v3735, %v3736
    %v3738 = vrot.slane %v3677, 5
    %v3739 = vsel %vm1411, %v3736, %v3738
    %v3740 = vrot.slane %v3678, 5
    %v3741 = vrot.slane %v3679, 5
    %v3742 = vsel %vm1411, %v3740, %v3741
    %v3743 = vrot.slane %v3680, 5
    %v3744 = vsel %vm1411, %v3741, %v3743
    %v3761 = vadd.f32 %v3639, %v3707
    %v3762 = vadd.f32 %v3640, %v3709
    %v3763 = vadd.f32 %v3641, %v3712
    %v3764 = vadd.f32 %v3642, %v3714
    %v3765 = vadd.f32 %v3643, %v3717
    %v3766 = vadd.f32 %v3644, %v3719
    %v3767 = vadd.f32 %v3645, %v3722
    %v3768 = vadd.f32 %v3646, %v3724
    %v3769 = vadd.f32 %v3647, %v3727
    %v3770 = vadd.f32 %v3648, %v3729
    %v3771 = vadd.f32 %v3649, %v3732
    %v3772 = vadd.f32 %v3650, %v3734
    %v3773 = vadd.f32 %v3651, %v3737
    %v3774 = vadd.f32 %v3652, %v3739
    %v3775 = vadd.f32 %v3653, %v3742
    %v3776 = vadd.f32 %v3654, %v3744
    %s3777 = sld [smem:[#allocation2 + $0xc]]
    %v3778 = vstv %s3777
    %v3779 = vmul.f32 %v2595, %v3778
    %v3780 = vmul.f32 %v2549, %v3778
    %v3781 = vmul.f32 %v2603, %v3778
    %v3782 = vmul.f32 %v2596, %v3778
    %v3783 = vmul.f32 %v2552, %v3778
    %v3784 = vmul.f32 %v2604, %v3778
    %v3785 = vmul.f32 %v2597, %v3778
    %v3786 = vmul.f32 %v2555, %v3778
    %v3787 = vmul.f32 %v2605, %v3778
    %v3788 = vmul.f32 %v2598, %v3778
    %v3789 = vmul.f32 %v2558, %v3778
    %v3790 = vmul.f32 %v2606, %v3778
    %v3791 = vmul.f32 %v2599, %v3778
    %v3792 = vmul.f32 %v2561, %v3778
    %v3793 = vmul.f32 %v2607, %v3778
    %v3794 = vmul.f32 %v2600, %v3778
    %v3795 = vmul.f32 %v2564, %v3778
    %v3796 = vmul.f32 %v2608, %v3778
    %v3797 = vmul.f32 %v2601, %v3778
    %v3798 = vmul.f32 %v2567, %v3778
    %v3799 = vmul.f32 %v2609, %v3778
    %v3800 = vmul.f32 %v2602, %v3778
    %v3801 = vmul.f32 %v2570, %v3778
    %v3802 = vmul.f32 %v2610, %v3778
    %v3827 = vrot.slane %v3779, 5
    %v3828 = vrot.slane %v3780, 5
    %v3829 = vsel %vm1411, %v3827, %v3828
    %v3830 = vrot.slane %v3781, 5
    %v3831 = vsel %vm1411, %v3828, %v3830
    %v3832 = vrot.slane %v3782, 5
    %v3833 = vrot.slane %v3783, 5
    %v3834 = vsel %vm1411, %v3832, %v3833
    %v3835 = vrot.slane %v3784, 5
    %v3836 = vsel %vm1411, %v3833, %v3835
    %v3837 = vrot.slane %v3785, 5
    %v3838 = vrot.slane %v3786, 5
    %v3839 = vsel %vm1411, %v3837, %v3838
    %v3840 = vrot.slane %v3787, 5
    %v3841 = vsel %vm1411, %v3838, %v3840
    %v3842 = vrot.slane %v3788, 5
    %v3843 = vrot.slane %v3789, 5
    %v3844 = vsel %vm1411, %v3842, %v3843
    %v3845 = vrot.slane %v3790, 5
    %v3846 = vsel %vm1411, %v3843, %v3845
    %v3847 = vrot.slane %v3791, 5
    %v3848 = vrot.slane %v3792, 5
    %v3849 = vsel %vm1411, %v3847, %v3848
    %v3850 = vrot.slane %v3793, 5
    %v3851 = vsel %vm1411, %v3848, %v3850
    %v3852 = vrot.slane %v3794, 5
    %v3853 = vrot.slane %v3795, 5
    %v3854 = vsel %vm1411, %v3852, %v3853
    %v3855 = vrot.slane %v3796, 5
    %v3856 = vsel %vm1411, %v3853, %v3855
    %v3857 = vrot.slane %v3797, 5
    %v3858 = vrot.slane %v3798, 5
    %v3859 = vsel %vm1411, %v3857, %v3858
    %v3860 = vrot.slane %v3799, 5
    %v3861 = vsel %vm1411, %v3858, %v3860
    %v3862 = vrot.slane %v3800, 5
    %v3863 = vrot.slane %v3801, 5
    %v3864 = vsel %vm1411, %v3862, %v3863
    %v3865 = vrot.slane %v3802, 5
    %v3866 = vsel %vm1411, %v3863, %v3865
    %v3883 = vadd.f32 %v3761, %v3829
    %v3884 = vadd.f32 %v3762, %v3831
    %v3885 = vadd.f32 %v3763, %v3834
    %v3886 = vadd.f32 %v3764, %v3836
    %v3887 = vadd.f32 %v3765, %v3839
    %v3888 = vadd.f32 %v3766, %v3841
    %v3889 = vadd.f32 %v3767, %v3844
    %v3890 = vadd.f32 %v3768, %v3846
    %v3891 = vadd.f32 %v3769, %v3849
    %v3892 = vadd.f32 %v3770, %v3851
    %v3893 = vadd.f32 %v3771, %v3854
    %v3894 = vadd.f32 %v3772, %v3856
    %v3895 = vadd.f32 %v3773, %v3859
    %v3896 = vadd.f32 %v3774, %v3861
    %v3897 = vadd.f32 %v3775, %v3864
    %v3898 = vadd.f32 %v3776, %v3866
    %s3899 = sld [smem:[#allocation2 + $0x6]]
    %v3900 = vstv %s3899
    %v3901 = vmul.f32 %v2515, %v3900
    %v3902 = vmul.f32 %v2469, %v3900
    %v3903 = vmul.f32 %v2523, %v3900
    %v3904 = vmul.f32 %v2516, %v3900
    %v3905 = vmul.f32 %v2472, %v3900
    %v3906 = vmul.f32 %v2524, %v3900
    %v3907 = vmul.f32 %v2517, %v3900
    %v3908 = vmul.f32 %v2475, %v3900
    %v3909 = vmul.f32 %v2525, %v3900
    %v3910 = vmul.f32 %v2518, %v3900
    %v3911 = vmul.f32 %v2478, %v3900
    %v3912 = vmul.f32 %v2526, %v3900
    %v3913 = vmul.f32 %v2519, %v3900
    %v3914 = vmul.f32 %v2481, %v3900
    %v3915 = vmul.f32 %v2527, %v3900
    %v3916 = vmul.f32 %v2520, %v3900
    %v3917 = vmul.f32 %v2484, %v3900
    %v3918 = vmul.f32 %v2528, %v3900
    %v3919 = vmul.f32 %v2521, %v3900
    %v3920 = vmul.f32 %v2487, %v3900
    %v3921 = vmul.f32 %v2529, %v3900
    %v3922 = vmul.f32 %v2522, %v3900
    %v3923 = vmul.f32 %v2490, %v3900
    %v3924 = vmul.f32 %v2530, %v3900
    %v3949 = vrot.slane %v3901, 6
    %v3950 = vrot.slane %v3902, 6
    %v3951 = vsel %vm1659, %v3949, %v3950
    %v3952 = vrot.slane %v3903, 6
    %v3953 = vsel %vm1659, %v3950, %v3952
    %v3954 = vrot.slane %v3904, 6
    %v3955 = vrot.slane %v3905, 6
    %v3956 = vsel %vm1659, %v3954, %v3955
    %v3957 = vrot.slane %v3906, 6
    %v3958 = vsel %vm1659, %v3955, %v3957
    %v3959 = vrot.slane %v3907, 6
    %v3960 = vrot.slane %v3908, 6
    %v3961 = vsel %vm1659, %v3959, %v3960
    %v3962 = vrot.slane %v3909, 6
    %v3963 = vsel %vm1659, %v3960, %v3962
    %v3964 = vrot.slane %v3910, 6
    %v3965 = vrot.slane %v3911, 6
    %v3966 = vsel %vm1659, %v3964, %v3965
    %v3967 = vrot.slane %v3912, 6
    %v3968 = vsel %vm1659, %v3965, %v3967
    %v3969 = vrot.slane %v3913, 6
    %v3970 = vrot.slane %v3914, 6
    %v3971 = vsel %vm1659, %v3969, %v3970
    %v3972 = vrot.slane %v3915, 6
    %v3973 = vsel %vm1659, %v3970, %v3972
    %v3974 = vrot.slane %v3916, 6
    %v3975 = vrot.slane %v3917, 6
    %v3976 = vsel %vm1659, %v3974, %v3975
    %v3977 = vrot.slane %v3918, 6
    %v3978 = vsel %vm1659, %v3975, %v3977
    %v3979 = vrot.slane %v3919, 6
    %v3980 = vrot.slane %v3920, 6
    %v3981 = vsel %vm1659, %v3979, %v3980
    %v3982 = vrot.slane %v3921, 6
    %v3983 = vsel %vm1659, %v3980, %v3982
    %v3984 = vrot.slane %v3922, 6
    %v3985 = vrot.slane %v3923, 6
    %v3986 = vsel %vm1659, %v3984, %v3985
    %v3987 = vrot.slane %v3924, 6
    %v3988 = vsel %vm1659, %v3985, %v3987
    %v4005 = vadd.f32 %v3883, %v3951
    %v4006 = vadd.f32 %v3884, %v3953
    %v4007 = vadd.f32 %v3885, %v3956
    %v4008 = vadd.f32 %v3886, %v3958
    %v4009 = vadd.f32 %v3887, %v3961
    %v4010 = vadd.f32 %v3888, %v3963
    %v4011 = vadd.f32 %v3889, %v3966
    %v4012 = vadd.f32 %v3890, %v3968
    %v4013 = vadd.f32 %v3891, %v3971
    %v4014 = vadd.f32 %v3892, %v3973
    %v4015 = vadd.f32 %v3893, %v3976
    %v4016 = vadd.f32 %v3894, %v3978
    %v4017 = vadd.f32 %v3895, %v3981
    %v4018 = vadd.f32 %v3896, %v3983
    %v4019 = vadd.f32 %v3897, %v3986
    %v4020 = vadd.f32 %v3898, %v3988
    %s4021 = sld [smem:[#allocation2 + $0xd]]
    %v4022 = vstv %s4021
    %v4023 = vmul.f32 %v2595, %v4022
    %v4024 = vmul.f32 %v2549, %v4022
    %v4025 = vmul.f32 %v2603, %v4022
    %v4026 = vmul.f32 %v2596, %v4022
    %v4027 = vmul.f32 %v2552, %v4022
    %v4028 = vmul.f32 %v2604, %v4022
    %v4029 = vmul.f32 %v2597, %v4022
    %v4030 = vmul.f32 %v2555, %v4022
    %v4031 = vmul.f32 %v2605, %v4022
    %v4032 = vmul.f32 %v2598, %v4022
    %v4033 = vmul.f32 %v2558, %v4022
    %v4034 = vmul.f32 %v2606, %v4022
    %v4035 = vmul.f32 %v2599, %v4022
    %v4036 = vmul.f32 %v2561, %v4022
    %v4037 = vmul.f32 %v2607, %v4022
    %v4038 = vmul.f32 %v2600, %v4022
    %v4039 = vmul.f32 %v2564, %v4022
    %v4040 = vmul.f32 %v2608, %v4022
    %v4041 = vmul.f32 %v2601, %v4022
    %v4042 = vmul.f32 %v2567, %v4022
    %v4043 = vmul.f32 %v2609, %v4022
    %v4044 = vmul.f32 %v2602, %v4022
    %v4045 = vmul.f32 %v2570, %v4022
    %v4046 = vmul.f32 %v2610, %v4022
    %v4071 = vrot.slane %v4023, 6
    %v4072 = vrot.slane %v4024, 6
    %v4073 = vsel %vm1659, %v4071, %v4072
    %v4074 = vrot.slane %v4025, 6
    %v4075 = vsel %vm1659, %v4072, %v4074
    %v4076 = vrot.slane %v4026, 6
    %v4077 = vrot.slane %v4027, 6
    %v4078 = vsel %vm1659, %v4076, %v4077
    %v4079 = vrot.slane %v4028, 6
    %v4080 = vsel %vm1659, %v4077, %v4079
    %v4081 = vrot.slane %v4029, 6
    %v4082 = vrot.slane %v4030, 6
    %v4083 = vsel %vm1659, %v4081, %v4082
    %v4084 = vrot.slane %v4031, 6
    %v4085 = vsel %vm1659, %v4082, %v4084
    %v4086 = vrot.slane %v4032, 6
    %v4087 = vrot.slane %v4033, 6
    %v4088 = vsel %vm1659, %v4086, %v4087
    %v4089 = vrot.slane %v4034, 6
    %v4090 = vsel %vm1659, %v4087, %v4089
    %v4091 = vrot.slane %v4035, 6
    %v4092 = vrot.slane %v4036, 6
    %v4093 = vsel %vm1659, %v4091, %v4092
    %v4094 = vrot.slane %v4037, 6
    %v4095 = vsel %vm1659, %v4092, %v4094
    %v4096 = vrot.slane %v4038, 6
    %v4097 = vrot.slane %v4039, 6
    %v4098 = vsel %vm1659, %v4096, %v4097
    %v4099 = vrot.slane %v4040, 6
    %v4100 = vsel %vm1659, %v4097, %v4099
    %v4101 = vrot.slane %v4041, 6
    %v4102 = vrot.slane %v4042, 6
    %v4103 = vsel %vm1659, %v4101, %v4102
    %v4104 = vrot.slane %v4043, 6
    %v4105 = vsel %vm1659, %v4102, %v4104
    %v4106 = vrot.slane %v4044, 6
    %v4107 = vrot.slane %v4045, 6
    %v4108 = vsel %vm1659, %v4106, %v4107
    %v4109 = vrot.slane %v4046, 6
    %v4110 = vsel %vm1659, %v4107, %v4109
    %v4127 = vadd.f32 %v4005, %v4073
    %v4128 = vadd.f32 %v4006, %v4075
    %v4129 = vadd.f32 %v4007, %v4078
    %v4130 = vadd.f32 %v4008, %v4080
    %v4131 = vadd.f32 %v4009, %v4083
    %v4132 = vadd.f32 %v4010, %v4085
    %v4133 = vadd.f32 %v4011, %v4088
    %v4134 = vadd.f32 %v4012, %v4090
    %v4135 = vadd.f32 %v4013, %v4093
    %v4136 = vadd.f32 %v4014, %v4095
    %v4137 = vadd.f32 %v4015, %v4098
    %v4138 = vadd.f32 %v4016, %v4100
    %v4139 = vadd.f32 %v4017, %v4103
    %v4140 = vadd.f32 %v4018, %v4105
    %v4141 = vadd.f32 %v4019, %v4108
    %v4142 = vadd.f32 %v4020, %v4110
    %v4143 = vxor.u32 %v4127, 2147483648
    %v4144 = vxor.u32 %v4128, 2147483648
    %v4145 = vxor.u32 %v4129, 2147483648
    %v4146 = vxor.u32 %v4130, 2147483648
    %v4147 = vxor.u32 %v4131, 2147483648
    %v4148 = vxor.u32 %v4132, 2147483648
    %v4149 = vxor.u32 %v4133, 2147483648
    %v4150 = vxor.u32 %v4134, 2147483648
    %v4151 = vxor.u32 %v4135, 2147483648
    %v4152 = vxor.u32 %v4136, 2147483648
    %v4153 = vxor.u32 %v4137, 2147483648
    %v4154 = vxor.u32 %v4138, 2147483648
    %v4155 = vxor.u32 %v4139, 2147483648
    %v4156 = vxor.u32 %v4140, 2147483648
    %v4157 = vxor.u32 %v4141, 2147483648
    %v4158 = vxor.u32 %v4142, 2147483648
    %v4159 = vmul.f32 %v4143, 1.442695
    %v4160 = vpow.pop %v4159
    %v4161 = vmul.f32 %v4144, 1.442695
    %v4162 = vpow.pop %v4161
    %v4163 = vmul.f32 %v4145, 1.442695
    %v4164 = vpow.pop %v4163
    %v4165 = vmul.f32 %v4146, 1.442695
    %v4166 = vpow.pop %v4165
    %v4167 = vmul.f32 %v4147, 1.442695
    %v4168 = vpow.pop %v4167
    %v4169 = vmul.f32 %v4148, 1.442695
    %v4170 = vpow.pop %v4169
    %v4171 = vmul.f32 %v4149, 1.442695
    %v4172 = vpow.pop %v4171
    %v4173 = vmul.f32 %v4150, 1.442695
    %v4174 = vpow.pop %v4173
    %v4175 = vmul.f32 %v4151, 1.442695
    %v4176 = vpow.pop %v4175
    %v4177 = vmul.f32 %v4152, 1.442695
    %v4178 = vpow.pop %v4177
    %v4179 = vmul.f32 %v4153, 1.442695
    %v4180 = vpow.pop %v4179
    %v4181 = vmul.f32 %v4154, 1.442695
    %v4182 = vpow.pop %v4181
    %v4183 = vmul.f32 %v4155, 1.442695
    %v4184 = vpow.pop %v4183
    %v4185 = vmul.f32 %v4156, 1.442695
    %v4186 = vpow.pop %v4185
    %v4187 = vmul.f32 %v4157, 1.442695
    %v4188 = vpow.pop %v4187
    %v4189 = vmul.f32 %v4158, 1.442695
    %v4190 = vpow.pop %v4189
    %v4191 = vadd.f32 %v4160, 1.0
    %v4192 = vadd.f32 %v4162, 1.0
    %v4193 = vadd.f32 %v4164, 1.0
    %v4194 = vadd.f32 %v4166, 1.0
    %v4195 = vadd.f32 %v4168, 1.0
    %v4196 = vadd.f32 %v4170, 1.0
    %v4197 = vadd.f32 %v4172, 1.0
    %v4198 = vadd.f32 %v4174, 1.0
    %v4199 = vadd.f32 %v4176, 1.0
    %v4200 = vadd.f32 %v4178, 1.0
    %v4201 = vadd.f32 %v4180, 1.0
    %v4202 = vadd.f32 %v4182, 1.0
    %v4203 = vadd.f32 %v4184, 1.0
    %v4204 = vadd.f32 %v4186, 1.0
    %v4205 = vadd.f32 %v4188, 1.0
    %v4206 = vadd.f32 %v4190, 1.0
    %v4207 = vrcp.pop %v4191
    %v4208 = vmul.f32 %v4191, %v4207
    %v4209 = vsub.f32 1.0, %v4208
    %v4210 = vmul.f32 %v4207, %v4209
    %v4211 = vadd.f32 %v4207, %v4210
    %vm4212 = vweird.f32 %v4191
    %vm4213 = vweird.f32 %v4207
    %vm4214 = vmor %vm4212, %vm4213
    %v4215 = vsel %vm4214, %v4207, %v4211
    %v4216 = vand.u32 2147483647, %v4191
    %vm4217 = vcmp.eq.f32.partialorder %v4216, 8.507059e+37
    %v4218 = vand.u32 %v4191, 2147483648
    %v4219 = vor.u32 1.1754944e-38, %v4218
    %v4220 = vsel %vm4217, %v4219, %v4215
    %v4221 = vmul.f32 1.0, %v4220
    %v4222 = vrcp.pop %v4192
    %v4223 = vmul.f32 %v4192, %v4222
    %v4224 = vsub.f32 1.0, %v4223
    %v4225 = vmul.f32 %v4222, %v4224
    %v4226 = vadd.f32 %v4222, %v4225
    %vm4227 = vweird.f32 %v4192
    %vm4228 = vweird.f32 %v4222
    %vm4229 = vmor %vm4227, %vm4228
    %v4230 = vsel %vm4229, %v4222, %v4226
    %v4231 = vand.u32 2147483647, %v4192
    %vm4232 = vcmp.eq.f32.partialorder %v4231, 8.507059e+37
    %v4233 = vand.u32 %v4192, 2147483648
    %v4234 = vor.u32 1.1754944e-38, %v4233
    %v4235 = vsel %vm4232, %v4234, %v4230
    %v4236 = vmul.f32 1.0, %v4235
    %v4237 = vrcp.pop %v4193
    %v4238 = vmul.f32 %v4193, %v4237
    %v4239 = vsub.f32 1.0, %v4238
    %v4240 = vmul.f32 %v4237, %v4239
    %v4241 = vadd.f32 %v4237, %v4240
    %vm4242 = vweird.f32 %v4193
    %vm4243 = vweird.f32 %v4237
    %vm4244 = vmor %vm4242, %vm4243
    %v4245 = vsel %vm4244, %v4237, %v4241
    %v4246 = vand.u32 2147483647, %v4193
    %vm4247 = vcmp.eq.f32.partialorder %v4246, 8.507059e+37
    %v4248 = vand.u32 %v4193, 2147483648
    %v4249 = vor.u32 1.1754944e-38, %v4248
    %v4250 = vsel %vm4247, %v4249, %v4245
    %v4251 = vmul.f32 1.0, %v4250
    %v4252 = vrcp.pop %v4194
    %v4253 = vmul.f32 %v4194, %v4252
    %v4254 = vsub.f32 1.0, %v4253
    %v4255 = vmul.f32 %v4252, %v4254
    %v4256 = vadd.f32 %v4252, %v4255
    %vm4257 = vweird.f32 %v4194
    %vm4258 = vweird.f32 %v4252
    %vm4259 = vmor %vm4257, %vm4258
    %v4260 = vsel %vm4259, %v4252, %v4256
    %v4261 = vand.u32 2147483647, %v4194
    %vm4262 = vcmp.eq.f32.partialorder %v4261, 8.507059e+37
    %v4263 = vand.u32 %v4194, 2147483648
    %v4264 = vor.u32 1.1754944e-38, %v4263
    %v4265 = vsel %vm4262, %v4264, %v4260
    %v4266 = vmul.f32 1.0, %v4265
    %v4267 = vrcp.pop %v4195
    %v4268 = vmul.f32 %v4195, %v4267
    %v4269 = vsub.f32 1.0, %v4268
    %v4270 = vmul.f32 %v4267, %v4269
    %v4271 = vadd.f32 %v4267, %v4270
    %vm4272 = vweird.f32 %v4195
    %vm4273 = vweird.f32 %v4267
    %vm4274 = vmor %vm4272, %vm4273
    %v4275 = vsel %vm4274, %v4267, %v4271
    %v4276 = vand.u32 2147483647, %v4195
    %vm4277 = vcmp.eq.f32.partialorder %v4276, 8.507059e+37
    %v4278 = vand.u32 %v4195, 2147483648
    %v4279 = vor.u32 1.1754944e-38, %v4278
    %v4280 = vsel %vm4277, %v4279, %v4275
    %v4281 = vmul.f32 1.0, %v4280
    %v4282 = vrcp.pop %v4196
    %v4283 = vmul.f32 %v4196, %v4282
    %v4284 = vsub.f32 1.0, %v4283
    %v4285 = vmul.f32 %v4282, %v4284
    %v4286 = vadd.f32 %v4282, %v4285
    %vm4287 = vweird.f32 %v4196
    %vm4288 = vweird.f32 %v4282
    %vm4289 = vmor %vm4287, %vm4288
    %v4290 = vsel %vm4289, %v4282, %v4286
    %v4291 = vand.u32 2147483647, %v4196
    %vm4292 = vcmp.eq.f32.partialorder %v4291, 8.507059e+37
    %v4293 = vand.u32 %v4196, 2147483648
    %v4294 = vor.u32 1.1754944e-38, %v4293
    %v4295 = vsel %vm4292, %v4294, %v4290
    %v4296 = vmul.f32 1.0, %v4295
    %v4297 = vrcp.pop %v4197
    %v4298 = vmul.f32 %v4197, %v4297
    %v4299 = vsub.f32 1.0, %v4298
    %v4300 = vmul.f32 %v4297, %v4299
    %v4301 = vadd.f32 %v4297, %v4300
    %vm4302 = vweird.f32 %v4197
    %vm4303 = vweird.f32 %v4297
    %vm4304 = vmor %vm4302, %vm4303
    %v4305 = vsel %vm4304, %v4297, %v4301
    %v4306 = vand.u32 2147483647, %v4197
    %vm4307 = vcmp.eq.f32.partialorder %v4306, 8.507059e+37
    %v4308 = vand.u32 %v4197, 2147483648
    %v4309 = vor.u32 1.1754944e-38, %v4308
    %v4310 = vsel %vm4307, %v4309, %v4305
    %v4311 = vmul.f32 1.0, %v4310
    %v4312 = vrcp.pop %v4198
    %v4313 = vmul.f32 %v4198, %v4312
    %v4314 = vsub.f32 1.0, %v4313
    %v4315 = vmul.f32 %v4312, %v4314
    %v4316 = vadd.f32 %v4312, %v4315
    %vm4317 = vweird.f32 %v4198
    %vm4318 = vweird.f32 %v4312
    %vm4319 = vmor %vm4317, %vm4318
    %v4320 = vsel %vm4319, %v4312, %v4316
    %v4321 = vand.u32 2147483647, %v4198
    %vm4322 = vcmp.eq.f32.partialorder %v4321, 8.507059e+37
    %v4323 = vand.u32 %v4198, 2147483648
    %v4324 = vor.u32 1.1754944e-38, %v4323
    %v4325 = vsel %vm4322, %v4324, %v4320
    %v4326 = vmul.f32 1.0, %v4325
    %v4327 = vrcp.pop %v4199
    %v4328 = vmul.f32 %v4199, %v4327
    %v4329 = vsub.f32 1.0, %v4328
    %v4330 = vmul.f32 %v4327, %v4329
    %v4331 = vadd.f32 %v4327, %v4330
    %vm4332 = vweird.f32 %v4199
    %vm4333 = vweird.f32 %v4327
    %vm4334 = vmor %vm4332, %vm4333
    %v4335 = vsel %vm4334, %v4327, %v4331
    %v4336 = vand.u32 2147483647, %v4199
    %vm4337 = vcmp.eq.f32.partialorder %v4336, 8.507059e+37
    %v4338 = vand.u32 %v4199, 2147483648
    %v4339 = vor.u32 1.1754944e-38, %v4338
    %v4340 = vsel %vm4337, %v4339, %v4335
    %v4341 = vmul.f32 1.0, %v4340
    %v4342 = vrcp.pop %v4200
    %v4343 = vmul.f32 %v4200, %v4342
    %v4344 = vsub.f32 1.0, %v4343
    %v4345 = vmul.f32 %v4342, %v4344
    %v4346 = vadd.f32 %v4342, %v4345
    %vm4347 = vweird.f32 %v4200
    %vm4348 = vweird.f32 %v4342
    %vm4349 = vmor %vm4347, %vm4348
    %v4350 = vsel %vm4349, %v4342, %v4346
    %v4351 = vand.u32 2147483647, %v4200
    %vm4352 = vcmp.eq.f32.partialorder %v4351, 8.507059e+37
    %v4353 = vand.u32 %v4200, 2147483648
    %v4354 = vor.u32 1.1754944e-38, %v4353
    %v4355 = vsel %vm4352, %v4354, %v4350
    %v4356 = vmul.f32 1.0, %v4355
    %v4357 = vrcp.pop %v4201
    %v4358 = vmul.f32 %v4201, %v4357
    %v4359 = vsub.f32 1.0, %v4358
    %v4360 = vmul.f32 %v4357, %v4359
    %v4361 = vadd.f32 %v4357, %v4360
    %vm4362 = vweird.f32 %v4201
    %vm4363 = vweird.f32 %v4357
    %vm4364 = vmor %vm4362, %vm4363
    %v4365 = vsel %vm4364, %v4357, %v4361
    %v4366 = vand.u32 2147483647, %v4201
    %vm4367 = vcmp.eq.f32.partialorder %v4366, 8.507059e+37
    %v4368 = vand.u32 %v4201, 2147483648
    %v4369 = vor.u32 1.1754944e-38, %v4368
    %v4370 = vsel %vm4367, %v4369, %v4365
    %v4371 = vmul.f32 1.0, %v4370
    %v4372 = vrcp.pop %v4202
    %v4373 = vmul.f32 %v4202, %v4372
    %v4374 = vsub.f32 1.0, %v4373
    %v4375 = vmul.f32 %v4372, %v4374
    %v4376 = vadd.f32 %v4372, %v4375
    %vm4377 = vweird.f32 %v4202
    %vm4378 = vweird.f32 %v4372
    %vm4379 = vmor %vm4377, %vm4378
    %v4380 = vsel %vm4379, %v4372, %v4376
    %v4381 = vand.u32 2147483647, %v4202
    %vm4382 = vcmp.eq.f32.partialorder %v4381, 8.507059e+37
    %v4383 = vand.u32 %v4202, 2147483648
    %v4384 = vor.u32 1.1754944e-38, %v4383
    %v4385 = vsel %vm4382, %v4384, %v4380
    %v4386 = vmul.f32 1.0, %v4385
    %v4387 = vrcp.pop %v4203
    %v4388 = vmul.f32 %v4203, %v4387
    %v4389 = vsub.f32 1.0, %v4388
    %v4390 = vmul.f32 %v4387, %v4389
    %v4391 = vadd.f32 %v4387, %v4390
    %vm4392 = vweird.f32 %v4203
    %vm4393 = vweird.f32 %v4387
    %vm4394 = vmor %vm4392, %vm4393
    %v4395 = vsel %vm4394, %v4387, %v4391
    %v4396 = vand.u32 2147483647, %v4203
    %vm4397 = vcmp.eq.f32.partialorder %v4396, 8.507059e+37
    %v4398 = vand.u32 %v4203, 2147483648
    %v4399 = vor.u32 1.1754944e-38, %v4398
    %v4400 = vsel %vm4397, %v4399, %v4395
    %v4401 = vmul.f32 1.0, %v4400
    %v4402 = vrcp.pop %v4204
    %v4403 = vmul.f32 %v4204, %v4402
    %v4404 = vsub.f32 1.0, %v4403
    %v4405 = vmul.f32 %v4402, %v4404
    %v4406 = vadd.f32 %v4402, %v4405
    %vm4407 = vweird.f32 %v4204
    %vm4408 = vweird.f32 %v4402
    %vm4409 = vmor %vm4407, %vm4408
    %v4410 = vsel %vm4409, %v4402, %v4406
    %v4411 = vand.u32 2147483647, %v4204
    %vm4412 = vcmp.eq.f32.partialorder %v4411, 8.507059e+37
    %v4413 = vand.u32 %v4204, 2147483648
    %v4414 = vor.u32 1.1754944e-38, %v4413
    %v4415 = vsel %vm4412, %v4414, %v4410
    %v4416 = vmul.f32 1.0, %v4415
    %v4417 = vrcp.pop %v4205
    %v4418 = vmul.f32 %v4205, %v4417
    %v4419 = vsub.f32 1.0, %v4418
    %v4420 = vmul.f32 %v4417, %v4419
    %v4421 = vadd.f32 %v4417, %v4420
    %vm4422 = vweird.f32 %v4205
    %vm4423 = vweird.f32 %v4417
    %vm4424 = vmor %vm4422, %vm4423
    %v4425 = vsel %vm4424, %v4417, %v4421
    %v4426 = vand.u32 2147483647, %v4205
    %vm4427 = vcmp.eq.f32.partialorder %v4426, 8.507059e+37
    %v4428 = vand.u32 %v4205, 2147483648
    %v4429 = vor.u32 1.1754944e-38, %v4428
    %v4430 = vsel %vm4427, %v4429, %v4425
    %v4431 = vmul.f32 1.0, %v4430
    %v4432 = vrcp.pop %v4206
    %v4433 = vmul.f32 %v4206, %v4432
    %v4434 = vsub.f32 1.0, %v4433
    %v4435 = vmul.f32 %v4432, %v4434
    %v4436 = vadd.f32 %v4432, %v4435
    %vm4437 = vweird.f32 %v4206
    %vm4438 = vweird.f32 %v4432
    %vm4439 = vmor %vm4437, %vm4438
    %v4440 = vsel %vm4439, %v4432, %v4436
    %v4441 = vand.u32 2147483647, %v4206
    %vm4442 = vcmp.eq.f32.partialorder %v4441, 8.507059e+37
    %v4443 = vand.u32 %v4206, 2147483648
    %v4444 = vor.u32 1.1754944e-38, %v4443
    %v4445 = vsel %vm4442, %v4444, %v4440
    %v4446 = vmul.f32 1.0, %v4445
    %4448 = vset.pattern.permute.xlu0 0
    %4449 = vperm.xlu0 %4448, %v4221
    %v4450 = vpop.permute.xlu0 %4449
    %4453 = vset.pattern.permute.xlu0 0
    %4454 = vperm.xlu0 %4453, %v4236
    %v4455 = vpop.permute.xlu0 %4454
    %4458 = vset.pattern.permute.xlu0 0
    %4459 = vperm.xlu0 %4458, %v4251
    %v4460 = vpop.permute.xlu0 %4459
    %4463 = vset.pattern.permute.xlu0 0
    %4464 = vperm.xlu0 %4463, %v4266
    %v4465 = vpop.permute.xlu0 %4464
    %4468 = vset.pattern.permute.xlu0 0
    %4469 = vperm.xlu0 %4468, %v4281
    %v4470 = vpop.permute.xlu0 %4469
    %4473 = vset.pattern.permute.xlu0 0
    %4474 = vperm.xlu0 %4473, %v4296
    %v4475 = vpop.permute.xlu0 %4474
    %4478 = vset.pattern.permute.xlu0 0
    %4479 = vperm.xlu0 %4478, %v4311
    %v4480 = vpop.permute.xlu0 %4479
    %4483 = vset.pattern.permute.xlu0 0
    %4484 = vperm.xlu0 %4483, %v4326
    %v4485 = vpop.permute.xlu0 %4484
    %4488 = vset.pattern.permute.xlu0 0
    %4489 = vperm.xlu0 %4488, %v4341
    %v4490 = vpop.permute.xlu0 %4489
    %4493 = vset.pattern.permute.xlu0 0
    %4494 = vperm.xlu0 %4493, %v4356
    %v4495 = vpop.permute.xlu0 %4494
    %4498 = vset.pattern.permute.xlu0 0
    %4499 = vperm.xlu0 %4498, %v4371
    %v4500 = vpop.permute.xlu0 %4499
    %4503 = vset.pattern.permute.xlu0 0
    %4504 = vperm.xlu0 %4503, %v4386
    %v4505 = vpop.permute.xlu0 %4504
    %4508 = vset.pattern.permute.xlu0 0
    %4509 = vperm.xlu0 %4508, %v4401
    %v4510 = vpop.permute.xlu0 %4509
    %4513 = vset.pattern.permute.xlu0 0
    %4514 = vperm.xlu0 %4513, %v4416
    %v4515 = vpop.permute.xlu0 %4514
    %4518 = vset.pattern.permute.xlu0 0
    %4519 = vperm.xlu0 %4518, %v4431
    %v4520 = vpop.permute.xlu0 %4519
    %4523 = vset.pattern.permute.xlu0 0
    %4524 = vperm.xlu0 %4523, %v4446
    %v4525 = vpop.permute.xlu0 %4524
    %v4527 = vmul.f32 %v2268, %v4450
    %v4528 = vmul.f32 %v2269, %v4450
    %v4529 = vmul.f32 %v2270, %v4455
    %v4530 = vmul.f32 %v2271, %v4455
    %v4531 = vmul.f32 %v2272, %v4460
    %v4532 = vmul.f32 %v2273, %v4460
    %v4533 = vmul.f32 %v2274, %v4465
    %v4534 = vmul.f32 %v2275, %v4465
    %v4535 = vmul.f32 %v2276, %v4470
    %v4536 = vmul.f32 %v2277, %v4470
    %v4537 = vmul.f32 %v2278, %v4475
    %v4538 = vmul.f32 %v2279, %v4475
    %v4539 = vmul.f32 %v2280, %v4480
    %v4540 = vmul.f32 %v2281, %v4480
    %v4541 = vmul.f32 %v2282, %v4485
    %v4542 = vmul.f32 %v2283, %v4485
    %v4543 = vmul.f32 %v2284, %v4490
    %v4544 = vmul.f32 %v2285, %v4490
    %v4545 = vmul.f32 %v2286, %v4495
    %v4546 = vmul.f32 %v2287, %v4495
    %v4547 = vmul.f32 %v2288, %v4500
    %v4548 = vmul.f32 %v2289, %v4500
    %v4549 = vmul.f32 %v2290, %v4505
    %v4550 = vmul.f32 %v2291, %v4505
    %v4551 = vmul.f32 %v2292, %v4510
    %v4552 = vmul.f32 %v2293, %v4510
    %v4553 = vmul.f32 %v2294, %v4515
    %v4554 = vmul.f32 %v2295, %v4515
    %v4555 = vmul.f32 %v2296, %v4520
    %v4556 = vmul.f32 %v2297, %v4520
    %v4557 = vmul.f32 %v2298, %v4525
    %v4558 = vmul.f32 %v2299, %v4525
    %v4559 = vld [vmem:[%s7 + $0x3] sm:$0x1]
    %v4560 = vld [vmem:[%s7 + $0x4] sm:$0x1]
    %v4593 = vrot.slane %v4527, 7
    %v4594 = vrot.slane %v4528, 7
    %v4595 = vrot.slane %v4529, 7
    %v4596 = vsel %vm2220, %v4593, %v4595
    %v4597 = vrot.slane %v4530, 7
    %v4598 = vsel %vm2220, %v4594, %v4597
    %v4599 = vrot.slane %v4531, 7
    %v4600 = vrot.slane %v4532, 7
    %v4601 = vrot.slane %v4533, 7
    %v4602 = vsel %vm2220, %v4599, %v4601
    %v4603 = vrot.slane %v4534, 7
    %v4604 = vsel %vm2220, %v4600, %v4603
    %v4605 = vrot.slane %v4535, 7
    %v4606 = vrot.slane %v4536, 7
    %v4607 = vrot.slane %v4537, 7
    %v4608 = vsel %vm2220, %v4605, %v4607
    %v4609 = vrot.slane %v4538, 7
    %v4610 = vsel %vm2220, %v4606, %v4609
    %v4611 = vrot.slane %v4539, 7
    %v4612 = vrot.slane %v4540, 7
    %v4613 = vrot.slane %v4541, 7
    %v4614 = vsel %vm2220, %v4611, %v4613
    %v4615 = vrot.slane %v4542, 7
    %v4616 = vsel %vm2220, %v4612, %v4615
    %v4617 = vrot.slane %v4543, 7
    %v4618 = vrot.slane %v4544, 7
    %v4619 = vrot.slane %v4545, 7
    %v4620 = vsel %vm2220, %v4617, %v4619
    %v4621 = vrot.slane %v4546, 7
    %v4622 = vsel %vm2220, %v4618, %v4621
    %v4623 = vrot.slane %v4547, 7
    %v4624 = vrot.slane %v4548, 7
    %v4625 = vrot.slane %v4549, 7
    %v4626 = vsel %vm2220, %v4623, %v4625
    %v4627 = vrot.slane %v4550, 7
    %v4628 = vsel %vm2220, %v4624, %v4627
    %v4629 = vrot.slane %v4551, 7
    %v4630 = vrot.slane %v4552, 7
    %v4631 = vrot.slane %v4553, 7
    %v4632 = vsel %vm2220, %v4629, %v4631
    %v4633 = vrot.slane %v4554, 7
    %v4634 = vsel %vm2220, %v4630, %v4633
    %v4635 = vrot.slane %v4555, 7
    %v4636 = vrot.slane %v4556, 7
    %v4637 = vrot.slane %v4557, 7
    %v4638 = vsel %vm2220, %v4635, %v4637
    %v4639 = vrot.slane %v4558, 7
    %v4640 = vsel %vm2220, %v4636, %v4639
    %v4689 = vsel %vm2220, 0.0, %v4593
    %v4690 = vsel %vm2220, 0.0, %v4594
    %v4691 = vsel %vm2220, 0.0, %v4599
    %v4692 = vsel %vm2220, 0.0, %v4600
    %v4693 = vsel %vm2220, 0.0, %v4605
    %v4694 = vsel %vm2220, 0.0, %v4606
    %v4695 = vsel %vm2220, 0.0, %v4611
    %v4696 = vsel %vm2220, 0.0, %v4612
    %v4697 = vsel %vm2220, 0.0, %v4617
    %v4698 = vsel %vm2220, 0.0, %v4618
    %v4699 = vsel %vm2220, 0.0, %v4623
    %v4700 = vsel %vm2220, 0.0, %v4624
    %v4701 = vsel %vm2220, 0.0, %v4629
    %v4702 = vsel %vm2220, 0.0, %v4630
    %v4703 = vsel %vm2220, 0.0, %v4635
    %v4704 = vsel %vm2220, 0.0, %v4636
    %v4705 = vsel %vm2220, %v4595, 0.0
    %v4706 = vsel %vm2220, %v4597, 0.0
    %v4707 = vsel %vm2220, %v4601, 0.0
    %v4708 = vsel %vm2220, %v4603, 0.0
    %v4709 = vsel %vm2220, %v4607, 0.0
    %v4710 = vsel %vm2220, %v4609, 0.0
    %v4711 = vsel %vm2220, %v4613, 0.0
    %v4712 = vsel %vm2220, %v4615, 0.0
    %v4713 = vsel %vm2220, %v4619, 0.0
    %v4714 = vsel %vm2220, %v4621, 0.0
    %v4715 = vsel %vm2220, %v4625, 0.0
    %v4716 = vsel %vm2220, %v4627, 0.0
    %v4717 = vsel %vm2220, %v4631, 0.0
    %v4718 = vsel %vm2220, %v4633, 0.0
    %v4719 = vsel %vm2220, %v4637, 0.0
    %v4720 = vsel %vm2220, %v4639, 0.0
    %v4721 = vpack.c.bf16 %v4596, %v4689
    %v4722 = vpack.c.bf16 %v4598, %v4690
    %v4723 = vpack.c.bf16 %v4602, %v4691
    %v4724 = vpack.c.bf16 %v4604, %v4692
    %v4725 = vpack.c.bf16 %v4608, %v4693
    %v4726 = vpack.c.bf16 %v4610, %v4694
    %v4727 = vpack.c.bf16 %v4614, %v4695
    %v4728 = vpack.c.bf16 %v4616, %v4696
    %v4729 = vpack.c.bf16 %v4620, %v4697
    %v4730 = vpack.c.bf16 %v4622, %v4698
    %v4731 = vpack.c.bf16 %v4626, %v4699
    %v4732 = vpack.c.bf16 %v4628, %v4700
    %v4733 = vpack.c.bf16 %v4632, %v4701
    %v4734 = vpack.c.bf16 %v4634, %v4702
    %v4735 = vpack.c.bf16 %v4638, %v4703
    %v4736 = vpack.c.bf16 %v4640, %v4704
    %v4737 = vld [vmem:[%s2 + $0x10] sm:$0xf]
    %v4738 = vld [vmem:[%s2 + $0x14] sm:$0xf]
    %v4739 = vld [vmem:[%s2 + $0x18] sm:$0xf]
    %v4740 = vld [vmem:[%s2 + $0x1c] sm:$0xf]
    %v4741 = vld [vmem:[%s2 + $0x20] sm:$0xf]
    %v4742 = vld [vmem:[%s2 + $0x24] sm:$0xf]
    %v4743 = vld [vmem:[%s2 + $0x28] sm:$0xf]
    %v4744 = vld [vmem:[%s2 + $0x2c] sm:$0xf]
    %v4745 = vld [vmem:[%s2 + $0x30] sm:$0xf]
    %v4746 = vld [vmem:[%s2 + $0x34] sm:$0xf]
    %v4747 = vld [vmem:[%s2 + $0x38] sm:$0xf]
    %v4748 = vld [vmem:[%s2 + $0x3c] sm:$0xf]
    %v4749 = vld [vmem:[%s2 + $0x40] sm:$0xf]
    %v4750 = vld [vmem:[%s2 + $0x44] sm:$0xf]
    %v4751 = vld [vmem:[%s2 + $0x48] sm:$0xf]
    %v4752 = vld [vmem:[%s2 + $0x4c] sm:$0xf]
    %v4753 = vld [vmem:[%s2 + $0x50] sm:$0xf]
    %v4754 = vld [vmem:[%s2 + $0x54] sm:$0xf]
    %v4755 = vld [vmem:[%s2 + $0x58] sm:$0xf]
    %v4756 = vld [vmem:[%s2 + $0x5c] sm:$0xf]
    %v4757 = vld [vmem:[%s2 + $0x60] sm:$0xf]
    %v4758 = vld [vmem:[%s2 + $0x64] sm:$0xf]
    %v4759 = vld [vmem:[%s2 + $0x68] sm:$0xf]
    %v4760 = vld [vmem:[%s2 + $0x6c] sm:$0xf]
    %v4793 = vrot.slane %v4689, 1
    %v4794 = vrot.slane %v4596, 1
    %v4795 = vsel %vm419, %v4793, %v4794
    %v4796 = vrot.slane %v4690, 1
    %v4797 = vrot.slane %v4598, 1
    %v4798 = vsel %vm419, %v4796, %v4797
    %v4799 = vrot.slane %v4705, 1
    %v4800 = vsel %vm419, %v4794, %v4799
    %v4801 = vrot.slane %v4706, 1
    %v4802 = vsel %vm419, %v4797, %v4801
    %v4803 = vrot.slane %v4691, 1
    %v4804 = vrot.slane %v4602, 1
    %v4805 = vsel %vm419, %v4803, %v4804
    %v4806 = vrot.slane %v4692, 1
    %v4807 = vrot.slane %v4604, 1
    %v4808 = vsel %vm419, %v4806, %v4807
    %v4809 = vrot.slane %v4707, 1
    %v4810 = vsel %vm419, %v4804, %v4809
    %v4811 = vrot.slane %v4708, 1
    %v4812 = vsel %vm419, %v4807, %v4811
    %v4813 = vrot.slane %v4693, 1
    %v4814 = vrot.slane %v4608, 1
    %v4815 = vsel %vm419, %v4813, %v4814
    %v4816 = vrot.slane %v4694, 1
    %v4817 = vrot.slane %v4610, 1
    %v4818 = vsel %vm419, %v4816, %v4817
    %v4819 = vrot.slane %v4709, 1
    %v4820 = vsel %vm419, %v4814, %v4819
    %v4821 = vrot.slane %v4710, 1
    %v4822 = vsel %vm419, %v4817, %v4821
    %v4823 = vrot.slane %v4695, 1
    %v4824 = vrot.slane %v4614, 1
    %v4825 = vsel %vm419, %v4823, %v4824
    %v4826 = vrot.slane %v4696, 1
    %v4827 = vrot.slane %v4616, 1
    %v4828 = vsel %vm419, %v4826, %v4827
    %v4829 = vrot.slane %v4711, 1
    %v4830 = vsel %vm419, %v4824, %v4829
    %v4831 = vrot.slane %v4712, 1
    %v4832 = vsel %vm419, %v4827, %v4831
    %v4833 = vrot.slane %v4697, 1
    %v4834 = vrot.slane %v4620, 1
    %v4835 = vsel %vm419, %v4833, %v4834
    %v4836 = vrot.slane %v4698, 1
    %v4837 = vrot.slane %v4622, 1
    %v4838 = vsel %vm419, %v4836, %v4837
    %v4839 = vrot.slane %v4713, 1
    %v4840 = vsel %vm419, %v4834, %v4839
    %v4841 = vrot.slane %v4714, 1
    %v4842 = vsel %vm419, %v4837, %v4841
    %v4843 = vrot.slane %v4699, 1
    %v4844 = vrot.slane %v4626, 1
    %v4845 = vsel %vm419, %v4843, %v4844
    %v4846 = vrot.slane %v4700, 1
    %v4847 = vrot.slane %v4628, 1
    %v4848 = vsel %vm419, %v4846, %v4847
    %v4849 = vrot.slane %v4715, 1
    %v4850 = vsel %vm419, %v4844, %v4849
    %v4851 = vrot.slane %v4716, 1
    %v4852 = vsel %vm419, %v4847, %v4851
    %v4853 = vrot.slane %v4701, 1
    %v4854 = vrot.slane %v4632, 1
    %v4855 = vsel %vm419, %v4853, %v4854
    %v4856 = vrot.slane %v4702, 1
    %v4857 = vrot.slane %v4634, 1
    %v4858 = vsel %vm419, %v4856, %v4857
    %v4859 = vrot.slane %v4717, 1
    %v4860 = vsel %vm419, %v4854, %v4859
    %v4861 = vrot.slane %v4718, 1
    %v4862 = vsel %vm419, %v4857, %v4861
    %v4863 = vrot.slane %v4703, 1
    %v4864 = vrot.slane %v4638, 1
    %v4865 = vsel %vm419, %v4863, %v4864
    %v4866 = vrot.slane %v4704, 1
    %v4867 = vrot.slane %v4640, 1
    %v4868 = vsel %vm419, %v4866, %v4867
    %v4869 = vrot.slane %v4719, 1
    %v4870 = vsel %vm419, %v4864, %v4869
    %v4871 = vrot.slane %v4720, 1
    %v4872 = vsel %vm419, %v4867, %v4871
    %v4905 = vpack.c.bf16 %v4800, %v4795
    %v4906 = vpack.c.bf16 %v4802, %v4798
    %v4907 = vpack.c.bf16 %v4810, %v4805
    %v4908 = vpack.c.bf16 %v4812, %v4808
    %v4909 = vpack.c.bf16 %v4820, %v4815
    %v4910 = vpack.c.bf16 %v4822, %v4818
    %v4911 = vpack.c.bf16 %v4830, %v4825
    %v4912 = vpack.c.bf16 %v4832, %v4828
    %v4913 = vpack.c.bf16 %v4840, %v4835
    %v4914 = vpack.c.bf16 %v4842, %v4838
    %v4915 = vpack.c.bf16 %v4850, %v4845
    %v4916 = vpack.c.bf16 %v4852, %v4848
    %v4917 = vpack.c.bf16 %v4860, %v4855
    %v4918 = vpack.c.bf16 %v4862, %v4858
    %v4919 = vpack.c.bf16 %v4870, %v4865
    %v4920 = vpack.c.bf16 %v4872, %v4868
    %v4921 = vld [vmem:[%s2 + $0x70] sm:$0xf]
    %v4922 = vld [vmem:[%s2 + $0x74] sm:$0xf]
    %v4923 = vld [vmem:[%s2 + $0x78] sm:$0xf]
    %v4924 = vld [vmem:[%s2 + $0x7c] sm:$0xf]
    %v4925 = vld [vmem:[%s2 + $0x80] sm:$0xf]
    %v4926 = vld [vmem:[%s2 + $0x84] sm:$0xf]
    %v4927 = vld [vmem:[%s2 + $0x88] sm:$0xf]
    %v4928 = vld [vmem:[%s2 + $0x8c] sm:$0xf]
    %v4929 = vld [vmem:[%s2 + $0x90] sm:$0xf]
    %v4930 = vld [vmem:[%s2 + $0x94] sm:$0xf]
    %v4931 = vld [vmem:[%s2 + $0x98] sm:$0xf]
    %v4932 = vld [vmem:[%s2 + $0x9c] sm:$0xf]
    %v4933 = vld [vmem:[%s2 + $0xa0] sm:$0xf]
    %v4934 = vld [vmem:[%s2 + $0xa4] sm:$0xf]
    %v4935 = vld [vmem:[%s2 + $0xa8] sm:$0xf]
    %v4936 = vld [vmem:[%s2 + $0xac] sm:$0xf]
    %v4937 = vld [vmem:[%s2 + $0xb0] sm:$0xf]
    %v4938 = vld [vmem:[%s2 + $0xb4] sm:$0xf]
    %v4939 = vld [vmem:[%s2 + $0xb8] sm:$0xf]
    %v4940 = vld [vmem:[%s2 + $0xbc] sm:$0xf]
    %v4941 = vld [vmem:[%s2 + $0xc0] sm:$0xf]
    %v4942 = vld [vmem:[%s2 + $0xc4] sm:$0xf]
    %v4943 = vld [vmem:[%s2 + $0xc8] sm:$0xf]
    %v4944 = vld [vmem:[%s2 + $0xcc] sm:$0xf]
    %v4969 = vunpack.c.l.b16 %v4921
    %v4970 = vunpack.c.l.b16 %v4922
    %v4971 = vunpack.c.l.b16 %v4923
    %v4972 = vunpack.c.l.b16 %v4924
    %v4973 = vunpack.c.l.b16 %v4925
    %v4974 = vunpack.c.l.b16 %v4926
    %v4975 = vunpack.c.l.b16 %v4927
    %v4976 = vunpack.c.l.b16 %v4928
    %v4977 = vunpack.c.l.b16 %v4929
    %v4978 = vunpack.c.l.b16 %v4930
    %v4979 = vunpack.c.l.b16 %v4931
    %v4980 = vunpack.c.l.b16 %v4932
    %v4981 = vunpack.c.l.b16 %v4933
    %v4982 = vunpack.c.l.b16 %v4934
    %v4983 = vunpack.c.l.b16 %v4935
    %v4984 = vunpack.c.l.b16 %v4936
    %v4985 = vunpack.c.l.b16 %v4937
    %v4986 = vunpack.c.l.b16 %v4938
    %v4987 = vunpack.c.l.b16 %v4939
    %v4988 = vunpack.c.l.b16 %v4940
    %v4989 = vunpack.c.l.b16 %v4941
    %v4990 = vunpack.c.l.b16 %v4942
    %v4991 = vunpack.c.l.b16 %v4943
    %v4992 = vunpack.c.l.b16 %v4944
    %v4993 = vpack.c.b16 %v4970, %v4969
    %v4994 = vpack.c.b16 %v4972, %v4971
    %v4995 = vpack.c.b16 %v4974, %v4973
    %v4996 = vpack.c.b16 %v4976, %v4975
    %v4997 = vpack.c.b16 %v4978, %v4977
    %v4998 = vpack.c.b16 %v4980, %v4979
    %v4999 = vpack.c.b16 %v4982, %v4981
    %v5000 = vpack.c.b16 %v4984, %v4983
    %v5001 = vpack.c.b16 %v4986, %v4985
    %v5002 = vpack.c.b16 %v4988, %v4987
    %v5003 = vpack.c.b16 %v4990, %v4989
    %v5004 = vpack.c.b16 %v4992, %v4991
    %v5018 = vsel %vm1881, %v4906, 0
    %v5021 = vsel %vm1881, %v4908, 0
    %v5024 = vsel %vm1881, %v4910, 0
    %v5027 = vsel %vm1881, %v4912, 0
    %v5030 = vsel %vm1881, %v4914, 0
    %v5033 = vsel %vm1881, %v4916, 0
    %v5036 = vsel %vm1881, %v4918, 0
    %v5039 = vsel %vm1881, %v4920, 0
    %5041 = vmatpush.bf16.msra.mxu0 %v5000
    %5042 = vmatpush.bf16.msra.mxu0 %v4999
    %5043 = vmatpush.bf16.msra.mxu0 %v4998
    %5044 = vmatpush.bf16.msra.mxu0 %v4997
    %5045 = vmatpush.bf16.msra.mxu0 %v4996
    %5046 = vmatpush.bf16.msra.mxu0 %v4995
    %5047 = vmatpush.bf16.msra.mxu0 %v4994
    %5048 = vmatpush.bf16.msra.mxu0 %v4993
    %5049 = vmatmul.bf16.gmra.mxu0 %v4905
    %v5050 = vpop.f32.mrf.mxu0
    %v5051 = vadd.f32 0.0, %v5050
    %v5052 = vpop.f32.mrf.mxu0
    %v5053 = vadd.f32 0.0, %v5052
    %5054 = vmatmul.bf16.gmra.mxu0 %v4907
    %v5055 = vpop.f32.mrf.mxu0
    %v5056 = vadd.f32 0.0, %v5055
    %v5057 = vpop.f32.mrf.mxu0
    %v5058 = vadd.f32 0.0, %v5057
    %5059 = vmatmul.bf16.gmra.mxu0 %v4909
    %v5060 = vpop.f32.mrf.mxu0
    %v5061 = vadd.f32 0.0, %v5060
    %v5062 = vpop.f32.mrf.mxu0
    %v5063 = vadd.f32 0.0, %v5062
    %5064 = vmatmul.bf16.gmra.mxu0 %v4911
    %v5065 = vpop.f32.mrf.mxu0
    %v5066 = vadd.f32 0.0, %v5065
    %v5067 = vpop.f32.mrf.mxu0
    %v5068 = vadd.f32 0.0, %v5067
    %5069 = vmatmul.bf16.gmra.mxu0 %v4913
    %v5070 = vpop.f32.mrf.mxu0
    %v5071 = vadd.f32 0.0, %v5070
    %v5072 = vpop.f32.mrf.mxu0
    %v5073 = vadd.f32 0.0, %v5072
    %5074 = vmatmul.bf16.gmra.mxu0 %v4915
    %v5075 = vpop.f32.mrf.mxu0
    %v5076 = vadd.f32 0.0, %v5075
    %v5077 = vpop.f32.mrf.mxu0
    %v5078 = vadd.f32 0.0, %v5077
    %5079 = vmatmul.bf16.gmra.mxu0 %v4917
    %v5080 = vpop.f32.mrf.mxu0
    %v5081 = vadd.f32 0.0, %v5080
    %v5082 = vpop.f32.mrf.mxu0
    %v5083 = vadd.f32 0.0, %v5082
    %5084 = vmatmul.bf16.gmra.mxu0 %v4919
    %v5085 = vpop.f32.mrf.mxu0
    %v5086 = vadd.f32 0.0, %v5085
    %v5087 = vpop.f32.mrf.mxu0
    %v5088 = vadd.f32 0.0, %v5087
    %5089 = vdwg.mxu0
    %5090 = vmatpush.bf16.msra.mxu0 0
    %5091 = vmatpush.bf16.msra.mxu0 0
    %5092 = vmatpush.bf16.msra.mxu0 0
    %5093 = vmatpush.bf16.msra.mxu0 0
    %5094 = vmatpush.bf16.msra.mxu0 %v5004
    %5095 = vmatpush.bf16.msra.mxu0 %v5003
    %5096 = vmatpush.bf16.msra.mxu0 %v5002
    %5097 = vmatpush.bf16.msra.mxu0 %v5001
    %5098 = vmatmul.bf16.gmra.mxu0 %v5018
    %v5099 = vpop.f32.mrf.mxu0
    %v5100 = vadd.f32 %v5051, %v5099
    %v5101 = vpop.f32.mrf.mxu0
    %v5102 = vadd.f32 %v5053, %v5101
    %5103 = vmatmul.bf16.gmra.mxu0 %v5021
    %v5104 = vpop.f32.mrf.mxu0
    %v5105 = vadd.f32 %v5056, %v5104
    %v5106 = vpop.f32.mrf.mxu0
    %v5107 = vadd.f32 %v5058, %v5106
    %5108 = vmatmul.bf16.gmra.mxu0 %v5024
    %v5109 = vpop.f32.mrf.mxu0
    %v5110 = vadd.f32 %v5061, %v5109
    %v5111 = vpop.f32.mrf.mxu0
    %v5112 = vadd.f32 %v5063, %v5111
    %5113 = vmatmul.bf16.gmra.mxu0 %v5027
    %v5114 = vpop.f32.mrf.mxu0
    %v5115 = vadd.f32 %v5066, %v5114
    %v5116 = vpop.f32.mrf.mxu0
    %v5117 = vadd.f32 %v5068, %v5116
    %5118 = vmatmul.bf16.gmra.mxu0 %v5030
    %v5119 = vpop.f32.mrf.mxu0
    %v5120 = vadd.f32 %v5071, %v5119
    %v5121 = vpop.f32.mrf.mxu0
    %v5122 = vadd.f32 %v5073, %v5121
    %5123 = vmatmul.bf16.gmra.mxu0 %v5033
    %v5124 = vpop.f32.mrf.mxu0
    %v5125 = vadd.f32 %v5076, %v5124
    %v5126 = vpop.f32.mrf.mxu0
    %v5127 = vadd.f32 %v5078, %v5126
    %5128 = vmatmul.bf16.gmra.mxu0 %v5036
    %v5129 = vpop.f32.mrf.mxu0
    %v5130 = vadd.f32 %v5081, %v5129
    %v5131 = vpop.f32.mrf.mxu0
    %v5132 = vadd.f32 %v5083, %v5131
    %5133 = vmatmul.bf16.gmra.mxu0 %v5039
    %v5134 = vpop.f32.mrf.mxu0
    %v5135 = vadd.f32 %v5086, %v5134
    %v5136 = vpop.f32.mrf.mxu0
    %v5137 = vadd.f32 %v5088, %v5136
    %5138 = vdwg.mxu0
    %v5163 = vunpack.c.l.b16 %v4737
    %v5164 = vunpack.c.l.b16 %v4738
    %v5165 = vunpack.c.l.b16 %v4739
    %v5166 = vunpack.c.l.b16 %v4740
    %v5167 = vunpack.c.l.b16 %v4741
    %v5168 = vunpack.c.l.b16 %v4742
    %v5169 = vunpack.c.l.b16 %v4743
    %v5170 = vunpack.c.l.b16 %v4744
    %v5171 = vunpack.c.l.b16 %v4745
    %v5172 = vunpack.c.l.b16 %v4746
    %v5173 = vunpack.c.l.b16 %v4747
    %v5174 = vunpack.c.l.b16 %v4748
    %v5175 = vunpack.c.l.b16 %v4749
    %v5176 = vunpack.c.l.b16 %v4750
    %v5177 = vunpack.c.l.b16 %v4751
    %v5178 = vunpack.c.l.b16 %v4752
    %v5179 = vunpack.c.l.b16 %v4753
    %v5180 = vunpack.c.l.b16 %v4754
    %v5181 = vunpack.c.l.b16 %v4755
    %v5182 = vunpack.c.l.b16 %v4756
    %v5183 = vunpack.c.l.b16 %v4757
    %v5184 = vunpack.c.l.b16 %v4758
    %v5185 = vunpack.c.l.b16 %v4759
    %v5186 = vunpack.c.l.b16 %v4760
    %v5187 = vpack.c.b16 %v5164, %v5163
    %v5188 = vpack.c.b16 %v5166, %v5165
    %v5189 = vpack.c.b16 %v5168, %v5167
    %v5190 = vpack.c.b16 %v5170, %v5169
    %v5191 = vpack.c.b16 %v5172, %v5171
    %v5192 = vpack.c.b16 %v5174, %v5173
    %v5193 = vpack.c.b16 %v5176, %v5175
    %v5194 = vpack.c.b16 %v5178, %v5177
    %v5195 = vpack.c.b16 %v5180, %v5179
    %v5196 = vpack.c.b16 %v5182, %v5181
    %v5197 = vpack.c.b16 %v5184, %v5183
    %v5198 = vpack.c.b16 %v5186, %v5185
    %v5212 = vsel %vm1881, %v4722, 0
    %v5215 = vsel %vm1881, %v4724, 0
    %v5218 = vsel %vm1881, %v4726, 0
    %v5221 = vsel %vm1881, %v4728, 0
    %v5224 = vsel %vm1881, %v4730, 0
    %v5227 = vsel %vm1881, %v4732, 0
    %v5230 = vsel %vm1881, %v4734, 0
    %v5233 = vsel %vm1881, %v4736, 0
    %5235 = vmatpush.bf16.msra.mxu0 %v5194
    %5236 = vmatpush.bf16.msra.mxu0 %v5193
    %5237 = vmatpush.bf16.msra.mxu0 %v5192
    %5238 = vmatpush.bf16.msra.mxu0 %v5191
    %5239 = vmatpush.bf16.msra.mxu0 %v5190
    %5240 = vmatpush.bf16.msra.mxu0 %v5189
    %5241 = vmatpush.bf16.msra.mxu0 %v5188
    %5242 = vmatpush.bf16.msra.mxu0 %v5187
    %5243 = vmatmul.bf16.gmra.mxu0 %v4721
    %v5244 = vpop.f32.mrf.mxu0
    %v5245 = vadd.f32 %v5100, %v5244
    %v5246 = vpop.f32.mrf.mxu0
    %v5247 = vadd.f32 %v5102, %v5246
    %5248 = vmatmul.bf16.gmra.mxu0 %v4723
    %v5249 = vpop.f32.mrf.mxu0
    %v5250 = vadd.f32 %v5105, %v5249
    %v5251 = vpop.f32.mrf.mxu0
    %v5252 = vadd.f32 %v5107, %v5251
    %5253 = vmatmul.bf16.gmra.mxu0 %v4725
    %v5254 = vpop.f32.mrf.mxu0
    %v5255 = vadd.f32 %v5110, %v5254
    %v5256 = vpop.f32.mrf.mxu0
    %v5257 = vadd.f32 %v5112, %v5256
    %5258 = vmatmul.bf16.gmra.mxu0 %v4727
    %v5259 = vpop.f32.mrf.mxu0
    %v5260 = vadd.f32 %v5115, %v5259
    %v5261 = vpop.f32.mrf.mxu0
    %v5262 = vadd.f32 %v5117, %v5261
    %5263 = vmatmul.bf16.gmra.mxu0 %v4729
    %v5264 = vpop.f32.mrf.mxu0
    %v5265 = vadd.f32 %v5120, %v5264
    %v5266 = vpop.f32.mrf.mxu0
    %v5267 = vadd.f32 %v5122, %v5266
    %5268 = vmatmul.bf16.gmra.mxu0 %v4731
    %v5269 = vpop.f32.mrf.mxu0
    %v5270 = vadd.f32 %v5125, %v5269
    %v5271 = vpop.f32.mrf.mxu0
    %v5272 = vadd.f32 %v5127, %v5271
    %5273 = vmatmul.bf16.gmra.mxu0 %v4733
    %v5274 = vpop.f32.mrf.mxu0
    %v5275 = vadd.f32 %v5130, %v5274
    %v5276 = vpop.f32.mrf.mxu0
    %v5277 = vadd.f32 %v5132, %v5276
    %5278 = vmatmul.bf16.gmra.mxu0 %v4735
    %v5279 = vpop.f32.mrf.mxu0
    %v5280 = vadd.f32 %v5135, %v5279
    %v5281 = vpop.f32.mrf.mxu0
    %v5282 = vadd.f32 %v5137, %v5281
    %5283 = vdwg.mxu0
    %5284 = vmatpush.bf16.msra.mxu0 0
    %5285 = vmatpush.bf16.msra.mxu0 0
    %5286 = vmatpush.bf16.msra.mxu0 0
    %5287 = vmatpush.bf16.msra.mxu0 0
    %5288 = vmatpush.bf16.msra.mxu0 %v5198
    %5289 = vmatpush.bf16.msra.mxu0 %v5197
    %5290 = vmatpush.bf16.msra.mxu0 %v5196
    %5291 = vmatpush.bf16.msra.mxu0 %v5195
    %5292 = vmatmul.bf16.gmra.mxu0 %v5212
    %v5293 = vpop.f32.mrf.mxu0
    %v5294 = vadd.f32 %v5245, %v5293
    %v5295 = vpop.f32.mrf.mxu0
    %v5296 = vadd.f32 %v5247, %v5295
    %5297 = vmatmul.bf16.gmra.mxu0 %v5215
    %v5298 = vpop.f32.mrf.mxu0
    %v5299 = vadd.f32 %v5250, %v5298
    %v5300 = vpop.f32.mrf.mxu0
    %v5301 = vadd.f32 %v5252, %v5300
    %5302 = vmatmul.bf16.gmra.mxu0 %v5218
    %v5303 = vpop.f32.mrf.mxu0
    %v5304 = vadd.f32 %v5255, %v5303
    %v5305 = vpop.f32.mrf.mxu0
    %v5306 = vadd.f32 %v5257, %v5305
    %5307 = vmatmul.bf16.gmra.mxu0 %v5221
    %v5308 = vpop.f32.mrf.mxu0
    %v5309 = vadd.f32 %v5260, %v5308
    %v5310 = vpop.f32.mrf.mxu0
    %v5311 = vadd.f32 %v5262, %v5310
    %5312 = vmatmul.bf16.gmra.mxu0 %v5224
    %v5313 = vpop.f32.mrf.mxu0
    %v5314 = vadd.f32 %v5265, %v5313
    %v5315 = vpop.f32.mrf.mxu0
    %v5316 = vadd.f32 %v5267, %v5315
    %5317 = vmatmul.bf16.gmra.mxu0 %v5227
    %v5318 = vpop.f32.mrf.mxu0
    %v5319 = vadd.f32 %v5270, %v5318
    %v5320 = vpop.f32.mrf.mxu0
    %v5321 = vadd.f32 %v5272, %v5320
    %5322 = vmatmul.bf16.gmra.mxu0 %v5230
    %v5323 = vpop.f32.mrf.mxu0
    %v5324 = vadd.f32 %v5275, %v5323
    %v5325 = vpop.f32.mrf.mxu0
    %v5326 = vadd.f32 %v5277, %v5325
    %5327 = vmatmul.bf16.gmra.mxu0 %v5233
    %v5328 = vpop.f32.mrf.mxu0
    %v5329 = vadd.f32 %v5280, %v5328
    %v5330 = vpop.f32.mrf.mxu0
    %v5331 = vadd.f32 %v5282, %v5330
    %5332 = vdwg.mxu0
    %v5333 = vrot.slane %v4689, 2
    %v5334 = vrot.slane %v4596, 2
    %v5335 = vsel %vm667, %v5333, %v5334
    %v5336 = vrot.slane %v4690, 2
    %v5337 = vrot.slane %v4598, 2
    %v5338 = vsel %vm667, %v5336, %v5337
    %v5339 = vrot.slane %v4705, 2
    %v5340 = vsel %vm667, %v5334, %v5339
    %v5341 = vrot.slane %v4706, 2
    %v5342 = vsel %vm667, %v5337, %v5341
    %v5343 = vrot.slane %v4691, 2
    %v5344 = vrot.slane %v4602, 2
    %v5345 = vsel %vm667, %v5343, %v5344
    %v5346 = vrot.slane %v4692, 2
    %v5347 = vrot.slane %v4604, 2
    %v5348 = vsel %vm667, %v5346, %v5347
    %v5349 = vrot.slane %v4707, 2
    %v5350 = vsel %vm667, %v5344, %v5349
    %v5351 = vrot.slane %v4708, 2
    %v5352 = vsel %vm667, %v5347, %v5351
    %v5353 = vrot.slane %v4693, 2
    %v5354 = vrot.slane %v4608, 2
    %v5355 = vsel %vm667, %v5353, %v5354
    %v5356 = vrot.slane %v4694, 2
    %v5357 = vrot.slane %v4610, 2
    %v5358 = vsel %vm667, %v5356, %v5357
    %v5359 = vrot.slane %v4709, 2
    %v5360 = vsel %vm667, %v5354, %v5359
    %v5361 = vrot.slane %v4710, 2
    %v5362 = vsel %vm667, %v5357, %v5361
    %v5363 = vrot.slane %v4695, 2
    %v5364 = vrot.slane %v4614, 2
    %v5365 = vsel %vm667, %v5363, %v5364
    %v5366 = vrot.slane %v4696, 2
    %v5367 = vrot.slane %v4616, 2
    %v5368 = vsel %vm667, %v5366, %v5367
    %v5369 = vrot.slane %v4711, 2
    %v5370 = vsel %vm667, %v5364, %v5369
    %v5371 = vrot.slane %v4712, 2
    %v5372 = vsel %vm667, %v5367, %v5371
    %v5373 = vrot.slane %v4697, 2
    %v5374 = vrot.slane %v4620, 2
    %v5375 = vsel %vm667, %v5373, %v5374
    %v5376 = vrot.slane %v4698, 2
    %v5377 = vrot.slane %v4622, 2
    %v5378 = vsel %vm667, %v5376, %v5377
    %v5379 = vrot.slane %v4713, 2
    %v5380 = vsel %vm667, %v5374, %v5379
    %v5381 = vrot.slane %v4714, 2
    %v5382 = vsel %vm667, %v5377, %v5381
    %v5383 = vrot.slane %v4699, 2
    %v5384 = vrot.slane %v4626, 2
    %v5385 = vsel %vm667, %v5383, %v5384
    %v5386 = vrot.slane %v4700, 2
    %v5387 = vrot.slane %v4628, 2
    %v5388 = vsel %vm667, %v5386, %v5387
    %v5389 = vrot.slane %v4715, 2
    %v5390 = vsel %vm667, %v5384, %v5389
    %v5391 = vrot.slane %v4716, 2
    %v5392 = vsel %vm667, %v5387, %v5391
    %v5393 = vrot.slane %v4701, 2
    %v5394 = vrot.slane %v4632, 2
    %v5395 = vsel %vm667, %v5393, %v5394
    %v5396 = vrot.slane %v4702, 2
    %v5397 = vrot.slane %v4634, 2
    %v5398 = vsel %vm667, %v5396, %v5397
    %v5399 = vrot.slane %v4717, 2
    %v5400 = vsel %vm667, %v5394, %v5399
    %v5401 = vrot.slane %v4718, 2
    %v5402 = vsel %vm667, %v5397, %v5401
    %v5403 = vrot.slane %v4703, 2
    %v5404 = vrot.slane %v4638, 2
    %v5405 = vsel %vm667, %v5403, %v5404
    %v5406 = vrot.slane %v4704, 2
    %v5407 = vrot.slane %v4640, 2
    %v5408 = vsel %vm667, %v5406, %v5407
    %v5409 = vrot.slane %v4719, 2
    %v5410 = vsel %vm667, %v5404, %v5409
    %v5411 = vrot.slane %v4720, 2
    %v5412 = vsel %vm667, %v5407, %v5411
    %v5445 = vpack.c.bf16 %v5340, %v5335
    %v5446 = vpack.c.bf16 %v5342, %v5338
    %v5447 = vpack.c.bf16 %v5350, %v5345
    %v5448 = vpack.c.bf16 %v5352, %v5348
    %v5449 = vpack.c.bf16 %v5360, %v5355
    %v5450 = vpack.c.bf16 %v5362, %v5358
    %v5451 = vpack.c.bf16 %v5370, %v5365
    %v5452 = vpack.c.bf16 %v5372, %v5368
    %v5453 = vpack.c.bf16 %v5380, %v5375
    %v5454 = vpack.c.bf16 %v5382, %v5378
    %v5455 = vpack.c.bf16 %v5390, %v5385
    %v5456 = vpack.c.bf16 %v5392, %v5388
    %v5457 = vpack.c.bf16 %v5400, %v5395
    %v5458 = vpack.c.bf16 %v5402, %v5398
    %v5459 = vpack.c.bf16 %v5410, %v5405
    %v5460 = vpack.c.bf16 %v5412, %v5408
    %v5461 = vld [vmem:[%s2 + $0xd0] sm:$0xf]
    %v5462 = vld [vmem:[%s2 + $0xd4] sm:$0xf]
    %v5463 = vld [vmem:[%s2 + $0xd8] sm:$0xf]
    %v5464 = vld [vmem:[%s2 + $0xdc] sm:$0xf]
    %v5465 = vld [vmem:[%s2 + $0xe0] sm:$0xf]
    %v5466 = vld [vmem:[%s2 + $0xe4] sm:$0xf]
    %v5467 = vld [vmem:[%s2 + $0xe8] sm:$0xf]
    %v5468 = vld [vmem:[%s2 + $0xec] sm:$0xf]
    %v5469 = vld [vmem:[%s2 + $0xf0] sm:$0xf]
    %v5470 = vld [vmem:[%s2 + $0xf4] sm:$0xf]
    %v5471 = vld [vmem:[%s2 + $0xf8] sm:$0xf]
    %v5472 = vld [vmem:[%s2 + $0xfc] sm:$0xf]
    %v5473 = vld [vmem:[%s2 + $0x100] sm:$0xf]
    %v5474 = vld [vmem:[%s2 + $0x104] sm:$0xf]
    %v5475 = vld [vmem:[%s2 + $0x108] sm:$0xf]
    %v5476 = vld [vmem:[%s2 + $0x10c] sm:$0xf]
    %v5477 = vld [vmem:[%s2 + $0x110] sm:$0xf]
    %v5478 = vld [vmem:[%s2 + $0x114] sm:$0xf]
    %v5479 = vld [vmem:[%s2 + $0x118] sm:$0xf]
    %v5480 = vld [vmem:[%s2 + $0x11c] sm:$0xf]
    %v5481 = vld [vmem:[%s2 + $0x120] sm:$0xf]
    %v5482 = vld [vmem:[%s2 + $0x124] sm:$0xf]
    %v5483 = vld [vmem:[%s2 + $0x128] sm:$0xf]
    %v5484 = vld [vmem:[%s2 + $0x12c] sm:$0xf]
    %v5509 = vunpack.c.l.b16 %v5461
    %v5510 = vunpack.c.l.b16 %v5462
    %v5511 = vunpack.c.l.b16 %v5463
    %v5512 = vunpack.c.l.b16 %v5464
    %v5513 = vunpack.c.l.b16 %v5465
    %v5514 = vunpack.c.l.b16 %v5466
    %v5515 = vunpack.c.l.b16 %v5467
    %v5516 = vunpack.c.l.b16 %v5468
    %v5517 = vunpack.c.l.b16 %v5469
    %v5518 = vunpack.c.l.b16 %v5470
    %v5519 = vunpack.c.l.b16 %v5471
    %v5520 = vunpack.c.l.b16 %v5472
    %v5521 = vunpack.c.l.b16 %v5473
    %v5522 = vunpack.c.l.b16 %v5474
    %v5523 = vunpack.c.l.b16 %v5475
    %v5524 = vunpack.c.l.b16 %v5476
    %v5525 = vunpack.c.l.b16 %v5477
    %v5526 = vunpack.c.l.b16 %v5478
    %v5527 = vunpack.c.l.b16 %v5479
    %v5528 = vunpack.c.l.b16 %v5480
    %v5529 = vunpack.c.l.b16 %v5481
    %v5530 = vunpack.c.l.b16 %v5482
    %v5531 = vunpack.c.l.b16 %v5483
    %v5532 = vunpack.c.l.b16 %v5484
    %v5533 = vpack.c.b16 %v5510, %v5509
    %v5534 = vpack.c.b16 %v5512, %v5511
    %v5535 = vpack.c.b16 %v5514, %v5513
    %v5536 = vpack.c.b16 %v5516, %v5515
    %v5537 = vpack.c.b16 %v5518, %v5517
    %v5538 = vpack.c.b16 %v5520, %v5519
    %v5539 = vpack.c.b16 %v5522, %v5521
    %v5540 = vpack.c.b16 %v5524, %v5523
    %v5541 = vpack.c.b16 %v5526, %v5525
    %v5542 = vpack.c.b16 %v5528, %v5527
    %v5543 = vpack.c.b16 %v5530, %v5529
    %v5544 = vpack.c.b16 %v5532, %v5531
    %v5558 = vsel %vm1881, %v5446, 0
    %v5561 = vsel %vm1881, %v5448, 0
    %v5564 = vsel %vm1881, %v5450, 0
    %v5567 = vsel %vm1881, %v5452, 0
    %v5570 = vsel %vm1881, %v5454, 0
    %v5573 = vsel %vm1881, %v5456, 0
    %v5576 = vsel %vm1881, %v5458, 0
    %v5579 = vsel %vm1881, %v5460, 0
    %5581 = vmatpush.bf16.msra.mxu0 %v5540
    %5582 = vmatpush.bf16.msra.mxu0 %v5539
    %5583 = vmatpush.bf16.msra.mxu0 %v5538
    %5584 = vmatpush.bf16.msra.mxu0 %v5537
    %5585 = vmatpush.bf16.msra.mxu0 %v5536
    %5586 = vmatpush.bf16.msra.mxu0 %v5535
    %5587 = vmatpush.bf16.msra.mxu0 %v5534
    %5588 = vmatpush.bf16.msra.mxu0 %v5533
    %5589 = vmatmul.bf16.gmra.mxu0 %v5445
    %v5590 = vpop.f32.mrf.mxu0
    %v5591 = vadd.f32 0.0, %v5590
    %v5592 = vpop.f32.mrf.mxu0
    %v5593 = vadd.f32 0.0, %v5592
    %5594 = vmatmul.bf16.gmra.mxu0 %v5447
    %v5595 = vpop.f32.mrf.mxu0
    %v5596 = vadd.f32 0.0, %v5595
    %v5597 = vpop.f32.mrf.mxu0
    %v5598 = vadd.f32 0.0, %v5597
    %5599 = vmatmul.bf16.gmra.mxu0 %v5449
    %v5600 = vpop.f32.mrf.mxu0
    %v5601 = vadd.f32 0.0, %v5600
    %v5602 = vpop.f32.mrf.mxu0
    %v5603 = vadd.f32 0.0, %v5602
    %5604 = vmatmul.bf16.gmra.mxu0 %v5451
    %v5605 = vpop.f32.mrf.mxu0
    %v5606 = vadd.f32 0.0, %v5605
    %v5607 = vpop.f32.mrf.mxu0
    %v5608 = vadd.f32 0.0, %v5607
    %5609 = vmatmul.bf16.gmra.mxu0 %v5453
    %v5610 = vpop.f32.mrf.mxu0
    %v5611 = vadd.f32 0.0, %v5610
    %v5612 = vpop.f32.mrf.mxu0
    %v5613 = vadd.f32 0.0, %v5612
    %5614 = vmatmul.bf16.gmra.mxu0 %v5455
    %v5615 = vpop.f32.mrf.mxu0
    %v5616 = vadd.f32 0.0, %v5615
    %v5617 = vpop.f32.mrf.mxu0
    %v5618 = vadd.f32 0.0, %v5617
    %5619 = vmatmul.bf16.gmra.mxu0 %v5457
    %v5620 = vpop.f32.mrf.mxu0
    %v5621 = vadd.f32 0.0, %v5620
    %v5622 = vpop.f32.mrf.mxu0
    %v5623 = vadd.f32 0.0, %v5622
    %5624 = vmatmul.bf16.gmra.mxu0 %v5459
    %v5625 = vpop.f32.mrf.mxu0
    %v5626 = vadd.f32 0.0, %v5625
    %v5627 = vpop.f32.mrf.mxu0
    %v5628 = vadd.f32 0.0, %v5627
    %5629 = vdwg.mxu0
    %5630 = vmatpush.bf16.msra.mxu0 0
    %5631 = vmatpush.bf16.msra.mxu0 0
    %5632 = vmatpush.bf16.msra.mxu0 0
    %5633 = vmatpush.bf16.msra.mxu0 0
    %5634 = vmatpush.bf16.msra.mxu0 %v5544
    %5635 = vmatpush.bf16.msra.mxu0 %v5543
    %5636 = vmatpush.bf16.msra.mxu0 %v5542
    %5637 = vmatpush.bf16.msra.mxu0 %v5541
    %5638 = vmatmul.bf16.gmra.mxu0 %v5558
    %v5639 = vpop.f32.mrf.mxu0
    %v5640 = vadd.f32 %v5591, %v5639
    %v5641 = vpop.f32.mrf.mxu0
    %v5642 = vadd.f32 %v5593, %v5641
    %5643 = vmatmul.bf16.gmra.mxu0 %v5561
    %v5644 = vpop.f32.mrf.mxu0
    %v5645 = vadd.f32 %v5596, %v5644
    %v5646 = vpop.f32.mrf.mxu0
    %v5647 = vadd.f32 %v5598, %v5646
    %5648 = vmatmul.bf16.gmra.mxu0 %v5564
    %v5649 = vpop.f32.mrf.mxu0
    %v5650 = vadd.f32 %v5601, %v5649
    %v5651 = vpop.f32.mrf.mxu0
    %v5652 = vadd.f32 %v5603, %v5651
    %5653 = vmatmul.bf16.gmra.mxu0 %v5567
    %v5654 = vpop.f32.mrf.mxu0
    %v5655 = vadd.f32 %v5606, %v5654
    %v5656 = vpop.f32.mrf.mxu0
    %v5657 = vadd.f32 %v5608, %v5656
    %5658 = vmatmul.bf16.gmra.mxu0 %v5570
    %v5659 = vpop.f32.mrf.mxu0
    %v5660 = vadd.f32 %v5611, %v5659
    %v5661 = vpop.f32.mrf.mxu0
    %v5662 = vadd.f32 %v5613, %v5661
    %5663 = vmatmul.bf16.gmra.mxu0 %v5573
    %v5664 = vpop.f32.mrf.mxu0
    %v5665 = vadd.f32 %v5616, %v5664
    %v5666 = vpop.f32.mrf.mxu0
    %v5667 = vadd.f32 %v5618, %v5666
    %5668 = vmatmul.bf16.gmra.mxu0 %v5576
    %v5669 = vpop.f32.mrf.mxu0
    %v5670 = vadd.f32 %v5621, %v5669
    %v5671 = vpop.f32.mrf.mxu0
    %v5672 = vadd.f32 %v5623, %v5671
    %5673 = vmatmul.bf16.gmra.mxu0 %v5579
    %v5674 = vpop.f32.mrf.mxu0
    %v5675 = vadd.f32 %v5626, %v5674
    %v5676 = vpop.f32.mrf.mxu0
    %v5677 = vadd.f32 %v5628, %v5676
    %5678 = vdwg.mxu0
    %v5679 = vadd.f32 %v5294, %v5640
    %v5680 = vadd.f32 %v5296, %v5642
    %v5681 = vadd.f32 %v5299, %v5645
    %v5682 = vadd.f32 %v5301, %v5647
    %v5683 = vadd.f32 %v5304, %v5650
    %v5684 = vadd.f32 %v5306, %v5652
    %v5685 = vadd.f32 %v5309, %v5655
    %v5686 = vadd.f32 %v5311, %v5657
    %v5687 = vadd.f32 %v5314, %v5660
    %v5688 = vadd.f32 %v5316, %v5662
    %v5689 = vadd.f32 %v5319, %v5665
    %v5690 = vadd.f32 %v5321, %v5667
    %v5691 = vadd.f32 %v5324, %v5670
    %v5692 = vadd.f32 %v5326, %v5672
    %v5693 = vadd.f32 %v5329, %v5675
    %v5694 = vadd.f32 %v5331, %v5677
    %v5696 = vperm.slane %v4559, 0
    %v5698 = vmul.f32 %v5679, %v5696
    %v5699 = vmul.f32 %v5680, %v5696
    %v5700 = vmul.f32 %v5681, %v5696
    %v5701 = vmul.f32 %v5682, %v5696
    %v5702 = vmul.f32 %v5683, %v5696
    %v5703 = vmul.f32 %v5684, %v5696
    %v5704 = vmul.f32 %v5685, %v5696
    %v5705 = vmul.f32 %v5686, %v5696
    %v5706 = vmul.f32 %v5687, %v5696
    %v5707 = vmul.f32 %v5688, %v5696
    %v5708 = vmul.f32 %v5689, %v5696
    %v5709 = vmul.f32 %v5690, %v5696
    %v5710 = vmul.f32 %v5691, %v5696
    %v5711 = vmul.f32 %v5692, %v5696
    %v5712 = vmul.f32 %v5693, %v5696
    %v5713 = vmul.f32 %v5694, %v5696
    %v5715 = vperm.slane %v4560, 0
    %v5717 = vadd.f32 %v5698, %v5715
    %v5718 = vadd.f32 %v5699, %v5715
    %v5719 = vadd.f32 %v5700, %v5715
    %v5720 = vadd.f32 %v5701, %v5715
    %v5721 = vadd.f32 %v5702, %v5715
    %v5722 = vadd.f32 %v5703, %v5715
    %v5723 = vadd.f32 %v5704, %v5715
    %v5724 = vadd.f32 %v5705, %v5715
    %v5725 = vadd.f32 %v5706, %v5715
    %v5726 = vadd.f32 %v5707, %v5715
    %v5727 = vadd.f32 %v5708, %v5715
    %v5728 = vadd.f32 %v5709, %v5715
    %v5729 = vadd.f32 %v5710, %v5715
    %v5730 = vadd.f32 %v5711, %v5715
    %v5731 = vadd.f32 %v5712, %v5715
    %v5732 = vadd.f32 %v5713, %v5715
    %v5733 = vmax.f32 %v5717, 0.0
    %v5734 = vmax.f32 %v5718, 0.0
    %v5735 = vmax.f32 %v5719, 0.0
    %v5736 = vmax.f32 %v5720, 0.0
    %v5737 = vmax.f32 %v5721, 0.0
    %v5738 = vmax.f32 %v5722, 0.0
    %v5739 = vmax.f32 %v5723, 0.0
    %v5740 = vmax.f32 %v5724, 0.0
    %v5741 = vmax.f32 %v5725, 0.0
    %v5742 = vmax.f32 %v5726, 0.0
    %v5743 = vmax.f32 %v5727, 0.0
    %v5744 = vmax.f32 %v5728, 0.0
    %v5745 = vmax.f32 %v5729, 0.0
    %v5746 = vmax.f32 %v5730, 0.0
    %v5747 = vmax.f32 %v5731, 0.0
    %v5748 = vmax.f32 %v5732, 0.0
    %v5749 = vld [vmem:[%s7 + $0x5] sm:$0x1]
    %v5750 = vld [vmem:[%s7 + $0x6] sm:$0x1]
    %v5767 = vrot.slane %v5733, 7
    %v5768 = vrot.slane %v5734, 7
    %v5769 = vsel %vm2220, %v5767, %v5768
    %v5770 = vrot.slane %v5735, 7
    %v5771 = vrot.slane %v5736, 7
    %v5772 = vsel %vm2220, %v5770, %v5771
    %v5773 = vrot.slane %v5737, 7
    %v5774 = vrot.slane %v5738, 7
    %v5775 = vsel %vm2220, %v5773, %v5774
    %v5776 = vrot.slane %v5739, 7
    %v5777 = vrot.slane %v5740, 7
    %v5778 = vsel %vm2220, %v5776, %v5777
    %v5779 = vrot.slane %v5741, 7
    %v5780 = vrot.slane %v5742, 7
    %v5781 = vsel %vm2220, %v5779, %v5780
    %v5782 = vrot.slane %v5743, 7
    %v5783 = vrot.slane %v5744, 7
    %v5784 = vsel %vm2220, %v5782, %v5783
    %v5785 = vrot.slane %v5745, 7
    %v5786 = vrot.slane %v5746, 7
    %v5787 = vsel %vm2220, %v5785, %v5786
    %v5788 = vrot.slane %v5747, 7
    %v5789 = vrot.slane %v5748, 7
    %v5790 = vsel %vm2220, %v5788, %v5789
    %v5815 = vsel %vm2220, 0.0, %v5767
    %v5816 = vsel %vm2220, 0.0, %v5770
    %v5817 = vsel %vm2220, 0.0, %v5773
    %v5818 = vsel %vm2220, 0.0, %v5776
    %v5819 = vsel %vm2220, 0.0, %v5779
    %v5820 = vsel %vm2220, 0.0, %v5782
    %v5821 = vsel %vm2220, 0.0, %v5785
    %v5822 = vsel %vm2220, 0.0, %v5788
    %v5823 = vsel %vm2220, %v5768, 0.0
    %v5824 = vsel %vm2220, %v5771, 0.0
    %v5825 = vsel %vm2220, %v5774, 0.0
    %v5826 = vsel %vm2220, %v5777, 0.0
    %v5827 = vsel %vm2220, %v5780, 0.0
    %v5828 = vsel %vm2220, %v5783, 0.0
    %v5829 = vsel %vm2220, %v5786, 0.0
    %v5830 = vsel %vm2220, %v5789, 0.0
    %v5831 = vpack.c.bf16 %v5769, %v5815
    %v5832 = vpack.c.bf16 %v5772, %v5816
    %v5833 = vpack.c.bf16 %v5775, %v5817
    %v5834 = vpack.c.bf16 %v5778, %v5818
    %v5835 = vpack.c.bf16 %v5781, %v5819
    %v5836 = vpack.c.bf16 %v5784, %v5820
    %v5837 = vpack.c.bf16 %v5787, %v5821
    %v5838 = vpack.c.bf16 %v5790, %v5822
    %v5839 = vld [vmem:[%s2 + $0x130] sm:$0xf]
    %v5840 = vld [vmem:[%s2 + $0x134] sm:$0xf]
    %v5841 = vld [vmem:[%s2 + $0x138] sm:$0xf]
    %v5842 = vld [vmem:[%s2 + $0x13c] sm:$0xf]
    %v5843 = vld [vmem:[%s2 + $0x140] sm:$0xf]
    %v5844 = vld [vmem:[%s2 + $0x144] sm:$0xf]
    %v5845 = vld [vmem:[%s2 + $0x148] sm:$0xf]
    %v5846 = vld [vmem:[%s2 + $0x14c] sm:$0xf]
    %v5847 = vld [vmem:[%s2 + $0x150] sm:$0xf]
    %v5848 = vld [vmem:[%s2 + $0x154] sm:$0xf]
    %v5849 = vld [vmem:[%s2 + $0x158] sm:$0xf]
    %v5850 = vld [vmem:[%s2 + $0x15c] sm:$0xf]
    %v5851 = vld [vmem:[%s2 + $0x160] sm:$0xf]
    %v5852 = vld [vmem:[%s2 + $0x164] sm:$0xf]
    %v5853 = vld [vmem:[%s2 + $0x168] sm:$0xf]
    %v5854 = vld [vmem:[%s2 + $0x16c] sm:$0xf]
    %v5871 = vrot.slane %v5815, 1
    %v5872 = vrot.slane %v5769, 1
    %v5873 = vsel %vm419, %v5871, %v5872
    %v5874 = vrot.slane %v5823, 1
    %v5875 = vsel %vm419, %v5872, %v5874
    %v5876 = vrot.slane %v5816, 1
    %v5877 = vrot.slane %v5772, 1
    %v5878 = vsel %vm419, %v5876, %v5877
    %v5879 = vrot.slane %v5824, 1
    %v5880 = vsel %vm419, %v5877, %v5879
    %v5881 = vrot.slane %v5817, 1
    %v5882 = vrot.slane %v5775, 1
    %v5883 = vsel %vm419, %v5881, %v5882
    %v5884 = vrot.slane %v5825, 1
    %v5885 = vsel %vm419, %v5882, %v5884
    %v5886 = vrot.slane %v5818, 1
    %v5887 = vrot.slane %v5778, 1
    %v5888 = vsel %vm419, %v5886, %v5887
    %v5889 = vrot.slane %v5826, 1
    %v5890 = vsel %vm419, %v5887, %v5889
    %v5891 = vrot.slane %v5819, 1
    %v5892 = vrot.slane %v5781, 1
    %v5893 = vsel %vm419, %v5891, %v5892
    %v5894 = vrot.slane %v5827, 1
    %v5895 = vsel %vm419, %v5892, %v5894
    %v5896 = vrot.slane %v5820, 1
    %v5897 = vrot.slane %v5784, 1
    %v5898 = vsel %vm419, %v5896, %v5897
    %v5899 = vrot.slane %v5828, 1
    %v5900 = vsel %vm419, %v5897, %v5899
    %v5901 = vrot.slane %v5821, 1
    %v5902 = vrot.slane %v5787, 1
    %v5903 = vsel %vm419, %v5901, %v5902
    %v5904 = vrot.slane %v5829, 1
    %v5905 = vsel %vm419, %v5902, %v5904
    %v5906 = vrot.slane %v5822, 1
    %v5907 = vrot.slane %v5790, 1
    %v5908 = vsel %vm419, %v5906, %v5907
    %v5909 = vrot.slane %v5830, 1
    %v5910 = vsel %vm419, %v5907, %v5909
    %v5927 = vpack.c.bf16 %v5875, %v5873
    %v5928 = vpack.c.bf16 %v5880, %v5878
    %v5929 = vpack.c.bf16 %v5885, %v5883
    %v5930 = vpack.c.bf16 %v5890, %v5888
    %v5931 = vpack.c.bf16 %v5895, %v5893
    %v5932 = vpack.c.bf16 %v5900, %v5898
    %v5933 = vpack.c.bf16 %v5905, %v5903
    %v5934 = vpack.c.bf16 %v5910, %v5908
    %v5935 = vld [vmem:[%s2 + $0x170] sm:$0xf]
    %v5936 = vld [vmem:[%s2 + $0x174] sm:$0xf]
    %v5937 = vld [vmem:[%s2 + $0x178] sm:$0xf]
    %v5938 = vld [vmem:[%s2 + $0x17c] sm:$0xf]
    %v5939 = vld [vmem:[%s2 + $0x180] sm:$0xf]
    %v5940 = vld [vmem:[%s2 + $0x184] sm:$0xf]
    %v5941 = vld [vmem:[%s2 + $0x188] sm:$0xf]
    %v5942 = vld [vmem:[%s2 + $0x18c] sm:$0xf]
    %v5943 = vld [vmem:[%s2 + $0x190] sm:$0xf]
    %v5944 = vld [vmem:[%s2 + $0x194] sm:$0xf]
    %v5945 = vld [vmem:[%s2 + $0x198] sm:$0xf]
    %v5946 = vld [vmem:[%s2 + $0x19c] sm:$0xf]
    %v5947 = vld [vmem:[%s2 + $0x1a0] sm:$0xf]
    %v5948 = vld [vmem:[%s2 + $0x1a4] sm:$0xf]
    %v5949 = vld [vmem:[%s2 + $0x1a8] sm:$0xf]
    %v5950 = vld [vmem:[%s2 + $0x1ac] sm:$0xf]
    %v5967 = vunpack.c.l.b16 %v5935
    %v5968 = vunpack.c.l.b16 %v5936
    %v5969 = vunpack.c.l.b16 %v5937
    %v5970 = vunpack.c.l.b16 %v5938
    %v5971 = vunpack.c.l.b16 %v5939
    %v5972 = vunpack.c.l.b16 %v5940
    %v5973 = vunpack.c.l.b16 %v5941
    %v5974 = vunpack.c.l.b16 %v5942
    %v5975 = vunpack.c.l.b16 %v5943
    %v5976 = vunpack.c.l.b16 %v5944
    %v5977 = vunpack.c.l.b16 %v5945
    %v5978 = vunpack.c.l.b16 %v5946
    %v5979 = vunpack.c.l.b16 %v5947
    %v5980 = vunpack.c.l.b16 %v5948
    %v5981 = vunpack.c.l.b16 %v5949
    %v5982 = vunpack.c.l.b16 %v5950
    %v5983 = vpack.c.b16 %v5968, %v5967
    %v5984 = vpack.c.b16 %v5970, %v5969
    %v5985 = vpack.c.b16 %v5972, %v5971
    %v5986 = vpack.c.b16 %v5974, %v5973
    %v5987 = vpack.c.b16 %v5976, %v5975
    %v5988 = vpack.c.b16 %v5978, %v5977
    %v5989 = vpack.c.b16 %v5980, %v5979
    %v5990 = vpack.c.b16 %v5982, %v5981
    %5999 = vmatpush.bf16.msra.mxu0 %v5990
    %6000 = vmatpush.bf16.msra.mxu0 %v5989
    %6001 = vmatpush.bf16.msra.mxu0 %v5988
    %6002 = vmatpush.bf16.msra.mxu0 %v5987
    %6003 = vmatpush.bf16.msra.mxu0 %v5986
    %6004 = vmatpush.bf16.msra.mxu0 %v5985
    %6005 = vmatpush.bf16.msra.mxu0 %v5984
    %6006 = vmatpush.bf16.msra.mxu0 %v5983
    %6007 = vmatmul.bf16.gmra.mxu0 %v5927
    %v6008 = vpop.f32.mrf.mxu0
    %v6009 = vadd.f32 0.0, %v6008
    %v6010 = vpop.f32.mrf.mxu0
    %v6011 = vadd.f32 0.0, %v6010
    %6012 = vmatmul.bf16.gmra.mxu0 %v5928
    %v6013 = vpop.f32.mrf.mxu0
    %v6014 = vadd.f32 0.0, %v6013
    %v6015 = vpop.f32.mrf.mxu0
    %v6016 = vadd.f32 0.0, %v6015
    %6017 = vmatmul.bf16.gmra.mxu0 %v5929
    %v6018 = vpop.f32.mrf.mxu0
    %v6019 = vadd.f32 0.0, %v6018
    %v6020 = vpop.f32.mrf.mxu0
    %v6021 = vadd.f32 0.0, %v6020
    %6022 = vmatmul.bf16.gmra.mxu0 %v5930
    %v6023 = vpop.f32.mrf.mxu0
    %v6024 = vadd.f32 0.0, %v6023
    %v6025 = vpop.f32.mrf.mxu0
    %v6026 = vadd.f32 0.0, %v6025
    %6027 = vmatmul.bf16.gmra.mxu0 %v5931
    %v6028 = vpop.f32.mrf.mxu0
    %v6029 = vadd.f32 0.0, %v6028
    %v6030 = vpop.f32.mrf.mxu0
    %v6031 = vadd.f32 0.0, %v6030
    %6032 = vmatmul.bf16.gmra.mxu0 %v5932
    %v6033 = vpop.f32.mrf.mxu0
    %v6034 = vadd.f32 0.0, %v6033
    %v6035 = vpop.f32.mrf.mxu0
    %v6036 = vadd.f32 0.0, %v6035
    %6037 = vmatmul.bf16.gmra.mxu0 %v5933
    %v6038 = vpop.f32.mrf.mxu0
    %v6039 = vadd.f32 0.0, %v6038
    %v6040 = vpop.f32.mrf.mxu0
    %v6041 = vadd.f32 0.0, %v6040
    %6042 = vmatmul.bf16.gmra.mxu0 %v5934
    %v6043 = vpop.f32.mrf.mxu0
    %v6044 = vadd.f32 0.0, %v6043
    %v6045 = vpop.f32.mrf.mxu0
    %v6046 = vadd.f32 0.0, %v6045
    %6047 = vdwg.mxu0
    %v6064 = vunpack.c.l.b16 %v5839
    %v6065 = vunpack.c.l.b16 %v5840
    %v6066 = vunpack.c.l.b16 %v5841
    %v6067 = vunpack.c.l.b16 %v5842
    %v6068 = vunpack.c.l.b16 %v5843
    %v6069 = vunpack.c.l.b16 %v5844
    %v6070 = vunpack.c.l.b16 %v5845
    %v6071 = vunpack.c.l.b16 %v5846
    %v6072 = vunpack.c.l.b16 %v5847
    %v6073 = vunpack.c.l.b16 %v5848
    %v6074 = vunpack.c.l.b16 %v5849
    %v6075 = vunpack.c.l.b16 %v5850
    %v6076 = vunpack.c.l.b16 %v5851
    %v6077 = vunpack.c.l.b16 %v5852
    %v6078 = vunpack.c.l.b16 %v5853
    %v6079 = vunpack.c.l.b16 %v5854
    %v6080 = vpack.c.b16 %v6065, %v6064
    %v6081 = vpack.c.b16 %v6067, %v6066
    %v6082 = vpack.c.b16 %v6069, %v6068
    %v6083 = vpack.c.b16 %v6071, %v6070
    %v6084 = vpack.c.b16 %v6073, %v6072
    %v6085 = vpack.c.b16 %v6075, %v6074
    %v6086 = vpack.c.b16 %v6077, %v6076
    %v6087 = vpack.c.b16 %v6079, %v6078
    %6096 = vmatpush.bf16.msra.mxu0 %v6087
    %6097 = vmatpush.bf16.msra.mxu0 %v6086
    %6098 = vmatpush.bf16.msra.mxu0 %v6085
    %6099 = vmatpush.bf16.msra.mxu0 %v6084
    %6100 = vmatpush.bf16.msra.mxu0 %v6083
    %6101 = vmatpush.bf16.msra.mxu0 %v6082
    %6102 = vmatpush.bf16.msra.mxu0 %v6081
    %6103 = vmatpush.bf16.msra.mxu0 %v6080
    %6104 = vmatmul.bf16.gmra.mxu0 %v5831
    %v6105 = vpop.f32.mrf.mxu0
    %v6106 = vadd.f32 %v6009, %v6105
    %v6107 = vpop.f32.mrf.mxu0
    %v6108 = vadd.f32 %v6011, %v6107
    %6109 = vmatmul.bf16.gmra.mxu0 %v5832
    %v6110 = vpop.f32.mrf.mxu0
    %v6111 = vadd.f32 %v6014, %v6110
    %v6112 = vpop.f32.mrf.mxu0
    %v6113 = vadd.f32 %v6016, %v6112
    %6114 = vmatmul.bf16.gmra.mxu0 %v5833
    %v6115 = vpop.f32.mrf.mxu0
    %v6116 = vadd.f32 %v6019, %v6115
    %v6117 = vpop.f32.mrf.mxu0
    %v6118 = vadd.f32 %v6021, %v6117
    %6119 = vmatmul.bf16.gmra.mxu0 %v5834
    %v6120 = vpop.f32.mrf.mxu0
    %v6121 = vadd.f32 %v6024, %v6120
    %v6122 = vpop.f32.mrf.mxu0
    %v6123 = vadd.f32 %v6026, %v6122
    %6124 = vmatmul.bf16.gmra.mxu0 %v5835
    %v6125 = vpop.f32.mrf.mxu0
    %v6126 = vadd.f32 %v6029, %v6125
    %v6127 = vpop.f32.mrf.mxu0
    %v6128 = vadd.f32 %v6031, %v6127
    %6129 = vmatmul.bf16.gmra.mxu0 %v5836
    %v6130 = vpop.f32.mrf.mxu0
    %v6131 = vadd.f32 %v6034, %v6130
    %v6132 = vpop.f32.mrf.mxu0
    %v6133 = vadd.f32 %v6036, %v6132
    %6134 = vmatmul.bf16.gmra.mxu0 %v5837
    %v6135 = vpop.f32.mrf.mxu0
    %v6136 = vadd.f32 %v6039, %v6135
    %v6137 = vpop.f32.mrf.mxu0
    %v6138 = vadd.f32 %v6041, %v6137
    %6139 = vmatmul.bf16.gmra.mxu0 %v5838
    %v6140 = vpop.f32.mrf.mxu0
    %v6141 = vadd.f32 %v6044, %v6140
    %v6142 = vpop.f32.mrf.mxu0
    %v6143 = vadd.f32 %v6046, %v6142
    %6144 = vdwg.mxu0
    %v6145 = vrot.slane %v5815, 2
    %v6146 = vrot.slane %v5769, 2
    %v6147 = vsel %vm667, %v6145, %v6146
    %v6148 = vrot.slane %v5823, 2
    %v6149 = vsel %vm667, %v6146, %v6148
    %v6150 = vrot.slane %v5816, 2
    %v6151 = vrot.slane %v5772, 2
    %v6152 = vsel %vm667, %v6150, %v6151
    %v6153 = vrot.slane %v5824, 2
    %v6154 = vsel %vm667, %v6151, %v6153
    %v6155 = vrot.slane %v5817, 2
    %v6156 = vrot.slane %v5775, 2
    %v6157 = vsel %vm667, %v6155, %v6156
    %v6158 = vrot.slane %v5825, 2
    %v6159 = vsel %vm667, %v6156, %v6158
    %v6160 = vrot.slane %v5818, 2
    %v6161 = vrot.slane %v5778, 2
    %v6162 = vsel %vm667, %v6160, %v6161
    %v6163 = vrot.slane %v5826, 2
    %v6164 = vsel %vm667, %v6161, %v6163
    %v6165 = vrot.slane %v5819, 2
    %v6166 = vrot.slane %v5781, 2
    %v6167 = vsel %vm667, %v6165, %v6166
    %v6168 = vrot.slane %v5827, 2
    %v6169 = vsel %vm667, %v6166, %v6168
    %v6170 = vrot.slane %v5820, 2
    %v6171 = vrot.slane %v5784, 2
    %v6172 = vsel %vm667, %v6170, %v6171
    %v6173 = vrot.slane %v5828, 2
    %v6174 = vsel %vm667, %v6171, %v6173
    %v6175 = vrot.slane %v5821, 2
    %v6176 = vrot.slane %v5787, 2
    %v6177 = vsel %vm667, %v6175, %v6176
    %v6178 = vrot.slane %v5829, 2
    %v6179 = vsel %vm667, %v6176, %v6178
    %v6180 = vrot.slane %v5822, 2
    %v6181 = vrot.slane %v5790, 2
    %v6182 = vsel %vm667, %v6180, %v6181
    %v6183 = vrot.slane %v5830, 2
    %v6184 = vsel %vm667, %v6181, %v6183
    %v6201 = vpack.c.bf16 %v6149, %v6147
    %v6202 = vpack.c.bf16 %v6154, %v6152
    %v6203 = vpack.c.bf16 %v6159, %v6157
    %v6204 = vpack.c.bf16 %v6164, %v6162
    %v6205 = vpack.c.bf16 %v6169, %v6167
    %v6206 = vpack.c.bf16 %v6174, %v6172
    %v6207 = vpack.c.bf16 %v6179, %v6177
    %v6208 = vpack.c.bf16 %v6184, %v6182
    %v6209 = vld [vmem:[%s2 + $0x1b0] sm:$0xf]
    %v6210 = vld [vmem:[%s2 + $0x1b4] sm:$0xf]
    %v6211 = vld [vmem:[%s2 + $0x1b8] sm:$0xf]
    %v6212 = vld [vmem:[%s2 + $0x1bc] sm:$0xf]
    %v6213 = vld [vmem:[%s2 + $0x1c0] sm:$0xf]
    %v6214 = vld [vmem:[%s2 + $0x1c4] sm:$0xf]
    %v6215 = vld [vmem:[%s2 + $0x1c8] sm:$0xf]
    %v6216 = vld [vmem:[%s2 + $0x1cc] sm:$0xf]
    %v6217 = vld [vmem:[%s2 + $0x1d0] sm:$0xf]
    %v6218 = vld [vmem:[%s2 + $0x1d4] sm:$0xf]
    %v6219 = vld [vmem:[%s2 + $0x1d8] sm:$0xf]
    %v6220 = vld [vmem:[%s2 + $0x1dc] sm:$0xf]
    %v6221 = vld [vmem:[%s2 + $0x1e0] sm:$0xf]
    %v6222 = vld [vmem:[%s2 + $0x1e4] sm:$0xf]
    %v6223 = vld [vmem:[%s2 + $0x1e8] sm:$0xf]
    %v6224 = vld [vmem:[%s2 + $0x1ec] sm:$0xf]
    %v6241 = vunpack.c.l.b16 %v6209
    %v6242 = vunpack.c.l.b16 %v6210
    %v6243 = vunpack.c.l.b16 %v6211
    %v6244 = vunpack.c.l.b16 %v6212
    %v6245 = vunpack.c.l.b16 %v6213
    %v6246 = vunpack.c.l.b16 %v6214
    %v6247 = vunpack.c.l.b16 %v6215
    %v6248 = vunpack.c.l.b16 %v6216
    %v6249 = vunpack.c.l.b16 %v6217
    %v6250 = vunpack.c.l.b16 %v6218
    %v6251 = vunpack.c.l.b16 %v6219
    %v6252 = vunpack.c.l.b16 %v6220
    %v6253 = vunpack.c.l.b16 %v6221
    %v6254 = vunpack.c.l.b16 %v6222
    %v6255 = vunpack.c.l.b16 %v6223
    %v6256 = vunpack.c.l.b16 %v6224
    %v6257 = vpack.c.b16 %v6242, %v6241
    %v6258 = vpack.c.b16 %v6244, %v6243
    %v6259 = vpack.c.b16 %v6246, %v6245
    %v6260 = vpack.c.b16 %v6248, %v6247
    %v6261 = vpack.c.b16 %v6250, %v6249
    %v6262 = vpack.c.b16 %v6252, %v6251
    %v6263 = vpack.c.b16 %v6254, %v6253
    %v6264 = vpack.c.b16 %v6256, %v6255
    %6273 = vmatpush.bf16.msra.mxu0 %v6264
    %6274 = vmatpush.bf16.msra.mxu0 %v6263
    %6275 = vmatpush.bf16.msra.mxu0 %v6262
    %6276 = vmatpush.bf16.msra.mxu0 %v6261
    %6277 = vmatpush.bf16.msra.mxu0 %v6260
    %6278 = vmatpush.bf16.msra.mxu0 %v6259
    %6279 = vmatpush.bf16.msra.mxu0 %v6258
    %6280 = vmatpush.bf16.msra.mxu0 %v6257
    %6281 = vmatmul.bf16.gmra.mxu0 %v6201
    %v6282 = vpop.f32.mrf.mxu0
    %v6283 = vadd.f32 0.0, %v6282
    %v6284 = vpop.f32.mrf.mxu0
    %v6285 = vadd.f32 0.0, %v6284
    %6286 = vmatmul.bf16.gmra.mxu0 %v6202
    %v6287 = vpop.f32.mrf.mxu0
    %v6288 = vadd.f32 0.0, %v6287
    %v6289 = vpop.f32.mrf.mxu0
    %v6290 = vadd.f32 0.0, %v6289
    %6291 = vmatmul.bf16.gmra.mxu0 %v6203
    %v6292 = vpop.f32.mrf.mxu0
    %v6293 = vadd.f32 0.0, %v6292
    %v6294 = vpop.f32.mrf.mxu0
    %v6295 = vadd.f32 0.0, %v6294
    %6296 = vmatmul.bf16.gmra.mxu0 %v6204
    %v6297 = vpop.f32.mrf.mxu0
    %v6298 = vadd.f32 0.0, %v6297
    %v6299 = vpop.f32.mrf.mxu0
    %v6300 = vadd.f32 0.0, %v6299
    %6301 = vmatmul.bf16.gmra.mxu0 %v6205
    %v6302 = vpop.f32.mrf.mxu0
    %v6303 = vadd.f32 0.0, %v6302
    %v6304 = vpop.f32.mrf.mxu0
    %v6305 = vadd.f32 0.0, %v6304
    %6306 = vmatmul.bf16.gmra.mxu0 %v6206
    %v6307 = vpop.f32.mrf.mxu0
    %v6308 = vadd.f32 0.0, %v6307
    %v6309 = vpop.f32.mrf.mxu0
    %v6310 = vadd.f32 0.0, %v6309
    %6311 = vmatmul.bf16.gmra.mxu0 %v6207
    %v6312 = vpop.f32.mrf.mxu0
    %v6313 = vadd.f32 0.0, %v6312
    %v6314 = vpop.f32.mrf.mxu0
    %v6315 = vadd.f32 0.0, %v6314
    %6316 = vmatmul.bf16.gmra.mxu0 %v6208
    %v6317 = vpop.f32.mrf.mxu0
    %v6318 = vadd.f32 0.0, %v6317
    %v6319 = vpop.f32.mrf.mxu0
    %v6320 = vadd.f32 0.0, %v6319
    %6321 = vdwg.mxu0
    %v6322 = vadd.f32 %v6106, %v6283
    %v6323 = vadd.f32 %v6108, %v6285
    %v6324 = vadd.f32 %v6111, %v6288
    %v6325 = vadd.f32 %v6113, %v6290
    %v6326 = vadd.f32 %v6116, %v6293
    %v6327 = vadd.f32 %v6118, %v6295
    %v6328 = vadd.f32 %v6121, %v6298
    %v6329 = vadd.f32 %v6123, %v6300
    %v6330 = vadd.f32 %v6126, %v6303
    %v6331 = vadd.f32 %v6128, %v6305
    %v6332 = vadd.f32 %v6131, %v6308
    %v6333 = vadd.f32 %v6133, %v6310
    %v6334 = vadd.f32 %v6136, %v6313
    %v6335 = vadd.f32 %v6138, %v6315
    %v6336 = vadd.f32 %v6141, %v6318
    %v6337 = vadd.f32 %v6143, %v6320
    %v6339 = vperm.slane %v5749, 0
    %v6341 = vmul.f32 %v6322, %v6339
    %v6342 = vmul.f32 %v6323, %v6339
    %v6343 = vmul.f32 %v6324, %v6339
    %v6344 = vmul.f32 %v6325, %v6339
    %v6345 = vmul.f32 %v6326, %v6339
    %v6346 = vmul.f32 %v6327, %v6339
    %v6347 = vmul.f32 %v6328, %v6339
    %v6348 = vmul.f32 %v6329, %v6339
    %v6349 = vmul.f32 %v6330, %v6339
    %v6350 = vmul.f32 %v6331, %v6339
    %v6351 = vmul.f32 %v6332, %v6339
    %v6352 = vmul.f32 %v6333, %v6339
    %v6353 = vmul.f32 %v6334, %v6339
    %v6354 = vmul.f32 %v6335, %v6339
    %v6355 = vmul.f32 %v6336, %v6339
    %v6356 = vmul.f32 %v6337, %v6339
    %v6358 = vperm.slane %v5750, 0
    %v6360 = vadd.f32 %v6341, %v6358
    %v6361 = vadd.f32 %v6342, %v6358
    %v6362 = vadd.f32 %v6343, %v6358
    %v6363 = vadd.f32 %v6344, %v6358
    %v6364 = vadd.f32 %v6345, %v6358
    %v6365 = vadd.f32 %v6346, %v6358
    %v6366 = vadd.f32 %v6347, %v6358
    %v6367 = vadd.f32 %v6348, %v6358
    %v6368 = vadd.f32 %v6349, %v6358
    %v6369 = vadd.f32 %v6350, %v6358
    %v6370 = vadd.f32 %v6351, %v6358
    %v6371 = vadd.f32 %v6352, %v6358
    %v6372 = vadd.f32 %v6353, %v6358
    %v6373 = vadd.f32 %v6354, %v6358
    %v6374 = vadd.f32 %v6355, %v6358
    %v6375 = vadd.f32 %v6356, %v6358
    %v6376 = vmax.f32 %v6360, 0.0
    %v6377 = vmax.f32 %v6361, 0.0
    %v6378 = vmax.f32 %v6362, 0.0
    %v6379 = vmax.f32 %v6363, 0.0
    %v6380 = vmax.f32 %v6364, 0.0
    %v6381 = vmax.f32 %v6365, 0.0
    %v6382 = vmax.f32 %v6366, 0.0
    %v6383 = vmax.f32 %v6367, 0.0
    %v6384 = vmax.f32 %v6368, 0.0
    %v6385 = vmax.f32 %v6369, 0.0
    %v6386 = vmax.f32 %v6370, 0.0
    %v6387 = vmax.f32 %v6371, 0.0
    %v6388 = vmax.f32 %v6372, 0.0
    %v6389 = vmax.f32 %v6373, 0.0
    %v6390 = vmax.f32 %v6374, 0.0
    %v6391 = vmax.f32 %v6375, 0.0
    %v6392 = vmax.f32 %v6376, %v6377
    %v6393 = vrot.slane %v6392, 4
    %v6394 = vmax.f32 %v6392, %v6393
    %v6395 = vrot.slane %v6394, 2
    %v6396 = vmax.f32 %v6394, %v6395
    %v6397 = vrot.slane %v6396, 1
    %v6398 = vmax.f32 %v6396, %v6397
    %v6399 = vmax.f32 %v6378, %v6379
    %v6400 = vrot.slane %v6399, 4
    %v6401 = vmax.f32 %v6399, %v6400
    %v6402 = vrot.slane %v6401, 2
    %v6403 = vmax.f32 %v6401, %v6402
    %v6404 = vrot.slane %v6403, 1
    %v6405 = vmax.f32 %v6403, %v6404
    %v6406 = vmax.f32 %v6380, %v6381
    %v6407 = vrot.slane %v6406, 4
    %v6408 = vmax.f32 %v6406, %v6407
    %v6409 = vrot.slane %v6408, 2
    %v6410 = vmax.f32 %v6408, %v6409
    %v6411 = vrot.slane %v6410, 1
    %v6412 = vmax.f32 %v6410, %v6411
    %v6413 = vmax.f32 %v6382, %v6383
    %v6414 = vrot.slane %v6413, 4
    %v6415 = vmax.f32 %v6413, %v6414
    %v6416 = vrot.slane %v6415, 2
    %v6417 = vmax.f32 %v6415, %v6416
    %v6418 = vrot.slane %v6417, 1
    %v6419 = vmax.f32 %v6417, %v6418
    %v6420 = vmax.f32 %v6384, %v6385
    %v6421 = vrot.slane %v6420, 4
    %v6422 = vmax.f32 %v6420, %v6421
    %v6423 = vrot.slane %v6422, 2
    %v6424 = vmax.f32 %v6422, %v6423
    %v6425 = vrot.slane %v6424, 1
    %v6426 = vmax.f32 %v6424, %v6425
    %v6427 = vmax.f32 %v6386, %v6387
    %v6428 = vrot.slane %v6427, 4
    %v6429 = vmax.f32 %v6427, %v6428
    %v6430 = vrot.slane %v6429, 2
    %v6431 = vmax.f32 %v6429, %v6430
    %v6432 = vrot.slane %v6431, 1
    %v6433 = vmax.f32 %v6431, %v6432
    %v6434 = vmax.f32 %v6388, %v6389
    %v6435 = vrot.slane %v6434, 4
    %v6436 = vmax.f32 %v6434, %v6435
    %v6437 = vrot.slane %v6436, 2
    %v6438 = vmax.f32 %v6436, %v6437
    %v6439 = vrot.slane %v6438, 1
    %v6440 = vmax.f32 %v6438, %v6439
    %v6441 = vmax.f32 %v6390, %v6391
    %v6442 = vrot.slane %v6441, 4
    %v6443 = vmax.f32 %v6441, %v6442
    %v6444 = vrot.slane %v6443, 2
    %v6445 = vmax.f32 %v6443, %v6444
    %v6446 = vrot.slane %v6445, 1
    %v6447 = vmax.f32 %v6445, %v6446
    %v6448 = vpack.c.bf16 %v6398, %v6398
    %v6449 = vpack.c.bf16 %v6405, %v6405
    %v6450 = vpack.c.bf16 %v6412, %v6412
    %v6451 = vpack.c.bf16 %v6419, %v6419
    %v6452 = vpack.c.bf16 %v6426, %v6426
    %v6453 = vpack.c.bf16 %v6433, %v6433
    %v6454 = vpack.c.bf16 %v6440, %v6440
    %v6455 = vpack.c.bf16 %v6447, %v6447
    %v6456 = vld [vmem:[%s3] sm:$0xff]
    %v6457 = vld [vmem:[%s3 + $0x8] sm:$0xff]
    %v6458 = vld [vmem:[%s3 + $0x10] sm:$0xff]
    %v6459 = vld [vmem:[%s3 + $0x18] sm:$0xff]
    %v6460 = vld [vmem:[%s3 + $0x20] sm:$0xff]
    %v6461 = vld [vmem:[%s3 + $0x28] sm:$0xff]
    %v6462 = vld [vmem:[%s3 + $0x30] sm:$0xff]
    %v6463 = vld [vmem:[%s3 + $0x38] sm:$0xff]
    %v6464 = vld [vmem:[%s3 + $0x40] sm:$0xff]
    %v6465 = vld [vmem:[%s3 + $0x48] sm:$0xff]
    %v6466 = vld [vmem:[%s3 + $0x50] sm:$0xff]
    %v6467 = vld [vmem:[%s3 + $0x58] sm:$0xff]
    %v6468 = vld [vmem:[%s3 + $0x60] sm:$0xff]
    %v6469 = vld [vmem:[%s3 + $0x68] sm:$0xff]
    %v6470 = vld [vmem:[%s3 + $0x70] sm:$0xff]
    %v6471 = vld [vmem:[%s3 + $0x78] sm:$0xff]
    %v6472 = vld [vmem:[%s7 + $0x7] sm:$0x3]
    %v6474 = vperm.slane %v6472, 0
    %v6475 = vperm.slane %v6472, 1
    %v6486 = vunpack.c.l.b16 %v6448
    %v6487 = vunpack.c.l.b16 %v6449
    %v6488 = vunpack.c.l.b16 %v6450
    %v6489 = vunpack.c.l.b16 %v6451
    %v6490 = vunpack.c.l.b16 %v6452
    %v6491 = vunpack.c.l.b16 %v6453
    %v6492 = vunpack.c.l.b16 %v6454
    %v6493 = vunpack.c.l.b16 %v6455
    %v6494 = vsel %vm2066, %v6487, %v6486
    %v6495 = vsel %vm2068, %v6488, %v6494
    %v6496 = vsel %vm2070, %v6489, %v6495
    %v6497 = vsel %vm2072, %v6490, %v6496
    %v6498 = vsel %vm2074, %v6491, %v6497
    %v6499 = vsel %vm2076, %v6492, %v6498
    %v6500 = vsel %vm2078, %v6493, %v6499
    %v6501 = vpack.c.b16 %v6500, %v6500
    %v6519 = vunpack.c.l.b16 %v6456
    %v6520 = vunpack.c.h.b16 %v6456
    %v6521 = vunpack.c.l.b16 %v6457
    %v6522 = vunpack.c.h.b16 %v6457
    %v6523 = vunpack.c.l.b16 %v6458
    %v6524 = vunpack.c.h.b16 %v6458
    %v6525 = vunpack.c.l.b16 %v6459
    %v6526 = vunpack.c.h.b16 %v6459
    %v6527 = vunpack.c.l.b16 %v6460
    %v6528 = vunpack.c.h.b16 %v6460
    %v6529 = vunpack.c.l.b16 %v6461
    %v6530 = vunpack.c.h.b16 %v6461
    %v6531 = vunpack.c.l.b16 %v6462
    %v6532 = vunpack.c.h.b16 %v6462
    %v6533 = vunpack.c.l.b16 %v6463
    %v6534 = vunpack.c.h.b16 %v6463
    %v6535 = vunpack.c.l.b16 %v6464
    %v6536 = vunpack.c.h.b16 %v6464
    %v6537 = vunpack.c.l.b16 %v6465
    %v6538 = vunpack.c.h.b16 %v6465
    %v6539 = vunpack.c.l.b16 %v6466
    %v6540 = vunpack.c.h.b16 %v6466
    %v6541 = vunpack.c.l.b16 %v6467
    %v6542 = vunpack.c.h.b16 %v6467
    %v6543 = vunpack.c.l.b16 %v6468
    %v6544 = vunpack.c.h.b16 %v6468
    %v6545 = vunpack.c.l.b16 %v6469
    %v6546 = vunpack.c.h.b16 %v6469
    %v6547 = vunpack.c.l.b16 %v6470
    %v6548 = vunpack.c.h.b16 %v6470
    %v6549 = vunpack.c.l.b16 %v6471
    %v6550 = vunpack.c.h.b16 %v6471
    %v6551 = vpack.c.b16 %v6521, %v6519
    %v6552 = vpack.c.b16 %v6522, %v6520
    %v6553 = vpack.c.b16 %v6525, %v6523
    %v6554 = vpack.c.b16 %v6526, %v6524
    %v6555 = vpack.c.b16 %v6529, %v6527
    %v6556 = vpack.c.b16 %v6530, %v6528
    %v6557 = vpack.c.b16 %v6533, %v6531
    %v6558 = vpack.c.b16 %v6534, %v6532
    %v6559 = vpack.c.b16 %v6537, %v6535
    %v6560 = vpack.c.b16 %v6538, %v6536
    %v6561 = vpack.c.b16 %v6541, %v6539
    %v6562 = vpack.c.b16 %v6542, %v6540
    %v6563 = vpack.c.b16 %v6545, %v6543
    %v6564 = vpack.c.b16 %v6546, %v6544
    %v6565 = vpack.c.b16 %v6549, %v6547
    %v6566 = vpack.c.b16 %v6550, %v6548
    %6583 = vmatpush.bf16.msra.mxu0 %v6565
    %6584 = vmatpush.bf16.msra.mxu0 %v6563
    %6585 = vmatpush.bf16.msra.mxu0 %v6561
    %6586 = vmatpush.bf16.msra.mxu0 %v6559
    %6587 = vmatpush.bf16.msra.mxu0 %v6557
    %6588 = vmatpush.bf16.msra.mxu0 %v6555
    %6589 = vmatpush.bf16.msra.mxu0 %v6553
    %6590 = vmatpush.bf16.msra.mxu0 %v6551
    %6591 = vmatmul.bf16.gmra.mxu0 %v6501
    %v6592 = vpop.f32.mrf.mxu0
    %v6593 = vadd.f32 %v6474, %v6592
    %v6594 = vpop.f32.mrf.mxu0
    %6595 = vdwg.mxu0
    %6596 = vmatpush.bf16.msra.mxu0 %v6566
    %6597 = vmatpush.bf16.msra.mxu0 %v6564
    %6598 = vmatpush.bf16.msra.mxu0 %v6562
    %6599 = vmatpush.bf16.msra.mxu0 %v6560
    %6600 = vmatpush.bf16.msra.mxu0 %v6558
    %6601 = vmatpush.bf16.msra.mxu0 %v6556
    %6602 = vmatpush.bf16.msra.mxu0 %v6554
    %6603 = vmatpush.bf16.msra.mxu0 %v6552
    %6604 = vmatmul.bf16.gmra.mxu0 %v6501
    %v6605 = vpop.f32.mrf.mxu0
    %v6606 = vadd.f32 %v6475, %v6605
    %v6607 = vpop.f32.mrf.mxu0
    %6608 = vdwg.mxu0
    %v6609 = vmax.f32 %v6593, 0.0
    %v6610 = vmax.f32 %v6606, 0.0
    %v6611 = vpack.c.bf16 %v6609, %v6609
    %v6612 = vpack.c.bf16 %v6610, %v6610
    %v6613 = vld [vmem:[%s2 + $0x1f0] sm:$0xf]
    %v6614 = vld [vmem:[%s2 + $0x1f4] sm:$0xf]
    %v6615 = vld [vmem:[%s2 + $0x1f8] sm:$0xf]
    %v6616 = vld [vmem:[%s2 + $0x1fc] sm:$0xf]
    %v6617 = vld [vmem:[%s2 + $0x200] sm:$0xf]
    %v6618 = vld [vmem:[%s2 + $0x204] sm:$0xf]
    %v6619 = vld [vmem:[%s2 + $0x208] sm:$0xf]
    %v6620 = vld [vmem:[%s2 + $0x20c] sm:$0xf]
    %v6621 = vld [vmem:[%s2 + $0x210] sm:$0xf]
    %v6622 = vld [vmem:[%s2 + $0x214] sm:$0xf]
    %v6623 = vld [vmem:[%s2 + $0x218] sm:$0xf]
    %v6624 = vld [vmem:[%s2 + $0x21c] sm:$0xf]
    %v6625 = vld [vmem:[%s2 + $0x220] sm:$0xf]
    %v6626 = vld [vmem:[%s2 + $0x224] sm:$0xf]
    %v6627 = vld [vmem:[%s2 + $0x228] sm:$0xf]
    %v6628 = vld [vmem:[%s2 + $0x22c] sm:$0xf]
    %v6629 = vld [vmem:[%s2 + $0x230] sm:$0xf]
    %v6630 = vld [vmem:[%s2 + $0x234] sm:$0xf]
    %v6631 = vld [vmem:[%s2 + $0x238] sm:$0xf]
    %v6632 = vld [vmem:[%s2 + $0x23c] sm:$0xf]
    %v6633 = vld [vmem:[%s2 + $0x240] sm:$0xf]
    %v6634 = vld [vmem:[%s2 + $0x244] sm:$0xf]
    %v6635 = vld [vmem:[%s2 + $0x248] sm:$0xf]
    %v6636 = vld [vmem:[%s2 + $0x24c] sm:$0xf]
    %v6637 = vld [vmem:[%s2 + $0x250] sm:$0xf]
    %v6638 = vld [vmem:[%s2 + $0x254] sm:$0xf]
    %v6639 = vld [vmem:[%s2 + $0x258] sm:$0xf]
    %v6640 = vld [vmem:[%s2 + $0x25c] sm:$0xf]
    %v6641 = vld [vmem:[%s2 + $0x260] sm:$0xf]
    %v6642 = vld [vmem:[%s2 + $0x264] sm:$0xf]
    %v6643 = vld [vmem:[%s2 + $0x268] sm:$0xf]
    %v6644 = vld [vmem:[%s2 + $0x26c] sm:$0xf]
    %v6645 = vld [vmem:[%s7 + $0x9] sm:$0x1]
    %v6647 = vperm.slane %v6645, 0
    %v6681 = vunpack.c.l.b16 %v6613
    %v6682 = vunpack.c.l.b16 %v6614
    %v6683 = vunpack.c.l.b16 %v6615
    %v6684 = vunpack.c.l.b16 %v6616
    %v6685 = vunpack.c.l.b16 %v6617
    %v6686 = vunpack.c.l.b16 %v6618
    %v6687 = vunpack.c.l.b16 %v6619
    %v6688 = vunpack.c.l.b16 %v6620
    %v6689 = vunpack.c.l.b16 %v6621
    %v6690 = vunpack.c.l.b16 %v6622
    %v6691 = vunpack.c.l.b16 %v6623
    %v6692 = vunpack.c.l.b16 %v6624
    %v6693 = vunpack.c.l.b16 %v6625
    %v6694 = vunpack.c.l.b16 %v6626
    %v6695 = vunpack.c.l.b16 %v6627
    %v6696 = vunpack.c.l.b16 %v6628
    %v6697 = vunpack.c.l.b16 %v6629
    %v6698 = vunpack.c.l.b16 %v6630
    %v6699 = vunpack.c.l.b16 %v6631
    %v6700 = vunpack.c.l.b16 %v6632
    %v6701 = vunpack.c.l.b16 %v6633
    %v6702 = vunpack.c.l.b16 %v6634
    %v6703 = vunpack.c.l.b16 %v6635
    %v6704 = vunpack.c.l.b16 %v6636
    %v6705 = vunpack.c.l.b16 %v6637
    %v6706 = vunpack.c.l.b16 %v6638
    %v6707 = vunpack.c.l.b16 %v6639
    %v6708 = vunpack.c.l.b16 %v6640
    %v6709 = vunpack.c.l.b16 %v6641
    %v6710 = vunpack.c.l.b16 %v6642
    %v6711 = vunpack.c.l.b16 %v6643
    %v6712 = vunpack.c.l.b16 %v6644
    %v6713 = vpack.c.b16 %v6682, %v6681
    %v6714 = vpack.c.b16 %v6684, %v6683
    %v6715 = vpack.c.b16 %v6686, %v6685
    %v6716 = vpack.c.b16 %v6688, %v6687
    %v6717 = vpack.c.b16 %v6690, %v6689
    %v6718 = vpack.c.b16 %v6692, %v6691
    %v6719 = vpack.c.b16 %v6694, %v6693
    %v6720 = vpack.c.b16 %v6696, %v6695
    %v6721 = vpack.c.b16 %v6698, %v6697
    %v6722 = vpack.c.b16 %v6700, %v6699
    %v6723 = vpack.c.b16 %v6702, %v6701
    %v6724 = vpack.c.b16 %v6704, %v6703
    %v6725 = vpack.c.b16 %v6706, %v6705
    %v6726 = vpack.c.b16 %v6708, %v6707
    %v6727 = vpack.c.b16 %v6710, %v6709
    %v6728 = vpack.c.b16 %v6712, %v6711
    %6745 = vmatpush.bf16.msra.mxu0 %v6720
    %6746 = vmatpush.bf16.msra.mxu0 %v6719
    %6747 = vmatpush.bf16.msra.mxu0 %v6718
    %6748 = vmatpush.bf16.msra.mxu0 %v6717
    %6749 = vmatpush.bf16.msra.mxu0 %v6716
    %6750 = vmatpush.bf16.msra.mxu0 %v6715
    %6751 = vmatpush.bf16.msra.mxu0 %v6714
    %6752 = vmatpush.bf16.msra.mxu0 %v6713
    %6753 = vmatmul.bf16.gmra.mxu0 %v6611
    %v6754 = vpop.f32.mrf.mxu0
    %v6755 = vadd.f32 %v6647, %v6754
    %v6756 = vpop.f32.mrf.mxu0
    %6757 = vdwg.mxu0
    %6758 = vmatpush.bf16.msra.mxu0 %v6728
    %6759 = vmatpush.bf16.msra.mxu0 %v6727
    %6760 = vmatpush.bf16.msra.mxu0 %v6726
    %6761 = vmatpush.bf16.msra.mxu0 %v6725
    %6762 = vmatpush.bf16.msra.mxu0 %v6724
    %6763 = vmatpush.bf16.msra.mxu0 %v6723
    %6764 = vmatpush.bf16.msra.mxu0 %v6722
    %6765 = vmatpush.bf16.msra.mxu0 %v6721
    %6766 = vmatmul.bf16.gmra.mxu0 %v6612
    %v6767 = vpop.f32.mrf.mxu0
    %v6768 = vadd.f32 %v6755, %v6767
    %v6769 = vpop.f32.mrf.mxu0
    %6770 = vdwg.mxu0
    %v6771 = vmax.f32 %v6768, 0.0
    %v6772 = vpack.c.bf16 %v83, %v83
    %v6773 = vld [vmem:[%s3 + $0x80] sm:$0xff]
    %v6774 = vld [vmem:[%s3 + $0x88] sm:$0xff]
    %v6775 = vld [vmem:[%s3 + $0x90] sm:$0xff]
    %v6776 = vld [vmem:[%s3 + $0x98] sm:$0xff]
    %v6777 = vld [vmem:[%s3 + $0xa0] sm:$0xff]
    %v6778 = vld [vmem:[%s3 + $0xa8] sm:$0xff]
    %v6779 = vld [vmem:[%s3 + $0xb0] sm:$0xff]
    %v6780 = vld [vmem:[%s3 + $0xb8] sm:$0xff]
    %v6781 = vld [vmem:[%s3 + $0xc0] sm:$0xff]
    %v6782 = vld [vmem:[%s3 + $0xc8] sm:$0xff]
    %v6783 = vld [vmem:[%s3 + $0xd0] sm:$0xff]
    %v6784 = vld [vmem:[%s3 + $0xd8] sm:$0xff]
    %v6785 = vld [vmem:[%s3 + $0xe0] sm:$0xff]
    %v6786 = vld [vmem:[%s3 + $0xe8] sm:$0xff]
    %v6787 = vld [vmem:[%s3 + $0xf0] sm:$0xff]
    %v6788 = vld [vmem:[%s3 + $0xf8] sm:$0xff]
    %v6789 = vpack.c.bf16 %v6771, %v6771
    %v6790 = vld [vmem:[%s3 + $0x100] sm:$0xff]
    %v6791 = vld [vmem:[%s3 + $0x108] sm:$0xff]
    %v6792 = vld [vmem:[%s3 + $0x110] sm:$0xff]
    %v6793 = vld [vmem:[%s3 + $0x118] sm:$0xff]
    %v6794 = vld [vmem:[%s3 + $0x120] sm:$0xff]
    %v6795 = vld [vmem:[%s3 + $0x128] sm:$0xff]
    %v6796 = vld [vmem:[%s3 + $0x130] sm:$0xff]
    %v6797 = vld [vmem:[%s3 + $0x138] sm:$0xff]
    %v6798 = vld [vmem:[%s3 + $0x140] sm:$0xff]
    %v6799 = vld [vmem:[%s3 + $0x148] sm:$0xff]
    %v6800 = vld [vmem:[%s3 + $0x150] sm:$0xff]
    %v6801 = vld [vmem:[%s3 + $0x158] sm:$0xff]
    %v6802 = vld [vmem:[%s3 + $0x160] sm:$0xff]
    %v6803 = vld [vmem:[%s3 + $0x168] sm:$0xff]
    %v6804 = vld [vmem:[%s3 + $0x170] sm:$0xff]
    %v6805 = vld [vmem:[%s3 + $0x178] sm:$0xff]
    %v6822 = vunpack.c.l.b16 %v6790
    %v6823 = vunpack.c.h.b16 %v6790
    %v6824 = vunpack.c.l.b16 %v6791
    %v6825 = vunpack.c.h.b16 %v6791
    %v6826 = vunpack.c.l.b16 %v6792
    %v6827 = vunpack.c.h.b16 %v6792
    %v6828 = vunpack.c.l.b16 %v6793
    %v6829 = vunpack.c.h.b16 %v6793
    %v6830 = vunpack.c.l.b16 %v6794
    %v6831 = vunpack.c.h.b16 %v6794
    %v6832 = vunpack.c.l.b16 %v6795
    %v6833 = vunpack.c.h.b16 %v6795
    %v6834 = vunpack.c.l.b16 %v6796
    %v6835 = vunpack.c.h.b16 %v6796
    %v6836 = vunpack.c.l.b16 %v6797
    %v6837 = vunpack.c.h.b16 %v6797
    %v6838 = vunpack.c.l.b16 %v6798
    %v6839 = vunpack.c.h.b16 %v6798
    %v6840 = vunpack.c.l.b16 %v6799
    %v6841 = vunpack.c.h.b16 %v6799
    %v6842 = vunpack.c.l.b16 %v6800
    %v6843 = vunpack.c.h.b16 %v6800
    %v6844 = vunpack.c.l.b16 %v6801
    %v6845 = vunpack.c.h.b16 %v6801
    %v6846 = vunpack.c.l.b16 %v6802
    %v6847 = vunpack.c.h.b16 %v6802
    %v6848 = vunpack.c.l.b16 %v6803
    %v6849 = vunpack.c.h.b16 %v6803
    %v6850 = vunpack.c.l.b16 %v6804
    %v6851 = vunpack.c.h.b16 %v6804
    %v6852 = vunpack.c.l.b16 %v6805
    %v6853 = vunpack.c.h.b16 %v6805
    %v6854 = vpack.c.b16 %v6824, %v6822
    %v6855 = vpack.c.b16 %v6825, %v6823
    %v6856 = vpack.c.b16 %v6828, %v6826
    %v6857 = vpack.c.b16 %v6829, %v6827
    %v6858 = vpack.c.b16 %v6832, %v6830
    %v6859 = vpack.c.b16 %v6833, %v6831
    %v6860 = vpack.c.b16 %v6836, %v6834
    %v6861 = vpack.c.b16 %v6837, %v6835
    %v6862 = vpack.c.b16 %v6840, %v6838
    %v6863 = vpack.c.b16 %v6841, %v6839
    %v6864 = vpack.c.b16 %v6844, %v6842
    %v6865 = vpack.c.b16 %v6845, %v6843
    %v6866 = vpack.c.b16 %v6848, %v6846
    %v6867 = vpack.c.b16 %v6849, %v6847
    %v6868 = vpack.c.b16 %v6852, %v6850
    %v6869 = vpack.c.b16 %v6853, %v6851
    %6886 = vmatpush.bf16.msra.mxu0 %v6868
    %6887 = vmatpush.bf16.msra.mxu0 %v6866
    %6888 = vmatpush.bf16.msra.mxu0 %v6864
    %6889 = vmatpush.bf16.msra.mxu0 %v6862
    %6890 = vmatpush.bf16.msra.mxu0 %v6860
    %6891 = vmatpush.bf16.msra.mxu0 %v6858
    %6892 = vmatpush.bf16.msra.mxu0 %v6856
    %6893 = vmatpush.bf16.msra.mxu0 %v6854
    %6894 = vmatmul.bf16.gmra.mxu0 %v6789
    %v6895 = vpop.f32.mrf.mxu0
    %v6896 = vadd.f32 0.0, %v6895
    %v6897 = vpop.f32.mrf.mxu0
    %6898 = vdwg.mxu0
    %6899 = vmatpush.bf16.msra.mxu0 %v6869
    %6900 = vmatpush.bf16.msra.mxu0 %v6867
    %6901 = vmatpush.bf16.msra.mxu0 %v6865
    %6902 = vmatpush.bf16.msra.mxu0 %v6863
    %6903 = vmatpush.bf16.msra.mxu0 %v6861
    %6904 = vmatpush.bf16.msra.mxu0 %v6859
    %6905 = vmatpush.bf16.msra.mxu0 %v6857
    %6906 = vmatpush.bf16.msra.mxu0 %v6855
    %6907 = vmatmul.bf16.gmra.mxu0 %v6789
    %v6908 = vpop.f32.mrf.mxu0
    %v6909 = vadd.f32 0.0, %v6908
    %v6910 = vpop.f32.mrf.mxu0
    %6911 = vdwg.mxu0
    %v6928 = vunpack.c.l.b16 %v6773
    %v6929 = vunpack.c.h.b16 %v6773
    %v6930 = vunpack.c.l.b16 %v6774
    %v6931 = vunpack.c.h.b16 %v6774
    %v6932 = vunpack.c.l.b16 %v6775
    %v6933 = vunpack.c.h.b16 %v6775
    %v6934 = vunpack.c.l.b16 %v6776
    %v6935 = vunpack.c.h.b16 %v6776
    %v6936 = vunpack.c.l.b16 %v6777
    %v6937 = vunpack.c.h.b16 %v6777
    %v6938 = vunpack.c.l.b16 %v6778
    %v6939 = vunpack.c.h.b16 %v6778
    %v6940 = vunpack.c.l.b16 %v6779
    %v6941 = vunpack.c.h.b16 %v6779
    %v6942 = vunpack.c.l.b16 %v6780
    %v6943 = vunpack.c.h.b16 %v6780
    %v6944 = vunpack.c.l.b16 %v6781
    %v6945 = vunpack.c.h.b16 %v6781
    %v6946 = vunpack.c.l.b16 %v6782
    %v6947 = vunpack.c.h.b16 %v6782
    %v6948 = vunpack.c.l.b16 %v6783
    %v6949 = vunpack.c.h.b16 %v6783
    %v6950 = vunpack.c.l.b16 %v6784
    %v6951 = vunpack.c.h.b16 %v6784
    %v6952 = vunpack.c.l.b16 %v6785
    %v6953 = vunpack.c.h.b16 %v6785
    %v6954 = vunpack.c.l.b16 %v6786
    %v6955 = vunpack.c.h.b16 %v6786
    %v6956 = vunpack.c.l.b16 %v6787
    %v6957 = vunpack.c.h.b16 %v6787
    %v6958 = vunpack.c.l.b16 %v6788
    %v6959 = vunpack.c.h.b16 %v6788
    %v6960 = vpack.c.b16 %v6930, %v6928
    %v6961 = vpack.c.b16 %v6931, %v6929
    %v6962 = vpack.c.b16 %v6934, %v6932
    %v6963 = vpack.c.b16 %v6935, %v6933
    %v6964 = vpack.c.b16 %v6938, %v6936
    %v6965 = vpack.c.b16 %v6939, %v6937
    %v6966 = vpack.c.b16 %v6942, %v6940
    %v6967 = vpack.c.b16 %v6943, %v6941
    %v6968 = vpack.c.b16 %v6946, %v6944
    %v6969 = vpack.c.b16 %v6947, %v6945
    %v6970 = vpack.c.b16 %v6950, %v6948
    %v6971 = vpack.c.b16 %v6951, %v6949
    %v6972 = vpack.c.b16 %v6954, %v6952
    %v6973 = vpack.c.b16 %v6955, %v6953
    %v6974 = vpack.c.b16 %v6958, %v6956
    %v6975 = vpack.c.b16 %v6959, %v6957
    %6992 = vmatpush.bf16.msra.mxu0 %v6974
    %6993 = vmatpush.bf16.msra.mxu0 %v6972
    %6994 = vmatpush.bf16.msra.mxu0 %v6970
    %6995 = vmatpush.bf16.msra.mxu0 %v6968
    %6996 = vmatpush.bf16.msra.mxu0 %v6966
    %6997 = vmatpush.bf16.msra.mxu0 %v6964
    %6998 = vmatpush.bf16.msra.mxu0 %v6962
    %6999 = vmatpush.bf16.msra.mxu0 %v6960
    %7000 = vmatmul.bf16.gmra.mxu0 %v6772
    %v7001 = vpop.f32.mrf.mxu0
    %v7002 = vadd.f32 %v6896, %v7001
    %v7003 = vpop.f32.mrf.mxu0
    %7004 = vdwg.mxu0
    %7005 = vmatpush.bf16.msra.mxu0 %v6975
    %7006 = vmatpush.bf16.msra.mxu0 %v6973
    %7007 = vmatpush.bf16.msra.mxu0 %v6971
    %7008 = vmatpush.bf16.msra.mxu0 %v6969
    %7009 = vmatpush.bf16.msra.mxu0 %v6967
    %7010 = vmatpush.bf16.msra.mxu0 %v6965
    %7011 = vmatpush.bf16.msra.mxu0 %v6963
    %7012 = vmatpush.bf16.msra.mxu0 %v6961
    %7013 = vmatmul.bf16.gmra.mxu0 %v6772
    %v7014 = vpop.f32.mrf.mxu0
    %v7015 = vadd.f32 %v6909, %v7014
    %v7016 = vpop.f32.mrf.mxu0
    %7017 = vdwg.mxu0
    %v7018 = vld [vmem:[%s7 + $0xa] sm:$0x3]
    %v7020 = vperm.slane %v7018, 0
    %v7021 = vperm.slane %v7018, 1
    %v7024 = vadd.f32 %v7002, %v7020
    %v7025 = vadd.f32 %v7015, %v7021
    %v7026 = vmax.f32 %v7024, 0.0
    %v7027 = vmax.f32 %v7025, 0.0
    %v7028 = vpack.c.bf16 %v7026, %v7026
    %v7029 = vpack.c.bf16 %v7027, %v7027
    %v7030 = vld [vmem:[%s2 + $0x270] sm:$0xf]
    %v7031 = vld [vmem:[%s2 + $0x274] sm:$0xf]
    %v7032 = vld [vmem:[%s2 + $0x278] sm:$0xf]
    %v7033 = vld [vmem:[%s2 + $0x27c] sm:$0xf]
    %v7034 = vld [vmem:[%s2 + $0x280] sm:$0xf]
    %v7035 = vld [vmem:[%s2 + $0x284] sm:$0xf]
    %v7036 = vld [vmem:[%s2 + $0x288] sm:$0xf]
    %v7037 = vld [vmem:[%s2 + $0x28c] sm:$0xf]
    %v7038 = vld [vmem:[%s2 + $0x290] sm:$0xf]
    %v7039 = vld [vmem:[%s2 + $0x294] sm:$0xf]
    %v7040 = vld [vmem:[%s2 + $0x298] sm:$0xf]
    %v7041 = vld [vmem:[%s2 + $0x29c] sm:$0xf]
    %v7042 = vld [vmem:[%s2 + $0x2a0] sm:$0xf]
    %v7043 = vld [vmem:[%s2 + $0x2a4] sm:$0xf]
    %v7044 = vld [vmem:[%s2 + $0x2a8] sm:$0xf]
    %v7045 = vld [vmem:[%s2 + $0x2ac] sm:$0xf]
    %v7046 = vld [vmem:[%s2 + $0x2b0] sm:$0xf]
    %v7047 = vld [vmem:[%s2 + $0x2b4] sm:$0xf]
    %v7048 = vld [vmem:[%s2 + $0x2b8] sm:$0xf]
    %v7049 = vld [vmem:[%s2 + $0x2bc] sm:$0xf]
    %v7050 = vld [vmem:[%s2 + $0x2c0] sm:$0xf]
    %v7051 = vld [vmem:[%s2 + $0x2c4] sm:$0xf]
    %v7052 = vld [vmem:[%s2 + $0x2c8] sm:$0xf]
    %v7053 = vld [vmem:[%s2 + $0x2cc] sm:$0xf]
    %v7054 = vld [vmem:[%s2 + $0x2d0] sm:$0xf]
    %v7055 = vld [vmem:[%s2 + $0x2d4] sm:$0xf]
    %v7056 = vld [vmem:[%s2 + $0x2d8] sm:$0xf]
    %v7057 = vld [vmem:[%s2 + $0x2dc] sm:$0xf]
    %v7058 = vld [vmem:[%s2 + $0x2e0] sm:$0xf]
    %v7059 = vld [vmem:[%s2 + $0x2e4] sm:$0xf]
    %v7060 = vld [vmem:[%s2 + $0x2e8] sm:$0xf]
    %v7061 = vld [vmem:[%s2 + $0x2ec] sm:$0xf]
    %v7062 = vld [vmem:[%s7 + $0xc] sm:$0x1]
    %v7064 = vperm.slane %v7062, 0
    %v7098 = vunpack.c.l.b16 %v7030
    %v7099 = vunpack.c.l.b16 %v7031
    %v7100 = vunpack.c.l.b16 %v7032
    %v7101 = vunpack.c.l.b16 %v7033
    %v7102 = vunpack.c.l.b16 %v7034
    %v7103 = vunpack.c.l.b16 %v7035
    %v7104 = vunpack.c.l.b16 %v7036
    %v7105 = vunpack.c.l.b16 %v7037
    %v7106 = vunpack.c.l.b16 %v7038
    %v7107 = vunpack.c.l.b16 %v7039
    %v7108 = vunpack.c.l.b16 %v7040
    %v7109 = vunpack.c.l.b16 %v7041
    %v7110 = vunpack.c.l.b16 %v7042
    %v7111 = vunpack.c.l.b16 %v7043
    %v7112 = vunpack.c.l.b16 %v7044
    %v7113 = vunpack.c.l.b16 %v7045
    %v7114 = vunpack.c.l.b16 %v7046
    %v7115 = vunpack.c.l.b16 %v7047
    %v7116 = vunpack.c.l.b16 %v7048
    %v7117 = vunpack.c.l.b16 %v7049
    %v7118 = vunpack.c.l.b16 %v7050
    %v7119 = vunpack.c.l.b16 %v7051
    %v7120 = vunpack.c.l.b16 %v7052
    %v7121 = vunpack.c.l.b16 %v7053
    %v7122 = vunpack.c.l.b16 %v7054
    %v7123 = vunpack.c.l.b16 %v7055
    %v7124 = vunpack.c.l.b16 %v7056
    %v7125 = vunpack.c.l.b16 %v7057
    %v7126 = vunpack.c.l.b16 %v7058
    %v7127 = vunpack.c.l.b16 %v7059
    %v7128 = vunpack.c.l.b16 %v7060
    %v7129 = vunpack.c.l.b16 %v7061
    %v7130 = vpack.c.b16 %v7099, %v7098
    %v7131 = vpack.c.b16 %v7101, %v7100
    %v7132 = vpack.c.b16 %v7103, %v7102
    %v7133 = vpack.c.b16 %v7105, %v7104
    %v7134 = vpack.c.b16 %v7107, %v7106
    %v7135 = vpack.c.b16 %v7109, %v7108
    %v7136 = vpack.c.b16 %v7111, %v7110
    %v7137 = vpack.c.b16 %v7113, %v7112
    %v7138 = vpack.c.b16 %v7115, %v7114
    %v7139 = vpack.c.b16 %v7117, %v7116
    %v7140 = vpack.c.b16 %v7119, %v7118
    %v7141 = vpack.c.b16 %v7121, %v7120
    %v7142 = vpack.c.b16 %v7123, %v7122
    %v7143 = vpack.c.b16 %v7125, %v7124
    %v7144 = vpack.c.b16 %v7127, %v7126
    %v7145 = vpack.c.b16 %v7129, %v7128
    %7162 = vmatpush.bf16.msra.mxu0 %v7137
    %7163 = vmatpush.bf16.msra.mxu0 %v7136
    %7164 = vmatpush.bf16.msra.mxu0 %v7135
    %7165 = vmatpush.bf16.msra.mxu0 %v7134
    %7166 = vmatpush.bf16.msra.mxu0 %v7133
    %7167 = vmatpush.bf16.msra.mxu0 %v7132
    %7168 = vmatpush.bf16.msra.mxu0 %v7131
    %7169 = vmatpush.bf16.msra.mxu0 %v7130
    %7170 = vmatmul.bf16.gmra.mxu0 %v7028
    %v7171 = vpop.f32.mrf.mxu0
    %v7172 = vadd.f32 %v7064, %v7171
    %v7173 = vpop.f32.mrf.mxu0
    %7174 = vdwg.mxu0
    %7175 = vmatpush.bf16.msra.mxu0 %v7145
    %7176 = vmatpush.bf16.msra.mxu0 %v7144
    %7177 = vmatpush.bf16.msra.mxu0 %v7143
    %7178 = vmatpush.bf16.msra.mxu0 %v7142
    %7179 = vmatpush.bf16.msra.mxu0 %v7141
    %7180 = vmatpush.bf16.msra.mxu0 %v7140
    %7181 = vmatpush.bf16.msra.mxu0 %v7139
    %7182 = vmatpush.bf16.msra.mxu0 %v7138
    %7183 = vmatmul.bf16.gmra.mxu0 %v7029
    %v7184 = vpop.f32.mrf.mxu0
    %v7185 = vadd.f32 %v7172, %v7184
    %v7186 = vpop.f32.mrf.mxu0
    %7187 = vdwg.mxu0
    %7188 = vst [vmem:[%s9] sm:$0xff] %v7185
    // Predicated region
    $region42: #{multimodal_classifier.1} parent=1 // pred_check
      _
    $region43: #{multimodal_classifier.1} parent=1 // pred_check_branch
      %7190 = sbr.rel (0) target = $region45
    $region44: #{multimodal_classifier.1} parent=1 // pred_region
      _
    $region45: #{multimodal_classifier.1} parent=1 // pred_fallthru
      _
    // Predicated region
    $region46: #{multimodal_classifier.1} parent=1 // pred_check
      _
    $region47: #{multimodal_classifier.1} parent=1 // pred_check_branch
      %7192 = sbr.rel (0) target = $region49
    $region48: #{multimodal_classifier.1} parent=1 // pred_region
      _
    $region49: #{multimodal_classifier.1} parent=1 // pred_fallthru
      _
    %7193 = vsyncpa [#allocation3], 1

</llo_original>
